<compile_context>
chip_gen: v6e
topology: v6e:2x2x1
jax: 0.10.0
libtpu: 0.0.40
codegen_flags: <defaults>
</compile_context>

<pallas_src>
import jax
import jax.numpy as jnp
from jax import lax
from jax.experimental import pallas as pl
from jax.experimental.pallas import tpu as pltpu


# ----------------------------- Pallas kernel --------------------------------

def _intent_kernel(
    # inputs (one batch tile per grid step)
    len_ref,      # (Bt, 1)      int32 sequence lengths for this batch tile
    e_ref,        # (T*Bt, E)    embedded tokens, time-major, flattened (f32)
    lng_ref,      # (1, E)       layernorm gamma (f32)
    lnb_ref,      # (1, E)       layernorm beta  (f32)
    wih0_ref,     # (E, 8H)      layer0 [fwd | bwd] input weights (bf16)
    whh0_ref,     # (2H, 8H)     layer0 block-diag [[Whhf,0],[0,Whhb]] (bf16)
    b0_ref,       # (1, 8H)      layer0 [fwd | bwd] biases (b_ih + b_hh) (f32)
    wih1t_ref,    # (H, 8H)      layer1 input weights, rows fed by h0f (bf16)
    wih1b_ref,    # (H, 8H)      layer1 input weights, rows fed by h0b (bf16)
    whh1_ref,     # (2H, 8H)     layer1 block-diag recurrent weights (bf16)
    b1_ref,       # (1, 8H)      layer1 biases (f32)
    wheadf_ref,   # (H, NOpad)   [fc_act | fc_par] weights fed by h1f (bf16)
    wheadb_ref,   # (H, NOpad)   [fc_act | fc_par] weights fed by h1b (bf16)
    bhead_ref,    # (1, NOpad)   head biases (f32)
    # outputs
    out_ref,      # (Bt, NOpad)  [act | par] logits, lane-padded (f32)
    # scratch
    pre_ref,      # (T*Bt, 8H)   hoisted input projections, reused layer0/layer1
    h0f_ref,      # (T*Bt, H)    layer-0 forward outputs (lane-dense)
    h0b_ref,      # (T*Bt, H)    layer-0 backward outputs (lane-dense)
):
    f32 = jnp.float32
    bf16 = jnp.bfloat16
    H = whh0_ref.shape[0] // 2
    Bt = out_ref.shape[0]
    T = e_ref.shape[0] // Bt

    # ---- LayerNorm over embedding dim (whole (T*Bt, E) slab at once, f32) ----
    ev = e_ref[...]
    mu = jnp.mean(ev, axis=-1, keepdims=True)
    var = jnp.mean((ev - mu) ** 2, axis=-1, keepdims=True)
    eln = (ev - mu) * lax.rsqrt(var + 1e-5) * lng_ref[...] + lnb_ref[...]

    # ---- hoisted layer-0 input projection (bf16 MXU, f32 accumulate) --------
    pre_ref[...] = (jnp.dot(eln.astype(bf16), wih0_ref[...],
                            preferred_element_type=f32) + b0_ref[...])

    # ---- per-timestep validity masks built in-kernel (no HBM mask slab) -----
    len_b = jnp.broadcast_to(len_ref[...], (Bt, H))          # (Bt, H) int32
    valid = [len_b > t for t in range(T)]                    # hoisted

    def lstm_gates(pre, c):
        # PyTorch gate order: i, f, g, o   (f32 gate math, f32 c-update)
        i = jax.nn.sigmoid(pre[:, 0:H])
        f = jax.nn.sigmoid(pre[:, H:2 * H])
        g = jnp.tanh(pre[:, 2 * H:3 * H])
        o = jax.nn.sigmoid(pre[:, 3 * H:4 * H])
        cn = f * c + i * g
        hn = o * jnp.tanh(cn)
        return hn, cn

    zeros = jnp.zeros((Bt, H), f32)

    def run_bidir_layer(whh_bd, store=False):
        """Fully-unrolled bidirectional layer; fwd/bwd share one fused dot."""
        hf, cf, hb, cb = zeros, zeros, zeros, zeros
        for s in range(T):                 # static unroll (T small & known)
            rf = s * Bt                    # forward timestep  t = s
            rb = (T - 1 - s) * Bt          # backward timestep t = T-1-s
            # one fused recurrent matmul for both directions (block-diag Whh)
            hcat = jnp.concatenate([hf, hb], axis=-1).astype(bf16)   # (Bt, 2H)
            rec = jnp.dot(hcat, whh_bd, preferred_element_type=f32)  # (Bt, 8H)
            pre_f = pre_ref[rf:rf + Bt, 0:4 * H] + rec[:, 0:4 * H]
            pre_b = pre_ref[rb:rb + Bt, 4 * H:8 * H] + rec[:, 4 * H:8 * H]
            hnf, cnf = lstm_gates(pre_f, cf)
            hnb, cnb = lstm_gates(pre_b, cb)
            mf = valid[s]
            mb = valid[T - 1 - s]
            hf = jnp.where(mf, hnf, hf)
            cf = jnp.where(mf, cnf, cf)
            hb = jnp.where(mb, hnb, hb)
            cb = jnp.where(mb, cnb, cb)
            if store:
                h0f_ref[rf:rf + Bt, :] = hf      # lane-dense, full scratch width
                h0b_ref[rb:rb + Bt, :] = hb
        return hf, hb

    # ---------------- layer 0 (stores lane-dense per-direction outputs) ------
    run_bidir_layer(whh0_ref[...], store=True)

    # ---- hoisted layer-1 input projection; reuse pre_ref (pre0 is dead) -----
    pre_ref[...] = (jnp.dot(h0f_ref[...].astype(bf16), wih1t_ref[...],
                            preferred_element_type=f32)
                    + jnp.dot(h0b_ref[...].astype(bf16), wih1b_ref[...],
                              preferred_element_type=f32)
                    + b1_ref[...])

    # ---------------- layer 1 (only final hidden states needed) --------------
    h1f, h1b = run_bidir_layer(whh1_ref[...], store=False)

    # ------- fused heads on h_cat = [h1f, h1b]; dropout = identity (eval) ----
    out_ref[...] = (jnp.dot(h1f.astype(bf16), wheadf_ref[...],
                            preferred_element_type=f32)
                    + jnp.dot(h1b.astype(bf16), wheadb_ref[...],
                              preferred_element_type=f32)
                    + bhead_ref[...])


# ----------------------------- wrapper ---------------------------------------

def _block_diag(a, b):
    """[[a, 0], [0, b]] for 2-D a, b with equal shapes."""
    z = jnp.zeros_like(a)
    return jnp.concatenate(
        [jnp.concatenate([a, z], axis=1), jnp.concatenate([z, b], axis=1)],
        axis=0)


def intent_forward(x_tokens, lengths, p, *, b_tile=8):
    """x_tokens: (B, T) int32, lengths: (B,) int32 -> (act (B,Na), par (B,Np))."""
    B, T = x_tokens.shape
    E = p["emb"].shape[1]
    H = p["whh0f"].shape[0]
    Na = p["wact"].shape[1]
    Np = p["wpar"].shape[1]
    NO = Na + Np
    NOpad = pl.cdiv(NO, 128) * 128          # lane-dense head output
    B_pad = pl.cdiv(B, b_tile) * b_tile     # pad batch to full sublanes / tile
    n_bt = B_pad // b_tile

    f32, bf16 = jnp.float32, jnp.bfloat16

    # glue: pad batch, embedding gather straight into time-major layout, then
    # group rows by batch tile so each grid step sees one contiguous 2-D slab.
    # TODO(synk): at production sizes gather in-kernel (scalar prefetch, bf16 table).
    x_pad = jnp.pad(x_tokens, ((0, B_pad - B), (0, 0)))          # pad token id 0
    len_pad = jnp.pad(lengths, (0, B_pad - B))                   # len 0 -> masked
    e = jnp.take(p["emb"], x_pad.T, axis=0).astype(f32)          # (T, B_pad, E)
    e_tiles = (e.reshape(T, n_bt, b_tile, E)
                 .transpose(1, 0, 2, 3)
                 .reshape(n_bt, T * b_tile, E))                  # (n_bt, T*Bt, E)
    len_col = len_pad.reshape(B_pad, 1).astype(jnp.int32)        # (B_pad, 1)

    # fused / block-diagonal weights, bf16 for the MXU (biases stay f32)
    wih0 = jnp.concatenate([p["wih0f"], p["wih0b"]], axis=1).astype(bf16)   # (E, 8H)
    whh0 = _block_diag(p["whh0f"], p["whh0b"]).astype(bf16)                 # (2H, 8H)
    b0 = jnp.concatenate([p["b0f"], p["b0b"]], axis=1)                      # (1, 8H)
    wih1t = jnp.concatenate([p["wih1f"][0:H], p["wih1b"][0:H]], axis=1).astype(bf16)
    wih1b = jnp.concatenate([p["wih1f"][H:2 * H], p["wih1b"][H:2 * H]], axis=1).astype(bf16)
    whh1 = _block_diag(p["whh1f"], p["whh1b"]).astype(bf16)                 # (2H, 8H)
    b1 = jnp.concatenate([p["b1f"], p["b1b"]], axis=1)                      # (1, 8H)
    wheadf = jnp.concatenate([p["wact"][0:H], p["wpar"][0:H]], axis=1)      # (H, NO)
    wheadb = jnp.concatenate([p["wact"][H:2 * H], p["wpar"][H:2 * H]], axis=1)
    wheadf = jnp.pad(wheadf, ((0, 0), (0, NOpad - NO))).astype(bf16)
    wheadb = jnp.pad(wheadb, ((0, 0), (0, NOpad - NO))).astype(bf16)
    bhead = jnp.concatenate([p["bact"], p["bpar"]], axis=1)
    bhead = jnp.pad(bhead, ((0, 0), (0, NOpad - NO)))                       # (1, NOpad)

    inputs = (len_col, e_tiles, p["ln_g"], p["ln_b"],
              wih0, whh0, b0, wih1t, wih1b, whh1, b1,
              wheadf, wheadb, bhead)

    const2 = lambda b: (0, 0)
    in_specs = [
        pl.BlockSpec((b_tile, 1), lambda b: (b, 0)),                # lengths
        pl.BlockSpec((None, T * b_tile, E), lambda b: (b, 0, 0)),   # embeddings
        pl.BlockSpec((1, E), const2),                               # ln gamma
        pl.BlockSpec((1, E), const2),                               # ln beta
        pl.BlockSpec((E, 8 * H), const2),                           # wih0
        pl.BlockSpec((2 * H, 8 * H), const2),                       # whh0 (bd)
        pl.BlockSpec((1, 8 * H), const2),                           # b0
        pl.BlockSpec((H, 8 * H), const2),                           # wih1 (h0f rows)
        pl.BlockSpec((H, 8 * H), const2),                           # wih1 (h0b rows)
        pl.BlockSpec((2 * H, 8 * H), const2),                       # whh1 (bd)
        pl.BlockSpec((1, 8 * H), const2),                           # b1
        pl.BlockSpec((H, NOpad), const2),                           # head (h1f rows)
        pl.BlockSpec((H, NOpad), const2),                           # head (h1b rows)
        pl.BlockSpec((1, NOpad), const2),                           # head bias
    ]

    out = pl.pallas_call(
        _intent_kernel,
        out_shape=jax.ShapeDtypeStruct((B_pad, NOpad), f32),
        grid=(n_bt,),
        in_specs=in_specs,
        out_specs=pl.BlockSpec((b_tile, NOpad), lambda b: (b, 0)),
        scratch_shapes=[
            pltpu.VMEM((T * b_tile, 8 * H), f32),   # shared pre (layer0 then layer1)
            pltpu.VMEM((T * b_tile, H), f32),       # layer-0 fwd outputs
            pltpu.VMEM((T * b_tile, H), f32),       # layer-0 bwd outputs
        ],
        compiler_params=pltpu.CompilerParams(
            dimension_semantics=("parallel",),
            vmem_limit_bytes=32 * 1024 * 1024,
        ),
    )(*inputs)

    return out[:B, :Na], out[:B, Na:NO]


# ----------------------------- params ----------------------------------------

def init_params(key, vocab_size, emb_dim, hid_dim, n_act, n_par, pad_idx=0):
    E, H = emb_dim, hid_dim
    ks = iter(jax.random.split(key, 32))

    def unif(shape, scale):
        return jax.random.uniform(next(ks), shape, jnp.float32, -scale, scale)

    s = 1.0 / jnp.sqrt(H)
    p = {}
    emb = jax.random.normal(next(ks), (vocab_size, E), jnp.float32) * 0.1
    p["emb"] = emb.at[pad_idx].set(0.0)          # padding_idx row is zero
    p["ln_g"] = jnp.ones((1, E), jnp.float32)
    p["ln_b"] = jnp.zeros((1, E), jnp.float32)

    # LSTM weights stored pre-transposed: wih (in, 4H), whh (H, 4H), bias = b_ih+b_hh (1, 4H)
    for name, in_dim in (("0f", E), ("0b", E), ("1f", 2 * H), ("1b", 2 * H)):
        p["wih" + name] = unif((in_dim, 4 * H), s)
        p["whh" + name] = unif((H, 4 * H), s)
        p["b" + name] = unif((1, 4 * H), s) + unif((1, 4 * H), s)

    sa = 1.0 / jnp.sqrt(2 * H)
    p["wact"] = unif((2 * H, n_act), sa)
    p["bact"] = unif((1, n_act), sa)
    p["wpar"] = unif((2 * H, n_par), sa)
    p["bpar"] = unif((1, n_par), sa)
    return p


# ----------------------------- pure-JAX reference -----------------------------

def ref_forward(x_tokens, lengths, p, *, mxu_bf16=True):
    """Reference.  mxu_bf16=True mirrors the kernel's bf16-operand / f32-accumulate
    matmul numerics; mxu_bf16=False is the exact f32 PyTorch-equivalent path."""
    f32, bf16 = jnp.float32, jnp.bfloat16

    def dot(a, b):
        if mxu_bf16:
            a, b = a.astype(bf16), b.astype(bf16)
        return jnp.dot(a, b, preferred_element_type=f32)

    B, T = x_tokens.shape
    H = p["whh0f"].shape[0]
    e = jnp.take(p["emb"], x_tokens, axis=0).astype(f32)                  # (B,T,E)
    mu = e.mean(-1, keepdims=True)
    var = ((e - mu) ** 2).mean(-1, keepdims=True)
    e = (e - mu) * lax.rsqrt(var + 1e-5) * p["ln_g"][0] + p["ln_b"][0]
    mask = (jnp.arange(T)[None, :] < lengths[:, None]).astype(f32)        # (B,T)

    def run_dir(xs, wih, whh, b, reverse):
        h = jnp.zeros((B, H), f32)
        c = jnp.zeros((B, H), f32)
        outs = [None] * T
        order = range(T - 1, -1, -1) if reverse else range(T)
        for t in order:
            pre = dot(xs[:, t, :], wih) + dot(h, whh) + b[0]
            i = jax.nn.sigmoid(pre[:, 0:H]); f = jax.nn.sigmoid(pre[:, H:2 * H])
            g = jnp.tanh(pre[:, 2 * H:3 * H]); o = jax.nn.sigmoid(pre[:, 3 * H:4 * H])
            cn = f * c + i * g
            hn = o * jnp.tanh(cn)
            m = mask[:, t:t + 1]
            h = m * hn + (1 - m) * h
            c = m * cn + (1 - m) * c
            outs[t] = h
        return jnp.stack(outs, axis=1), h   # (B,T,H), final h

    o0f, _ = run_dir(e, p["wih0f"], p["whh0f"], p["b0f"], False)
    o0b, _ = run_dir(e, p["wih0b"], p["whh0b"], p["b0b"], True)
    x1 = jnp.concatenate([o0f, o0b], axis=-1)
    _, h1f = run_dir(x1, p["wih1f"], p["whh1f"], p["b1f"], False)
    _, h1b = run_dir(x1, p["wih1b"], p["whh1b"], p["b1b"], True)
    hcat = jnp.concatenate([h1f, h1b], axis=-1)
    return dot(hcat, p["wact"]) + p["bact"][0], dot(hcat, p["wpar"]) + p["bpar"][0]


# ----------------------------- main -------------------------------------------

if __name__ == "__main__":
    B, T = 2, 8
    VOCAB, E, H = 32, 32, 32
    N_ACT, N_PAR = 8, 5
    PAD = 0  # vocab['<PAD>']

    key = jax.random.PRNGKey(0)
    kx, kp = jax.random.split(key)
    lengths = jnp.array([8, 5], dtype=jnp.int32)
    x = jax.random.randint(kx, (B, T), 1, VOCAB, dtype=jnp.int32)
    # zero-pad past each sequence's length (PAD token id 0)
    valid = jnp.arange(T)[None, :] < lengths[:, None]
    x = jnp.where(valid, x, PAD)

    params = init_params(kp, VOCAB, E, H, N_ACT, N_PAR, pad_idx=PAD)

    fwd = jax.jit(intent_forward)
    act, par = fwd(x, lengths, params)
    jax.block_until_ready((act, par))

    # tight check against a reference with matching bf16-MXU numerics
    act_r, par_r = ref_forward(x, lengths, params, mxu_bf16=True)
    assert jnp.allclose(act, act_r, atol=5e-3, rtol=5e-3), "act mismatch (bf16 ref)"
    assert jnp.allclose(par, par_r, atol=5e-3, rtol=5e-3), "par mismatch (bf16 ref)"

    # loose sanity check against the exact f32 PyTorch-equivalent path
    act_f, par_f = ref_forward(x, lengths, params, mxu_bf16=False)
    assert jnp.allclose(act, act_f, atol=5e-2, rtol=5e-2), "act mismatch (f32 ref)"
    assert jnp.allclose(par, par_f, atol=5e-2, rtol=5e-2), "par mismatch (f32 ref)"

    print("KERNEL_OK")
</pallas_src>

<mosaic_0001>
module attributes {stable_mosaic.version = 11 : i64} {
  func.func @_intent_kernel(%arg0: i32, %arg1: memref<8x1xi32, #tpu.memory_space<vmem>>, %arg2: memref<1x64x32xf32, #tpu.memory_space<vmem>>, %arg3: memref<1x32xf32, #tpu.memory_space<vmem>>, %arg4: memref<1x32xf32, #tpu.memory_space<vmem>>, %arg5: memref<32x256xbf16, #tpu.memory_space<vmem>>, %arg6: memref<64x256xbf16, #tpu.memory_space<vmem>>, %arg7: memref<1x256xf32, #tpu.memory_space<vmem>>, %arg8: memref<32x256xbf16, #tpu.memory_space<vmem>>, %arg9: memref<32x256xbf16, #tpu.memory_space<vmem>>, %arg10: memref<64x256xbf16, #tpu.memory_space<vmem>>, %arg11: memref<1x256xf32, #tpu.memory_space<vmem>>, %arg12: memref<32x128xbf16, #tpu.memory_space<vmem>>, %arg13: memref<32x128xbf16, #tpu.memory_space<vmem>>, %arg14: memref<1x128xf32, #tpu.memory_space<vmem>>, %arg15: memref<8x128xf32, #tpu.memory_space<vmem>>, %arg16: memref<64x256xf32, #tpu.memory_space<vmem>>, %arg17: memref<64x32xf32, #tpu.memory_space<vmem>>, %arg18: memref<64x32xf32, #tpu.memory_space<vmem>>) attributes {dimension_semantics = [#tpu.dimension_semantics<parallel>], iteration_bounds = array<i64: 1>, scalar_prefetch = 0 : i64, scratch_operands = 3 : i64, tpu.core_type = #tpu.core_type<tc>, window_params = [{transform_indices = @transform_0, window_bounds = array<i64: 8, 1>}, {transform_indices = @transform_1, window_bounds = array<i64: 1, 64, 32>}, {pipeline_mode = #tpu.pipeline_mode<synchronous>, transform_indices = @transform_2, window_bounds = array<i64: 1, 32>}, {pipeline_mode = #tpu.pipeline_mode<synchronous>, transform_indices = @transform_3, window_bounds = array<i64: 1, 32>}, {pipeline_mode = #tpu.pipeline_mode<synchronous>, transform_indices = @transform_4, window_bounds = array<i64: 32, 256>}, {pipeline_mode = #tpu.pipeline_mode<synchronous>, transform_indices = @transform_5, window_bounds = array<i64: 64, 256>}, {pipeline_mode = #tpu.pipeline_mode<synchronous>, transform_indices = @transform_6, window_bounds = array<i64: 1, 256>}, {pipeline_mode = #tpu.pipeline_mode<synchronous>, transform_indices = @transform_7, window_bounds = array<i64: 32, 256>}, {pipeline_mode = #tpu.pipeline_mode<synchronous>, transform_indices = @transform_8, window_bounds = array<i64: 32, 256>}, {pipeline_mode = #tpu.pipeline_mode<synchronous>, transform_indices = @transform_9, window_bounds = array<i64: 64, 256>}, {pipeline_mode = #tpu.pipeline_mode<synchronous>, transform_indices = @transform_10, window_bounds = array<i64: 1, 256>}, {pipeline_mode = #tpu.pipeline_mode<synchronous>, transform_indices = @transform_11, window_bounds = array<i64: 32, 128>}, {pipeline_mode = #tpu.pipeline_mode<synchronous>, transform_indices = @transform_12, window_bounds = array<i64: 32, 128>}, {pipeline_mode = #tpu.pipeline_mode<synchronous>, transform_indices = @transform_13, window_bounds = array<i64: 1, 128>}, {transform_indices = @transform_14, window_bounds = array<i64: 8, 128>}]} {
    %c0 = arith.constant 0 : index
    %c0_0 = arith.constant 0 : index
    %c0_1 = arith.constant 0 : index
    %0 = vector.load %arg2[%c0, %c0_0, %c0_1] : memref<1x64x32xf32, #tpu.memory_space<vmem>>, vector<1x64x32xf32>
    %1 = vector.shape_cast %0 : vector<1x64x32xf32> to vector<64x32xf32>
    %cst = arith.constant dense<0.000000e+00> : vector<64xf32>
    %2 = vector.multi_reduction <add>, %1, %cst [1] : vector<64x32xf32> to vector<64xf32>
    %3 = vector.shape_cast %2 : vector<64xf32> to vector<64x1xf32>
    %cst_2 = arith.constant 3.200000e+01 : f32
    %4 = vector.broadcast %cst_2 : f32 to vector<64x1xf32>
    %5 = arith.divf %3, %4 : vector<64x1xf32>
    %6 = vector.broadcast %5 : vector<64x1xf32> to vector<64x32xf32>
    %7 = arith.subf %1, %6 : vector<64x32xf32>
    %8 = arith.mulf %7, %7 : vector<64x32xf32>
    %cst_3 = arith.constant dense<0.000000e+00> : vector<64xf32>
    %9 = vector.multi_reduction <add>, %8, %cst_3 [1] : vector<64x32xf32> to vector<64xf32>
    %10 = vector.shape_cast %9 : vector<64xf32> to vector<64x1xf32>
    %cst_4 = arith.constant 3.200000e+01 : f32
    %11 = vector.broadcast %cst_4 : f32 to vector<64x1xf32>
    %12 = arith.divf %10, %11 : vector<64x1xf32>
    %13 = vector.broadcast %5 : vector<64x1xf32> to vector<64x32xf32>
    %14 = arith.subf %1, %13 : vector<64x32xf32>
    %cst_5 = arith.constant 9.99999974E-6 : f32
    %15 = vector.broadcast %cst_5 : f32 to vector<64x1xf32>
    %16 = arith.addf %12, %15 : vector<64x1xf32>
    %17 = math.rsqrt %16 : vector<64x1xf32>
    %18 = vector.broadcast %17 : vector<64x1xf32> to vector<64x32xf32>
    %19 = arith.mulf %14, %18 : vector<64x32xf32>
    %c0_6 = arith.constant 0 : index
    %c0_7 = arith.constant 0 : index
    %20 = vector.load %arg3[%c0_6, %c0_7] : memref<1x32xf32, #tpu.memory_space<vmem>>, vector<1x32xf32>
    %21 = vector.broadcast %20 : vector<1x32xf32> to vector<64x32xf32>
    %22 = arith.mulf %19, %21 : vector<64x32xf32>
    %c0_8 = arith.constant 0 : index
    %c0_9 = arith.constant 0 : index
    %23 = vector.load %arg4[%c0_8, %c0_9] : memref<1x32xf32, #tpu.memory_space<vmem>>, vector<1x32xf32>
    %24 = vector.broadcast %23 : vector<1x32xf32> to vector<64x32xf32>
    %25 = arith.addf %22, %24 : vector<64x32xf32>
    %26 = arith.truncf %25 : vector<64x32xf32> to vector<64x32xbf16>
    %c0_10 = arith.constant 0 : index
    %c0_11 = arith.constant 0 : index
    %27 = vector.load %arg5[%c0_10, %c0_11] : memref<32x256xbf16, #tpu.memory_space<vmem>>, vector<32x256xbf16>
    %cst_12 = arith.constant dense<0.000000e+00> : vector<64x256xf32>
    %28 = tpu.matmul %26, %27, %cst_12 {dimension_numbers = #tpu.dot_dimension_numbers<[1], [0], [0], [1], [0, 0, 1, 1], [], []>} : vector<64x32xbf16>, vector<32x256xbf16>, vector<64x256xf32> -> vector<64x256xf32>
    %c0_13 = arith.constant 0 : index
    %c0_14 = arith.constant 0 : index
    %29 = vector.load %arg7[%c0_13, %c0_14] : memref<1x256xf32, #tpu.memory_space<vmem>>, vector<1x256xf32>
    %30 = vector.broadcast %29 : vector<1x256xf32> to vector<64x256xf32>
    %31 = arith.addf %28, %30 : vector<64x256xf32>
    %c0_15 = arith.constant 0 : index
    %c0_16 = arith.constant 0 : index
    %32 = vector.load %arg16[%c0_15, %c0_16] : memref<64x256xf32, #tpu.memory_space<vmem>>, vector<64x256xf32>
    tpu.vector_store %arg16[%c0_15, %c0_16], %31 {strides = array<i32>} : memref<64x256xf32, #tpu.memory_space<vmem>>, vector<64x256xf32>,
    %c0_17 = arith.constant 0 : index
    %c0_18 = arith.constant 0 : index
    %33 = vector.load %arg1[%c0_17, %c0_18] : memref<8x1xi32, #tpu.memory_space<vmem>>, vector<8x1xi32>
    %34 = vector.shape_cast %33 : vector<8x1xi32> to vector<8x1xi32>
    %35 = vector.broadcast %34 : vector<8x1xi32> to vector<8x32xi32>
    %c0_i32 = arith.constant 0 : i32
    %36 = vector.broadcast %c0_i32 : i32 to vector<8x32xi32>
    %37 = arith.cmpi sgt, %35, %36 : vector<8x32xi32>
    %c1_i32 = arith.constant 1 : i32
    %38 = vector.broadcast %c1_i32 : i32 to vector<8x32xi32>
    %39 = arith.cmpi sgt, %35, %38 : vector<8x32xi32>
    %c2_i32 = arith.constant 2 : i32
    %40 = vector.broadcast %c2_i32 : i32 to vector<8x32xi32>
    %41 = arith.cmpi sgt, %35, %40 : vector<8x32xi32>
    %c3_i32 = arith.constant 3 : i32
    %42 = vector.broadcast %c3_i32 : i32 to vector<8x32xi32>
    %43 = arith.cmpi sgt, %35, %42 : vector<8x32xi32>
    %c4_i32 = arith.constant 4 : i32
    %44 = vector.broadcast %c4_i32 : i32 to vector<8x32xi32>
    %45 = arith.cmpi sgt, %35, %44 : vector<8x32xi32>
    %c5_i32 = arith.constant 5 : i32
    %46 = vector.broadcast %c5_i32 : i32 to vector<8x32xi32>
    %47 = arith.cmpi sgt, %35, %46 : vector<8x32xi32>
    %c6_i32 = arith.constant 6 : i32
    %48 = vector.broadcast %c6_i32 : i32 to vector<8x32xi32>
    %49 = arith.cmpi sgt, %35, %48 : vector<8x32xi32>
    %c7_i32 = arith.constant 7 : i32
    %50 = vector.broadcast %c7_i32 : i32 to vector<8x32xi32>
    %51 = arith.cmpi sgt, %35, %50 : vector<8x32xi32>
    %cst_19 = arith.constant 0.000000e+00 : f32
    %52 = vector.broadcast %cst_19 : f32 to vector<8x32xf32>
    %c0_20 = arith.constant 0 : index
    %c0_21 = arith.constant 0 : index
    %53 = vector.load %arg6[%c0_20, %c0_21] : memref<64x256xbf16, #tpu.memory_space<vmem>>, vector<64x256xbf16>
    %54 = tpu.concatenate %52, %52 in 1 : vector<8x32xf32>, vector<8x32xf32> -> vector<8x64xf32>
    %55 = arith.truncf %54 : vector<8x64xf32> to vector<8x64xbf16>
    %cst_22 = arith.constant dense<0.000000e+00> : vector<8x256xf32>
    %56 = tpu.matmul %55, %53, %cst_22 {dimension_numbers = #tpu.dot_dimension_numbers<[1], [0], [0], [1], [0, 0, 1, 1], [], []>} : vector<8x64xbf16>, vector<64x256xbf16>, vector<8x256xf32> -> vector<8x256xf32>
    %c0_23 = arith.constant 0 : index
    %c0_24 = arith.constant 0 : index
    %57 = vector.load %arg16[%c0_23, %c0_24] : memref<64x256xf32, #tpu.memory_space<vmem>>, vector<8x128xf32>
    %58 = vector.extract_strided_slice %56 {offsets = [0, 0], sizes = [8, 128], strides = [1, 1]} : vector<8x256xf32> to vector<8x128xf32>
    %59 = arith.addf %57, %58 : vector<8x128xf32>
    %c56 = arith.constant 56 : index
    %c128 = arith.constant 128 : index
    %60 = vector.load %arg16[%c56, %c128] : memref<64x256xf32, #tpu.memory_space<vmem>>, vector<8x128xf32>
    %61 = vector.extract_strided_slice %56 {offsets = [0, 128], sizes = [8, 128], strides = [1, 1]} : vector<8x256xf32> to vector<8x128xf32>
    %62 = arith.addf %60, %61 : vector<8x128xf32>
    %63 = vector.extract_strided_slice %59 {offsets = [0, 0], sizes = [8, 32], strides = [1, 1]} : vector<8x128xf32> to vector<8x32xf32>
    %64 = arith.negf %63 : vector<8x32xf32>
    %65 = math.exp %64 : vector<8x32xf32>
    %cst_25 = arith.constant 1.000000e+00 : f32
    %66 = vector.broadcast %cst_25 : f32 to vector<8x32xf32>
    %67 = arith.addf %66, %65 : vector<8x32xf32>
    %68 = arith.divf %66, %67 : vector<8x32xf32>
    %69 = vector.extract_strided_slice %59 {offsets = [0, 32], sizes = [8, 32], strides = [1, 1]} : vector<8x128xf32> to vector<8x32xf32>
    %70 = arith.negf %69 : vector<8x32xf32>
    %71 = math.exp %70 : vector<8x32xf32>
    %cst_26 = arith.constant 1.000000e+00 : f32
    %72 = vector.broadcast %cst_26 : f32 to vector<8x32xf32>
    %73 = arith.addf %72, %71 : vector<8x32xf32>
    %74 = arith.divf %72, %73 : vector<8x32xf32>
    %75 = vector.extract_strided_slice %59 {offsets = [0, 64], sizes = [8, 32], strides = [1, 1]} : vector<8x128xf32> to vector<8x32xf32>
    %76 = math.tanh %75 : vector<8x32xf32>
    %77 = vector.extract_strided_slice %59 {offsets = [0, 96], sizes = [8, 32], strides = [1, 1]} : vector<8x128xf32> to vector<8x32xf32>
    %78 = arith.negf %77 : vector<8x32xf32>
    %79 = math.exp %78 : vector<8x32xf32>
    %cst_27 = arith.constant 1.000000e+00 : f32
    %80 = vector.broadcast %cst_27 : f32 to vector<8x32xf32>
    %81 = arith.addf %80, %79 : vector<8x32xf32>
    %82 = arith.divf %80, %81 : vector<8x32xf32>
    %83 = arith.mulf %74, %52 : vector<8x32xf32>
    %84 = arith.mulf %68, %76 : vector<8x32xf32>
    %85 = arith.addf %83, %84 : vector<8x32xf32>
    %86 = math.tanh %85 : vector<8x32xf32>
    %87 = arith.mulf %82, %86 : vector<8x32xf32>
    %88 = vector.extract_strided_slice %62 {offsets = [0, 0], sizes = [8, 32], strides = [1, 1]} : vector<8x128xf32> to vector<8x32xf32>
    %89 = arith.negf %88 : vector<8x32xf32>
    %90 = math.exp %89 : vector<8x32xf32>
    %cst_28 = arith.constant 1.000000e+00 : f32
    %91 = vector.broadcast %cst_28 : f32 to vector<8x32xf32>
    %92 = arith.addf %91, %90 : vector<8x32xf32>
    %93 = arith.divf %91, %92 : vector<8x32xf32>
    %94 = vector.extract_strided_slice %62 {offsets = [0, 32], sizes = [8, 32], strides = [1, 1]} : vector<8x128xf32> to vector<8x32xf32>
    %95 = arith.negf %94 : vector<8x32xf32>
    %96 = math.exp %95 : vector<8x32xf32>
    %cst_29 = arith.constant 1.000000e+00 : f32
    %97 = vector.broadcast %cst_29 : f32 to vector<8x32xf32>
    %98 = arith.addf %97, %96 : vector<8x32xf32>
    %99 = arith.divf %97, %98 : vector<8x32xf32>
    %100 = vector.extract_strided_slice %62 {offsets = [0, 64], sizes = [8, 32], strides = [1, 1]} : vector<8x128xf32> to vector<8x32xf32>
    %101 = math.tanh %100 : vector<8x32xf32>
    %102 = vector.extract_strided_slice %62 {offsets = [0, 96], sizes = [8, 32], strides = [1, 1]} : vector<8x128xf32> to vector<8x32xf32>
    %103 = arith.negf %102 : vector<8x32xf32>
    %104 = math.exp %103 : vector<8x32xf32>
    %cst_30 = arith.constant 1.000000e+00 : f32
    %105 = vector.broadcast %cst_30 : f32 to vector<8x32xf32>
    %106 = arith.addf %105, %104 : vector<8x32xf32>
    %107 = arith.divf %105, %106 : vector<8x32xf32>
    %108 = arith.mulf %99, %52 : vector<8x32xf32>
    %109 = arith.mulf %93, %101 : vector<8x32xf32>
    %110 = arith.addf %108, %109 : vector<8x32xf32>
    %111 = math.tanh %110 : vector<8x32xf32>
    %112 = arith.mulf %107, %111 : vector<8x32xf32>
    %113 = arith.select %37, %87, %52 : vector<8x32xi1>, vector<8x32xf32>
    %114 = arith.select %37, %85, %52 : vector<8x32xi1>, vector<8x32xf32>
    %115 = arith.select %51, %112, %52 : vector<8x32xi1>, vector<8x32xf32>
    %116 = arith.select %51, %110, %52 : vector<8x32xi1>, vector<8x32xf32>
    %c0_31 = arith.constant 0 : index
    %c0_32 = arith.constant 0 : index
    %117 = vector.load %arg17[%c0_31, %c0_32] : memref<64x32xf32, #tpu.memory_space<vmem>>, vector<8x32xf32>
    tpu.vector_store %arg17[%c0_31, %c0_32], %113 {strides = array<i32>} : memref<64x32xf32, #tpu.memory_space<vmem>>, vector<8x32xf32>,
    %c56_33 = arith.constant 56 : index
    %c0_34 = arith.constant 0 : index
    %118 = vector.load %arg18[%c56_33, %c0_34] : memref<64x32xf32, #tpu.memory_space<vmem>>, vector<8x32xf32>
    tpu.vector_store %arg18[%c56_33, %c0_34], %115 {strides = array<i32>} : memref<64x32xf32, #tpu.memory_space<vmem>>, vector<8x32xf32>,
    %119 = tpu.concatenate %113, %115 in 1 : vector<8x32xf32>, vector<8x32xf32> -> vector<8x64xf32>
    %120 = arith.truncf %119 : vector<8x64xf32> to vector<8x64xbf16>
    %cst_35 = arith.constant dense<0.000000e+00> : vector<8x256xf32>
    %121 = tpu.matmul %120, %53, %cst_35 {dimension_numbers = #tpu.dot_dimension_numbers<[1], [0], [0], [1], [0, 0, 1, 1], [], []>} : vector<8x64xbf16>, vector<64x256xbf16>, vector<8x256xf32> -> vector<8x256xf32>
    %c8 = arith.constant 8 : index
    %c0_36 = arith.constant 0 : index
    %122 = vector.load %arg16[%c8, %c0_36] : memref<64x256xf32, #tpu.memory_space<vmem>>, vector<8x128xf32>
    %123 = vector.extract_strided_slice %121 {offsets = [0, 0], sizes = [8, 128], strides = [1, 1]} : vector<8x256xf32> to vector<8x128xf32>
    %124 = arith.addf %122, %123 : vector<8x128xf32>
    %c48 = arith.constant 48 : index
    %c128_37 = arith.constant 128 : index
    %125 = vector.load %arg16[%c48, %c128_37] : memref<64x256xf32, #tpu.memory_space<vmem>>, vector<8x128xf32>
    %126 = vector.extract_strided_slice %121 {offsets = [0, 128], sizes = [8, 128], strides = [1, 1]} : vector<8x256xf32> to vector<8x128xf32>
    %127 = arith.addf %125, %126 : vector<8x128xf32>
    %128 = vector.extract_strided_slice %124 {offsets = [0, 0], sizes = [8, 32], strides = [1, 1]} : vector<8x128xf32> to vector<8x32xf32>
    %129 = arith.negf %128 : vector<8x32xf32>
    %130 = math.exp %129 : vector<8x32xf32>
    %cst_38 = arith.constant 1.000000e+00 : f32
    %131 = vector.broadcast %cst_38 : f32 to vector<8x32xf32>
    %132 = arith.addf %131, %130 : vector<8x32xf32>
    %133 = arith.divf %131, %132 : vector<8x32xf32>
    %134 = vector.extract_strided_slice %124 {offsets = [0, 32], sizes = [8, 32], strides = [1, 1]} : vector<8x128xf32> to vector<8x32xf32>
    %135 = arith.negf %134 : vector<8x32xf32>
    %136 = math.exp %135 : vector<8x32xf32>
    %cst_39 = arith.constant 1.000000e+00 : f32
    %137 = vector.broadcast %cst_39 : f32 to vector<8x32xf32>
    %138 = arith.addf %137, %136 : vector<8x32xf32>
    %139 = arith.divf %137, %138 : vector<8x32xf32>
    %140 = vector.extract_strided_slice %124 {offsets = [0, 64], sizes = [8, 32], strides = [1, 1]} : vector<8x128xf32> to vector<8x32xf32>
    %141 = math.tanh %140 : vector<8x32xf32>
    %142 = vector.extract_strided_slice %124 {offsets = [0, 96], sizes = [8, 32], strides = [1, 1]} : vector<8x128xf32> to vector<8x32xf32>
    %143 = arith.negf %142 : vector<8x32xf32>
    %144 = math.exp %143 : vector<8x32xf32>
    %cst_40 = arith.constant 1.000000e+00 : f32
    %145 = vector.broadcast %cst_40 : f32 to vector<8x32xf32>
    %146 = arith.addf %145, %144 : vector<8x32xf32>
    %147 = arith.divf %145, %146 : vector<8x32xf32>
    %148 = arith.mulf %139, %114 : vector<8x32xf32>
    %149 = arith.mulf %133, %141 : vector<8x32xf32>
    %150 = arith.addf %148, %149 : vector<8x32xf32>
    %151 = math.tanh %150 : vector<8x32xf32>
    %152 = arith.mulf %147, %151 : vector<8x32xf32>
    %153 = vector.extract_strided_slice %127 {offsets = [0, 0], sizes = [8, 32], strides = [1, 1]} : vector<8x128xf32> to vector<8x32xf32>
    %154 = arith.negf %153 : vector<8x32xf32>
    %155 = math.exp %154 : vector<8x32xf32>
    %cst_41 = arith.constant 1.000000e+00 : f32
    %156 = vector.broadcast %cst_41 : f32 to vector<8x32xf32>
    %157 = arith.addf %156, %155 : vector<8x32xf32>
    %158 = arith.divf %156, %157 : vector<8x32xf32>
    %159 = vector.extract_strided_slice %127 {offsets = [0, 32], sizes = [8, 32], strides = [1, 1]} : vector<8x128xf32> to vector<8x32xf32>
    %160 = arith.negf %159 : vector<8x32xf32>
    %161 = math.exp %160 : vector<8x32xf32>
    %cst_42 = arith.constant 1.000000e+00 : f32
    %162 = vector.broadcast %cst_42 : f32 to vector<8x32xf32>
    %163 = arith.addf %162, %161 : vector<8x32xf32>
    %164 = arith.divf %162, %163 : vector<8x32xf32>
    %165 = vector.extract_strided_slice %127 {offsets = [0, 64], sizes = [8, 32], strides = [1, 1]} : vector<8x128xf32> to vector<8x32xf32>
    %166 = math.tanh %165 : vector<8x32xf32>
    %167 = vector.extract_strided_slice %127 {offsets = [0, 96], sizes = [8, 32], strides = [1, 1]} : vector<8x128xf32> to vector<8x32xf32>
    %168 = arith.negf %167 : vector<8x32xf32>
    %169 = math.exp %168 : vector<8x32xf32>
    %cst_43 = arith.constant 1.000000e+00 : f32
    %170 = vector.broadcast %cst_43 : f32 to vector<8x32xf32>
    %171 = arith.addf %170, %169 : vector<8x32xf32>
    %172 = arith.divf %170, %171 : vector<8x32xf32>
    %173 = arith.mulf %164, %116 : vector<8x32xf32>
    %174 = arith.mulf %158, %166 : vector<8x32xf32>
    %175 = arith.addf %173, %174 : vector<8x32xf32>
    %176 = math.tanh %175 : vector<8x32xf32>
    %177 = arith.mulf %172, %176 : vector<8x32xf32>
    %178 = arith.select %39, %152, %113 : vector<8x32xi1>, vector<8x32xf32>
    %179 = arith.select %39, %150, %114 : vector<8x32xi1>, vector<8x32xf32>
    %180 = arith.select %49, %177, %115 : vector<8x32xi1>, vector<8x32xf32>
    %181 = arith.select %49, %175, %116 : vector<8x32xi1>, vector<8x32xf32>
    %c8_44 = arith.constant 8 : index
    %c0_45 = arith.constant 0 : index
    %182 = vector.load %arg17[%c8_44, %c0_45] : memref<64x32xf32, #tpu.memory_space<vmem>>, vector<8x32xf32>
    tpu.vector_store %arg17[%c8_44, %c0_45], %178 {strides = array<i32>} : memref<64x32xf32, #tpu.memory_space<vmem>>, vector<8x32xf32>,
    %c48_46 = arith.constant 48 : index
    %c0_47 = arith.constant 0 : index
    %183 = vector.load %arg18[%c48_46, %c0_47] : memref<64x32xf32, #tpu.memory_space<vmem>>, vector<8x32xf32>
    tpu.vector_store %arg18[%c48_46, %c0_47], %180 {strides = array<i32>} : memref<64x32xf32, #tpu.memory_space<vmem>>, vector<8x32xf32>,
    %184 = tpu.concatenate %178, %180 in 1 : vector<8x32xf32>, vector<8x32xf32> -> vector<8x64xf32>
    %185 = arith.truncf %184 : vector<8x64xf32> to vector<8x64xbf16>
    %cst_48 = arith.constant dense<0.000000e+00> : vector<8x256xf32>
    %186 = tpu.matmul %185, %53, %cst_48 {dimension_numbers = #tpu.dot_dimension_numbers<[1], [0], [0], [1], [0, 0, 1, 1], [], []>} : vector<8x64xbf16>, vector<64x256xbf16>, vector<8x256xf32> -> vector<8x256xf32>
    %c16 = arith.constant 16 : index
    %c0_49 = arith.constant 0 : index
    %187 = vector.load %arg16[%c16, %c0_49] : memref<64x256xf32, #tpu.memory_space<vmem>>, vector<8x128xf32>
    %188 = vector.extract_strided_slice %186 {offsets = [0, 0], sizes = [8, 128], strides = [1, 1]} : vector<8x256xf32> to vector<8x128xf32>
    %189 = arith.addf %187, %188 : vector<8x128xf32>
    %c40 = arith.constant 40 : index
    %c128_50 = arith.constant 128 : index
    %190 = vector.load %arg16[%c40, %c128_50] : memref<64x256xf32, #tpu.memory_space<vmem>>, vector<8x128xf32>
    %191 = vector.extract_strided_slice %186 {offsets = [0, 128], sizes = [8, 128], strides = [1, 1]} : vector<8x256xf32> to vector<8x128xf32>
    %192 = arith.addf %190, %191 : vector<8x128xf32>
    %193 = vector.extract_strided_slice %189 {offsets = [0, 0], sizes = [8, 32], strides = [1, 1]} : vector<8x128xf32> to vector<8x32xf32>
    %194 = arith.negf %193 : vector<8x32xf32>
    %195 = math.exp %194 : vector<8x32xf32>
    %cst_51 = arith.constant 1.000000e+00 : f32
    %196 = vector.broadcast %cst_51 : f32 to vector<8x32xf32>
    %197 = arith.addf %196, %195 : vector<8x32xf32>
    %198 = arith.divf %196, %197 : vector<8x32xf32>
    %199 = vector.extract_strided_slice %189 {offsets = [0, 32], sizes = [8, 32], strides = [1, 1]} : vector<8x128xf32> to vector<8x32xf32>
    %200 = arith.negf %199 : vector<8x32xf32>
    %201 = math.exp %200 : vector<8x32xf32>
    %cst_52 = arith.constant 1.000000e+00 : f32
    %202 = vector.broadcast %cst_52 : f32 to vector<8x32xf32>
    %203 = arith.addf %202, %201 : vector<8x32xf32>
    %204 = arith.divf %202, %203 : vector<8x32xf32>
    %205 = vector.extract_strided_slice %189 {offsets = [0, 64], sizes = [8, 32], strides = [1, 1]} : vector<8x128xf32> to vector<8x32xf32>
    %206 = math.tanh %205 : vector<8x32xf32>
    %207 = vector.extract_strided_slice %189 {offsets = [0, 96], sizes = [8, 32], strides = [1, 1]} : vector<8x128xf32> to vector<8x32xf32>
    %208 = arith.negf %207 : vector<8x32xf32>
    %209 = math.exp %208 : vector<8x32xf32>
    %cst_53 = arith.constant 1.000000e+00 : f32
    %210 = vector.broadcast %cst_53 : f32 to vector<8x32xf32>
    %211 = arith.addf %210, %209 : vector<8x32xf32>
    %212 = arith.divf %210, %211 : vector<8x32xf32>
    %213 = arith.mulf %204, %179 : vector<8x32xf32>
    %214 = arith.mulf %198, %206 : vector<8x32xf32>
    %215 = arith.addf %213, %214 : vector<8x32xf32>
    %216 = math.tanh %215 : vector<8x32xf32>
    %217 = arith.mulf %212, %216 : vector<8x32xf32>
    %218 = vector.extract_strided_slice %192 {offsets = [0, 0], sizes = [8, 32], strides = [1, 1]} : vector<8x128xf32> to vector<8x32xf32>
    %219 = arith.negf %218 : vector<8x32xf32>
    %220 = math.exp %219 : vector<8x32xf32>
    %cst_54 = arith.constant 1.000000e+00 : f32
    %221 = vector.broadcast %cst_54 : f32 to vector<8x32xf32>
    %222 = arith.addf %221, %220 : vector<8x32xf32>
    %223 = arith.divf %221, %222 : vector<8x32xf32>
    %224 = vector.extract_strided_slice %192 {offsets = [0, 32], sizes = [8, 32], strides = [1, 1]} : vector<8x128xf32> to vector<8x32xf32>
    %225 = arith.negf %224 : vector<8x32xf32>
    %226 = math.exp %225 : vector<8x32xf32>
    %cst_55 = arith.constant 1.000000e+00 : f32
    %227 = vector.broadcast %cst_55 : f32 to vector<8x32xf32>
    %228 = arith.addf %227, %226 : vector<8x32xf32>
    %229 = arith.divf %227, %228 : vector<8x32xf32>
    %230 = vector.extract_strided_slice %192 {offsets = [0, 64], sizes = [8, 32], strides = [1, 1]} : vector<8x128xf32> to vector<8x32xf32>
    %231 = math.tanh %230 : vector<8x32xf32>
    %232 = vector.extract_strided_slice %192 {offsets = [0, 96], sizes = [8, 32], strides = [1, 1]} : vector<8x128xf32> to vector<8x32xf32>
    %233 = arith.negf %232 : vector<8x32xf32>
    %234 = math.exp %233 : vector<8x32xf32>
    %cst_56 = arith.constant 1.000000e+00 : f32
    %235 = vector.broadcast %cst_56 : f32 to vector<8x32xf32>
    %236 = arith.addf %235, %234 : vector<8x32xf32>
    %237 = arith.divf %235, %236 : vector<8x32xf32>
    %238 = arith.mulf %229, %181 : vector<8x32xf32>
    %239 = arith.mulf %223, %231 : vector<8x32xf32>
    %240 = arith.addf %238, %239 : vector<8x32xf32>
    %241 = math.tanh %240 : vector<8x32xf32>
    %242 = arith.mulf %237, %241 : vector<8x32xf32>
    %243 = arith.select %41, %217, %178 : vector<8x32xi1>, vector<8x32xf32>
    %244 = arith.select %41, %215, %179 : vector<8x32xi1>, vector<8x32xf32>
    %245 = arith.select %47, %242, %180 : vector<8x32xi1>, vector<8x32xf32>
    %246 = arith.select %47, %240, %181 : vector<8x32xi1>, vector<8x32xf32>
    %c16_57 = arith.constant 16 : index
    %c0_58 = arith.constant 0 : index
    %247 = vector.load %arg17[%c16_57, %c0_58] : memref<64x32xf32, #tpu.memory_space<vmem>>, vector<8x32xf32>
    tpu.vector_store %arg17[%c16_57, %c0_58], %243 {strides = array<i32>} : memref<64x32xf32, #tpu.memory_space<vmem>>, vector<8x32xf32>,
    %c40_59 = arith.constant 40 : index
    %c0_60 = arith.constant 0 : index
    %248 = vector.load %arg18[%c40_59, %c0_60] : memref<64x32xf32, #tpu.memory_space<vmem>>, vector<8x32xf32>
    tpu.vector_store %arg18[%c40_59, %c0_60], %245 {strides = array<i32>} : memref<64x32xf32, #tpu.memory_space<vmem>>, vector<8x32xf32>,
    %249 = tpu.concatenate %243, %245 in 1 : vector<8x32xf32>, vector<8x32xf32> -> vector<8x64xf32>
    %250 = arith.truncf %249 : vector<8x64xf32> to vector<8x64xbf16>
    %cst_61 = arith.constant dense<0.000000e+00> : vector<8x256xf32>
    %251 = tpu.matmul %250, %53, %cst_61 {dimension_numbers = #tpu.dot_dimension_numbers<[1], [0], [0], [1], [0, 0, 1, 1], [], []>} : vector<8x64xbf16>, vector<64x256xbf16>, vector<8x256xf32> -> vector<8x256xf32>
    %c24 = arith.constant 24 : index
    %c0_62 = arith.constant 0 : index
    %252 = vector.load %arg16[%c24, %c0_62] : memref<64x256xf32, #tpu.memory_space<vmem>>, vector<8x128xf32>
    %253 = vector.extract_strided_slice %251 {offsets = [0, 0], sizes = [8, 128], strides = [1, 1]} : vector<8x256xf32> to vector<8x128xf32>
    %254 = arith.addf %252, %253 : vector<8x128xf32>
    %c32 = arith.constant 32 : index
    %c128_63 = arith.constant 128 : index
    %255 = vector.load %arg16[%c32, %c128_63] : memref<64x256xf32, #tpu.memory_space<vmem>>, vector<8x128xf32>
    %256 = vector.extract_strided_slice %251 {offsets = [0, 128], sizes = [8, 128], strides = [1, 1]} : vector<8x256xf32> to vector<8x128xf32>
    %257 = arith.addf %255, %256 : vector<8x128xf32>
    %258 = vector.extract_strided_slice %254 {offsets = [0, 0], sizes = [8, 32], strides = [1, 1]} : vector<8x128xf32> to vector<8x32xf32>
    %259 = arith.negf %258 : vector<8x32xf32>
    %260 = math.exp %259 : vector<8x32xf32>
    %cst_64 = arith.constant 1.000000e+00 : f32
    %261 = vector.broadcast %cst_64 : f32 to vector<8x32xf32>
    %262 = arith.addf %261, %260 : vector<8x32xf32>
    %263 = arith.divf %261, %262 : vector<8x32xf32>
    %264 = vector.extract_strided_slice %254 {offsets = [0, 32], sizes = [8, 32], strides = [1, 1]} : vector<8x128xf32> to vector<8x32xf32>
    %265 = arith.negf %264 : vector<8x32xf32>
    %266 = math.exp %265 : vector<8x32xf32>
    %cst_65 = arith.constant 1.000000e+00 : f32
    %267 = vector.broadcast %cst_65 : f32 to vector<8x32xf32>
    %268 = arith.addf %267, %266 : vector<8x32xf32>
    %269 = arith.divf %267, %268 : vector<8x32xf32>
    %270 = vector.extract_strided_slice %254 {offsets = [0, 64], sizes = [8, 32], strides = [1, 1]} : vector<8x128xf32> to vector<8x32xf32>
    %271 = math.tanh %270 : vector<8x32xf32>
    %272 = vector.extract_strided_slice %254 {offsets = [0, 96], sizes = [8, 32], strides = [1, 1]} : vector<8x128xf32> to vector<8x32xf32>
    %273 = arith.negf %272 : vector<8x32xf32>
    %274 = math.exp %273 : vector<8x32xf32>
    %cst_66 = arith.constant 1.000000e+00 : f32
    %275 = vector.broadcast %cst_66 : f32 to vector<8x32xf32>
    %276 = arith.addf %275, %274 : vector<8x32xf32>
    %277 = arith.divf %275, %276 : vector<8x32xf32>
    %278 = arith.mulf %269, %244 : vector<8x32xf32>
    %279 = arith.mulf %263, %271 : vector<8x32xf32>
    %280 = arith.addf %278, %279 : vector<8x32xf32>
    %281 = math.tanh %280 : vector<8x32xf32>
    %282 = arith.mulf %277, %281 : vector<8x32xf32>
    %283 = vector.extract_strided_slice %257 {offsets = [0, 0], sizes = [8, 32], strides = [1, 1]} : vector<8x128xf32> to vector<8x32xf32>
    %284 = arith.negf %283 : vector<8x32xf32>
    %285 = math.exp %284 : vector<8x32xf32>
    %cst_67 = arith.constant 1.000000e+00 : f32
    %286 = vector.broadcast %cst_67 : f32 to vector<8x32xf32>
    %287 = arith.addf %286, %285 : vector<8x32xf32>
    %288 = arith.divf %286, %287 : vector<8x32xf32>
    %289 = vector.extract_strided_slice %257 {offsets = [0, 32], sizes = [8, 32], strides = [1, 1]} : vector<8x128xf32> to vector<8x32xf32>
    %290 = arith.negf %289 : vector<8x32xf32>
    %291 = math.exp %290 : vector<8x32xf32>
    %cst_68 = arith.constant 1.000000e+00 : f32
    %292 = vector.broadcast %cst_68 : f32 to vector<8x32xf32>
    %293 = arith.addf %292, %291 : vector<8x32xf32>
    %294 = arith.divf %292, %293 : vector<8x32xf32>
    %295 = vector.extract_strided_slice %257 {offsets = [0, 64], sizes = [8, 32], strides = [1, 1]} : vector<8x128xf32> to vector<8x32xf32>
    %296 = math.tanh %295 : vector<8x32xf32>
    %297 = vector.extract_strided_slice %257 {offsets = [0, 96], sizes = [8, 32], strides = [1, 1]} : vector<8x128xf32> to vector<8x32xf32>
    %298 = arith.negf %297 : vector<8x32xf32>
    %299 = math.exp %298 : vector<8x32xf32>
    %cst_69 = arith.constant 1.000000e+00 : f32
    %300 = vector.broadcast %cst_69 : f32 to vector<8x32xf32>
    %301 = arith.addf %300, %299 : vector<8x32xf32>
    %302 = arith.divf %300, %301 : vector<8x32xf32>
    %303 = arith.mulf %294, %246 : vector<8x32xf32>
    %304 = arith.mulf %288, %296 : vector<8x32xf32>
    %305 = arith.addf %303, %304 : vector<8x32xf32>
    %306 = math.tanh %305 : vector<8x32xf32>
    %307 = arith.mulf %302, %306 : vector<8x32xf32>
    %308 = arith.select %43, %282, %243 : vector<8x32xi1>, vector<8x32xf32>
    %309 = arith.select %43, %280, %244 : vector<8x32xi1>, vector<8x32xf32>
    %310 = arith.select %45, %307, %245 : vector<8x32xi1>, vector<8x32xf32>
    %311 = arith.select %45, %305, %246 : vector<8x32xi1>, vector<8x32xf32>
    %c24_70 = arith.constant 24 : index
    %c0_71 = arith.constant 0 : index
    %312 = vector.load %arg17[%c24_70, %c0_71] : memref<64x32xf32, #tpu.memory_space<vmem>>, vector<8x32xf32>
    tpu.vector_store %arg17[%c24_70, %c0_71], %308 {strides = array<i32>} : memref<64x32xf32, #tpu.memory_space<vmem>>, vector<8x32xf32>,
    %c32_72 = arith.constant 32 : index
    %c0_73 = arith.constant 0 : index
    %313 = vector.load %arg18[%c32_72, %c0_73] : memref<64x32xf32, #tpu.memory_space<vmem>>, vector<8x32xf32>
    tpu.vector_store %arg18[%c32_72, %c0_73], %310 {strides = array<i32>} : memref<64x32xf32, #tpu.memory_space<vmem>>, vector<8x32xf32>,
    %314 = tpu.concatenate %308, %310 in 1 : vector<8x32xf32>, vector<8x32xf32> -> vector<8x64xf32>
    %315 = arith.truncf %314 : vector<8x64xf32> to vector<8x64xbf16>
    %cst_74 = arith.constant dense<0.000000e+00> : vector<8x256xf32>
    %316 = tpu.matmul %315, %53, %cst_74 {dimension_numbers = #tpu.dot_dimension_numbers<[1], [0], [0], [1], [0, 0, 1, 1], [], []>} : vector<8x64xbf16>, vector<64x256xbf16>, vector<8x256xf32> -> vector<8x256xf32>
    %c32_75 = arith.constant 32 : index
    %c0_76 = arith.constant 0 : index
    %317 = vector.load %arg16[%c32_75, %c0_76] : memref<64x256xf32, #tpu.memory_space<vmem>>, vector<8x128xf32>
    %318 = vector.extract_strided_slice %316 {offsets = [0, 0], sizes = [8, 128], strides = [1, 1]} : vector<8x256xf32> to vector<8x128xf32>
    %319 = arith.addf %317, %318 : vector<8x128xf32>
    %c24_77 = arith.constant 24 : index
    %c128_78 = arith.constant 128 : index
    %320 = vector.load %arg16[%c24_77, %c128_78] : memref<64x256xf32, #tpu.memory_space<vmem>>, vector<8x128xf32>
    %321 = vector.extract_strided_slice %316 {offsets = [0, 128], sizes = [8, 128], strides = [1, 1]} : vector<8x256xf32> to vector<8x128xf32>
    %322 = arith.addf %320, %321 : vector<8x128xf32>
    %323 = vector.extract_strided_slice %319 {offsets = [0, 0], sizes = [8, 32], strides = [1, 1]} : vector<8x128xf32> to vector<8x32xf32>
    %324 = arith.negf %323 : vector<8x32xf32>
    %325 = math.exp %324 : vector<8x32xf32>
    %cst_79 = arith.constant 1.000000e+00 : f32
    %326 = vector.broadcast %cst_79 : f32 to vector<8x32xf32>
    %327 = arith.addf %326, %325 : vector<8x32xf32>
    %328 = arith.divf %326, %327 : vector<8x32xf32>
    %329 = vector.extract_strided_slice %319 {offsets = [0, 32], sizes = [8, 32], strides = [1, 1]} : vector<8x128xf32> to vector<8x32xf32>
    %330 = arith.negf %329 : vector<8x32xf32>
    %331 = math.exp %330 : vector<8x32xf32>
    %cst_80 = arith.constant 1.000000e+00 : f32
    %332 = vector.broadcast %cst_80 : f32 to vector<8x32xf32>
    %333 = arith.addf %332, %331 : vector<8x32xf32>
    %334 = arith.divf %332, %333 : vector<8x32xf32>
    %335 = vector.extract_strided_slice %319 {offsets = [0, 64], sizes = [8, 32], strides = [1, 1]} : vector<8x128xf32> to vector<8x32xf32>
    %336 = math.tanh %335 : vector<8x32xf32>
    %337 = vector.extract_strided_slice %319 {offsets = [0, 96], sizes = [8, 32], strides = [1, 1]} : vector<8x128xf32> to vector<8x32xf32>
    %338 = arith.negf %337 : vector<8x32xf32>
    %339 = math.exp %338 : vector<8x32xf32>
    %cst_81 = arith.constant 1.000000e+00 : f32
    %340 = vector.broadcast %cst_81 : f32 to vector<8x32xf32>
    %341 = arith.addf %340, %339 : vector<8x32xf32>
    %342 = arith.divf %340, %341 : vector<8x32xf32>
    %343 = arith.mulf %334, %309 : vector<8x32xf32>
    %344 = arith.mulf %328, %336 : vector<8x32xf32>
    %345 = arith.addf %343, %344 : vector<8x32xf32>
    %346 = math.tanh %345 : vector<8x32xf32>
    %347 = arith.mulf %342, %346 : vector<8x32xf32>
    %348 = vector.extract_strided_slice %322 {offsets = [0, 0], sizes = [8, 32], strides = [1, 1]} : vector<8x128xf32> to vector<8x32xf32>
    %349 = arith.negf %348 : vector<8x32xf32>
    %350 = math.exp %349 : vector<8x32xf32>
    %cst_82 = arith.constant 1.000000e+00 : f32
    %351 = vector.broadcast %cst_82 : f32 to vector<8x32xf32>
    %352 = arith.addf %351, %350 : vector<8x32xf32>
    %353 = arith.divf %351, %352 : vector<8x32xf32>
    %354 = vector.extract_strided_slice %322 {offsets = [0, 32], sizes = [8, 32], strides = [1, 1]} : vector<8x128xf32> to vector<8x32xf32>
    %355 = arith.negf %354 : vector<8x32xf32>
    %356 = math.exp %355 : vector<8x32xf32>
    %cst_83 = arith.constant 1.000000e+00 : f32
    %357 = vector.broadcast %cst_83 : f32 to vector<8x32xf32>
    %358 = arith.addf %357, %356 : vector<8x32xf32>
    %359 = arith.divf %357, %358 : vector<8x32xf32>
    %360 = vector.extract_strided_slice %322 {offsets = [0, 64], sizes = [8, 32], strides = [1, 1]} : vector<8x128xf32> to vector<8x32xf32>
    %361 = math.tanh %360 : vector<8x32xf32>
    %362 = vector.extract_strided_slice %322 {offsets = [0, 96], sizes = [8, 32], strides = [1, 1]} : vector<8x128xf32> to vector<8x32xf32>
    %363 = arith.negf %362 : vector<8x32xf32>
    %364 = math.exp %363 : vector<8x32xf32>
    %cst_84 = arith.constant 1.000000e+00 : f32
    %365 = vector.broadcast %cst_84 : f32 to vector<8x32xf32>
    %366 = arith.addf %365, %364 : vector<8x32xf32>
    %367 = arith.divf %365, %366 : vector<8x32xf32>
    %368 = arith.mulf %359, %311 : vector<8x32xf32>
    %369 = arith.mulf %353, %361 : vector<8x32xf32>
    %370 = arith.addf %368, %369 : vector<8x32xf32>
    %371 = math.tanh %370 : vector<8x32xf32>
    %372 = arith.mulf %367, %371 : vector<8x32xf32>
    %373 = arith.select %45, %347, %308 : vector<8x32xi1>, vector<8x32xf32>
    %374 = arith.select %45, %345, %309 : vector<8x32xi1>, vector<8x32xf32>
    %375 = arith.select %43, %372, %310 : vector<8x32xi1>, vector<8x32xf32>
    %376 = arith.select %43, %370, %311 : vector<8x32xi1>, vector<8x32xf32>
    %c32_85 = arith.constant 32 : index
    %c0_86 = arith.constant 0 : index
    %377 = vector.load %arg17[%c32_85, %c0_86] : memref<64x32xf32, #tpu.memory_space<vmem>>, vector<8x32xf32>
    tpu.vector_store %arg17[%c32_85, %c0_86], %373 {strides = array<i32>} : memref<64x32xf32, #tpu.memory_space<vmem>>, vector<8x32xf32>,
    %c24_87 = arith.constant 24 : index
    %c0_88 = arith.constant 0 : index
    %378 = vector.load %arg18[%c24_87, %c0_88] : memref<64x32xf32, #tpu.memory_space<vmem>>, vector<8x32xf32>
    tpu.vector_store %arg18[%c24_87, %c0_88], %375 {strides = array<i32>} : memref<64x32xf32, #tpu.memory_space<vmem>>, vector<8x32xf32>,
    %379 = tpu.concatenate %373, %375 in 1 : vector<8x32xf32>, vector<8x32xf32> -> vector<8x64xf32>
    %380 = arith.truncf %379 : vector<8x64xf32> to vector<8x64xbf16>
    %cst_89 = arith.constant dense<0.000000e+00> : vector<8x256xf32>
    %381 = tpu.matmul %380, %53, %cst_89 {dimension_numbers = #tpu.dot_dimension_numbers<[1], [0], [0], [1], [0, 0, 1, 1], [], []>} : vector<8x64xbf16>, vector<64x256xbf16>, vector<8x256xf32> -> vector<8x256xf32>
    %c40_90 = arith.constant 40 : index
    %c0_91 = arith.constant 0 : index
    %382 = vector.load %arg16[%c40_90, %c0_91] : memref<64x256xf32, #tpu.memory_space<vmem>>, vector<8x128xf32>
    %383 = vector.extract_strided_slice %381 {offsets = [0, 0], sizes = [8, 128], strides = [1, 1]} : vector<8x256xf32> to vector<8x128xf32>
    %384 = arith.addf %382, %383 : vector<8x128xf32>
    %c16_92 = arith.constant 16 : index
    %c128_93 = arith.constant 128 : index
    %385 = vector.load %arg16[%c16_92, %c128_93] : memref<64x256xf32, #tpu.memory_space<vmem>>, vector<8x128xf32>
    %386 = vector.extract_strided_slice %381 {offsets = [0, 128], sizes = [8, 128], strides = [1, 1]} : vector<8x256xf32> to vector<8x128xf32>
    %387 = arith.addf %385, %386 : vector<8x128xf32>
    %388 = vector.extract_strided_slice %384 {offsets = [0, 0], sizes = [8, 32], strides = [1, 1]} : vector<8x128xf32> to vector<8x32xf32>
    %389 = arith.negf %388 : vector<8x32xf32>
    %390 = math.exp %389 : vector<8x32xf32>
    %cst_94 = arith.constant 1.000000e+00 : f32
    %391 = vector.broadcast %cst_94 : f32 to vector<8x32xf32>
    %392 = arith.addf %391, %390 : vector<8x32xf32>
    %393 = arith.divf %391, %392 : vector<8x32xf32>
    %394 = vector.extract_strided_slice %384 {offsets = [0, 32], sizes = [8, 32], strides = [1, 1]} : vector<8x128xf32> to vector<8x32xf32>
    %395 = arith.negf %394 : vector<8x32xf32>
    %396 = math.exp %395 : vector<8x32xf32>
    %cst_95 = arith.constant 1.000000e+00 : f32
    %397 = vector.broadcast %cst_95 : f32 to vector<8x32xf32>
    %398 = arith.addf %397, %396 : vector<8x32xf32>
    %399 = arith.divf %397, %398 : vector<8x32xf32>
    %400 = vector.extract_strided_slice %384 {offsets = [0, 64], sizes = [8, 32], strides = [1, 1]} : vector<8x128xf32> to vector<8x32xf32>
    %401 = math.tanh %400 : vector<8x32xf32>
    %402 = vector.extract_strided_slice %384 {offsets = [0, 96], sizes = [8, 32], strides = [1, 1]} : vector<8x128xf32> to vector<8x32xf32>
    %403 = arith.negf %402 : vector<8x32xf32>
    %404 = math.exp %403 : vector<8x32xf32>
    %cst_96 = arith.constant 1.000000e+00 : f32
    %405 = vector.broadcast %cst_96 : f32 to vector<8x32xf32>
    %406 = arith.addf %405, %404 : vector<8x32xf32>
    %407 = arith.divf %405, %406 : vector<8x32xf32>
    %408 = arith.mulf %399, %374 : vector<8x32xf32>
    %409 = arith.mulf %393, %401 : vector<8x32xf32>
    %410 = arith.addf %408, %409 : vector<8x32xf32>
    %411 = math.tanh %410 : vector<8x32xf32>
    %412 = arith.mulf %407, %411 : vector<8x32xf32>
    %413 = vector.extract_strided_slice %387 {offsets = [0, 0], sizes = [8, 32], strides = [1, 1]} : vector<8x128xf32> to vector<8x32xf32>
    %414 = arith.negf %413 : vector<8x32xf32>
    %415 = math.exp %414 : vector<8x32xf32>
    %cst_97 = arith.constant 1.000000e+00 : f32
    %416 = vector.broadcast %cst_97 : f32 to vector<8x32xf32>
    %417 = arith.addf %416, %415 : vector<8x32xf32>
    %418 = arith.divf %416, %417 : vector<8x32xf32>
    %419 = vector.extract_strided_slice %387 {offsets = [0, 32], sizes = [8, 32], strides = [1, 1]} : vector<8x128xf32> to vector<8x32xf32>
    %420 = arith.negf %419 : vector<8x32xf32>
    %421 = math.exp %420 : vector<8x32xf32>
    %cst_98 = arith.constant 1.000000e+00 : f32
    %422 = vector.broadcast %cst_98 : f32 to vector<8x32xf32>
    %423 = arith.addf %422, %421 : vector<8x32xf32>
    %424 = arith.divf %422, %423 : vector<8x32xf32>
    %425 = vector.extract_strided_slice %387 {offsets = [0, 64], sizes = [8, 32], strides = [1, 1]} : vector<8x128xf32> to vector<8x32xf32>
    %426 = math.tanh %425 : vector<8x32xf32>
    %427 = vector.extract_strided_slice %387 {offsets = [0, 96], sizes = [8, 32], strides = [1, 1]} : vector<8x128xf32> to vector<8x32xf32>
    %428 = arith.negf %427 : vector<8x32xf32>
    %429 = math.exp %428 : vector<8x32xf32>
    %cst_99 = arith.constant 1.000000e+00 : f32
    %430 = vector.broadcast %cst_99 : f32 to vector<8x32xf32>
    %431 = arith.addf %430, %429 : vector<8x32xf32>
    %432 = arith.divf %430, %431 : vector<8x32xf32>
    %433 = arith.mulf %424, %376 : vector<8x32xf32>
    %434 = arith.mulf %418, %426 : vector<8x32xf32>
    %435 = arith.addf %433, %434 : vector<8x32xf32>
    %436 = math.tanh %435 : vector<8x32xf32>
    %437 = arith.mulf %432, %436 : vector<8x32xf32>
    %438 = arith.select %47, %412, %373 : vector<8x32xi1>, vector<8x32xf32>
    %439 = arith.select %47, %410, %374 : vector<8x32xi1>, vector<8x32xf32>
    %440 = arith.select %41, %437, %375 : vector<8x32xi1>, vector<8x32xf32>
    %441 = arith.select %41, %435, %376 : vector<8x32xi1>, vector<8x32xf32>
    %c40_100 = arith.constant 40 : index
    %c0_101 = arith.constant 0 : index
    %442 = vector.load %arg17[%c40_100, %c0_101] : memref<64x32xf32, #tpu.memory_space<vmem>>, vector<8x32xf32>
    tpu.vector_store %arg17[%c40_100, %c0_101], %438 {strides = array<i32>} : memref<64x32xf32, #tpu.memory_space<vmem>>, vector<8x32xf32>,
    %c16_102 = arith.constant 16 : index
    %c0_103 = arith.constant 0 : index
    %443 = vector.load %arg18[%c16_102, %c0_103] : memref<64x32xf32, #tpu.memory_space<vmem>>, vector<8x32xf32>
    tpu.vector_store %arg18[%c16_102, %c0_103], %440 {strides = array<i32>} : memref<64x32xf32, #tpu.memory_space<vmem>>, vector<8x32xf32>,
    %444 = tpu.concatenate %438, %440 in 1 : vector<8x32xf32>, vector<8x32xf32> -> vector<8x64xf32>
    %445 = arith.truncf %444 : vector<8x64xf32> to vector<8x64xbf16>
    %cst_104 = arith.constant dense<0.000000e+00> : vector<8x256xf32>
    %446 = tpu.matmul %445, %53, %cst_104 {dimension_numbers = #tpu.dot_dimension_numbers<[1], [0], [0], [1], [0, 0, 1, 1], [], []>} : vector<8x64xbf16>, vector<64x256xbf16>, vector<8x256xf32> -> vector<8x256xf32>
    %c48_105 = arith.constant 48 : index
    %c0_106 = arith.constant 0 : index
    %447 = vector.load %arg16[%c48_105, %c0_106] : memref<64x256xf32, #tpu.memory_space<vmem>>, vector<8x128xf32>
    %448 = vector.extract_strided_slice %446 {offsets = [0, 0], sizes = [8, 128], strides = [1, 1]} : vector<8x256xf32> to vector<8x128xf32>
    %449 = arith.addf %447, %448 : vector<8x128xf32>
    %c8_107 = arith.constant 8 : index
    %c128_108 = arith.constant 128 : index
    %450 = vector.load %arg16[%c8_107, %c128_108] : memref<64x256xf32, #tpu.memory_space<vmem>>, vector<8x128xf32>
    %451 = vector.extract_strided_slice %446 {offsets = [0, 128], sizes = [8, 128], strides = [1, 1]} : vector<8x256xf32> to vector<8x128xf32>
    %452 = arith.addf %450, %451 : vector<8x128xf32>
    %453 = vector.extract_strided_slice %449 {offsets = [0, 0], sizes = [8, 32], strides = [1, 1]} : vector<8x128xf32> to vector<8x32xf32>
    %454 = arith.negf %453 : vector<8x32xf32>
    %455 = math.exp %454 : vector<8x32xf32>
    %cst_109 = arith.constant 1.000000e+00 : f32
    %456 = vector.broadcast %cst_109 : f32 to vector<8x32xf32>
    %457 = arith.addf %456, %455 : vector<8x32xf32>
    %458 = arith.divf %456, %457 : vector<8x32xf32>
    %459 = vector.extract_strided_slice %449 {offsets = [0, 32], sizes = [8, 32], strides = [1, 1]} : vector<8x128xf32> to vector<8x32xf32>
    %460 = arith.negf %459 : vector<8x32xf32>
    %461 = math.exp %460 : vector<8x32xf32>
    %cst_110 = arith.constant 1.000000e+00 : f32
    %462 = vector.broadcast %cst_110 : f32 to vector<8x32xf32>
    %463 = arith.addf %462, %461 : vector<8x32xf32>
    %464 = arith.divf %462, %463 : vector<8x32xf32>
    %465 = vector.extract_strided_slice %449 {offsets = [0, 64], sizes = [8, 32], strides = [1, 1]} : vector<8x128xf32> to vector<8x32xf32>
    %466 = math.tanh %465 : vector<8x32xf32>
    %467 = vector.extract_strided_slice %449 {offsets = [0, 96], sizes = [8, 32], strides = [1, 1]} : vector<8x128xf32> to vector<8x32xf32>
    %468 = arith.negf %467 : vector<8x32xf32>
    %469 = math.exp %468 : vector<8x32xf32>
    %cst_111 = arith.constant 1.000000e+00 : f32
    %470 = vector.broadcast %cst_111 : f32 to vector<8x32xf32>
    %471 = arith.addf %470, %469 : vector<8x32xf32>
    %472 = arith.divf %470, %471 : vector<8x32xf32>
    %473 = arith.mulf %464, %439 : vector<8x32xf32>
    %474 = arith.mulf %458, %466 : vector<8x32xf32>
    %475 = arith.addf %473, %474 : vector<8x32xf32>
    %476 = math.tanh %475 : vector<8x32xf32>
    %477 = arith.mulf %472, %476 : vector<8x32xf32>
    %478 = vector.extract_strided_slice %452 {offsets = [0, 0], sizes = [8, 32], strides = [1, 1]} : vector<8x128xf32> to vector<8x32xf32>
    %479 = arith.negf %478 : vector<8x32xf32>
    %480 = math.exp %479 : vector<8x32xf32>
    %cst_112 = arith.constant 1.000000e+00 : f32
    %481 = vector.broadcast %cst_112 : f32 to vector<8x32xf32>
    %482 = arith.addf %481, %480 : vector<8x32xf32>
    %483 = arith.divf %481, %482 : vector<8x32xf32>
    %484 = vector.extract_strided_slice %452 {offsets = [0, 32], sizes = [8, 32], strides = [1, 1]} : vector<8x128xf32> to vector<8x32xf32>
    %485 = arith.negf %484 : vector<8x32xf32>
    %486 = math.exp %485 : vector<8x32xf32>
    %cst_113 = arith.constant 1.000000e+00 : f32
    %487 = vector.broadcast %cst_113 : f32 to vector<8x32xf32>
    %488 = arith.addf %487, %486 : vector<8x32xf32>
    %489 = arith.divf %487, %488 : vector<8x32xf32>
    %490 = vector.extract_strided_slice %452 {offsets = [0, 64], sizes = [8, 32], strides = [1, 1]} : vector<8x128xf32> to vector<8x32xf32>
    %491 = math.tanh %490 : vector<8x32xf32>
    %492 = vector.extract_strided_slice %452 {offsets = [0, 96], sizes = [8, 32], strides = [1, 1]} : vector<8x128xf32> to vector<8x32xf32>
    %493 = arith.negf %492 : vector<8x32xf32>
    %494 = math.exp %493 : vector<8x32xf32>
    %cst_114 = arith.constant 1.000000e+00 : f32
    %495 = vector.broadcast %cst_114 : f32 to vector<8x32xf32>
    %496 = arith.addf %495, %494 : vector<8x32xf32>
    %497 = arith.divf %495, %496 : vector<8x32xf32>
    %498 = arith.mulf %489, %441 : vector<8x32xf32>
    %499 = arith.mulf %483, %491 : vector<8x32xf32>
    %500 = arith.addf %498, %499 : vector<8x32xf32>
    %501 = math.tanh %500 : vector<8x32xf32>
    %502 = arith.mulf %497, %501 : vector<8x32xf32>
    %503 = arith.select %49, %477, %438 : vector<8x32xi1>, vector<8x32xf32>
    %504 = arith.select %49, %475, %439 : vector<8x32xi1>, vector<8x32xf32>
    %505 = arith.select %39, %502, %440 : vector<8x32xi1>, vector<8x32xf32>
    %506 = arith.select %39, %500, %441 : vector<8x32xi1>, vector<8x32xf32>
    %c48_115 = arith.constant 48 : index
    %c0_116 = arith.constant 0 : index
    %507 = vector.load %arg17[%c48_115, %c0_116] : memref<64x32xf32, #tpu.memory_space<vmem>>, vector<8x32xf32>
    tpu.vector_store %arg17[%c48_115, %c0_116], %503 {strides = array<i32>} : memref<64x32xf32, #tpu.memory_space<vmem>>, vector<8x32xf32>,
    %c8_117 = arith.constant 8 : index
    %c0_118 = arith.constant 0 : index
    %508 = vector.load %arg18[%c8_117, %c0_118] : memref<64x32xf32, #tpu.memory_space<vmem>>, vector<8x32xf32>
    tpu.vector_store %arg18[%c8_117, %c0_118], %505 {strides = array<i32>} : memref<64x32xf32, #tpu.memory_space<vmem>>, vector<8x32xf32>,
    %509 = tpu.concatenate %503, %505 in 1 : vector<8x32xf32>, vector<8x32xf32> -> vector<8x64xf32>
    %510 = arith.truncf %509 : vector<8x64xf32> to vector<8x64xbf16>
    %cst_119 = arith.constant dense<0.000000e+00> : vector<8x256xf32>
    %511 = tpu.matmul %510, %53, %cst_119 {dimension_numbers = #tpu.dot_dimension_numbers<[1], [0], [0], [1], [0, 0, 1, 1], [], []>} : vector<8x64xbf16>, vector<64x256xbf16>, vector<8x256xf32> -> vector<8x256xf32>
    %c56_120 = arith.constant 56 : index
    %c0_121 = arith.constant 0 : index
    %512 = vector.load %arg16[%c56_120, %c0_121] : memref<64x256xf32, #tpu.memory_space<vmem>>, vector<8x128xf32>
    %513 = vector.extract_strided_slice %511 {offsets = [0, 0], sizes = [8, 128], strides = [1, 1]} : vector<8x256xf32> to vector<8x128xf32>
    %514 = arith.addf %512, %513 : vector<8x128xf32>
    %c0_122 = arith.constant 0 : index
    %c128_123 = arith.constant 128 : index
    %515 = vector.load %arg16[%c0_122, %c128_123] : memref<64x256xf32, #tpu.memory_space<vmem>>, vector<8x128xf32>
    %516 = vector.extract_strided_slice %511 {offsets = [0, 128], sizes = [8, 128], strides = [1, 1]} : vector<8x256xf32> to vector<8x128xf32>
    %517 = arith.addf %515, %516 : vector<8x128xf32>
    %518 = vector.extract_strided_slice %514 {offsets = [0, 0], sizes = [8, 32], strides = [1, 1]} : vector<8x128xf32> to vector<8x32xf32>
    %519 = arith.negf %518 : vector<8x32xf32>
    %520 = math.exp %519 : vector<8x32xf32>
    %cst_124 = arith.constant 1.000000e+00 : f32
    %521 = vector.broadcast %cst_124 : f32 to vector<8x32xf32>
    %522 = arith.addf %521, %520 : vector<8x32xf32>
    %523 = arith.divf %521, %522 : vector<8x32xf32>
    %524 = vector.extract_strided_slice %514 {offsets = [0, 32], sizes = [8, 32], strides = [1, 1]} : vector<8x128xf32> to vector<8x32xf32>
    %525 = arith.negf %524 : vector<8x32xf32>
    %526 = math.exp %525 : vector<8x32xf32>
    %cst_125 = arith.constant 1.000000e+00 : f32
    %527 = vector.broadcast %cst_125 : f32 to vector<8x32xf32>
    %528 = arith.addf %527, %526 : vector<8x32xf32>
    %529 = arith.divf %527, %528 : vector<8x32xf32>
    %530 = vector.extract_strided_slice %514 {offsets = [0, 64], sizes = [8, 32], strides = [1, 1]} : vector<8x128xf32> to vector<8x32xf32>
    %531 = math.tanh %530 : vector<8x32xf32>
    %532 = vector.extract_strided_slice %514 {offsets = [0, 96], sizes = [8, 32], strides = [1, 1]} : vector<8x128xf32> to vector<8x32xf32>
    %533 = arith.negf %532 : vector<8x32xf32>
    %534 = math.exp %533 : vector<8x32xf32>
    %cst_126 = arith.constant 1.000000e+00 : f32
    %535 = vector.broadcast %cst_126 : f32 to vector<8x32xf32>
    %536 = arith.addf %535, %534 : vector<8x32xf32>
    %537 = arith.divf %535, %536 : vector<8x32xf32>
    %538 = arith.mulf %529, %504 : vector<8x32xf32>
    %539 = arith.mulf %523, %531 : vector<8x32xf32>
    %540 = arith.addf %538, %539 : vector<8x32xf32>
    %541 = math.tanh %540 : vector<8x32xf32>
    %542 = arith.mulf %537, %541 : vector<8x32xf32>
    %543 = vector.extract_strided_slice %517 {offsets = [0, 0], sizes = [8, 32], strides = [1, 1]} : vector<8x128xf32> to vector<8x32xf32>
    %544 = arith.negf %543 : vector<8x32xf32>
    %545 = math.exp %544 : vector<8x32xf32>
    %cst_127 = arith.constant 1.000000e+00 : f32
    %546 = vector.broadcast %cst_127 : f32 to vector<8x32xf32>
    %547 = arith.addf %546, %545 : vector<8x32xf32>
    %548 = arith.divf %546, %547 : vector<8x32xf32>
    %549 = vector.extract_strided_slice %517 {offsets = [0, 32], sizes = [8, 32], strides = [1, 1]} : vector<8x128xf32> to vector<8x32xf32>
    %550 = arith.negf %549 : vector<8x32xf32>
    %551 = math.exp %550 : vector<8x32xf32>
    %cst_128 = arith.constant 1.000000e+00 : f32
    %552 = vector.broadcast %cst_128 : f32 to vector<8x32xf32>
    %553 = arith.addf %552, %551 : vector<8x32xf32>
    %554 = arith.divf %552, %553 : vector<8x32xf32>
    %555 = vector.extract_strided_slice %517 {offsets = [0, 64], sizes = [8, 32], strides = [1, 1]} : vector<8x128xf32> to vector<8x32xf32>
    %556 = math.tanh %555 : vector<8x32xf32>
    %557 = vector.extract_strided_slice %517 {offsets = [0, 96], sizes = [8, 32], strides = [1, 1]} : vector<8x128xf32> to vector<8x32xf32>
    %558 = arith.negf %557 : vector<8x32xf32>
    %559 = math.exp %558 : vector<8x32xf32>
    %cst_129 = arith.constant 1.000000e+00 : f32
    %560 = vector.broadcast %cst_129 : f32 to vector<8x32xf32>
    %561 = arith.addf %560, %559 : vector<8x32xf32>
    %562 = arith.divf %560, %561 : vector<8x32xf32>
    %563 = arith.mulf %554, %506 : vector<8x32xf32>
    %564 = arith.mulf %548, %556 : vector<8x32xf32>
    %565 = arith.addf %563, %564 : vector<8x32xf32>
    %566 = math.tanh %565 : vector<8x32xf32>
    %567 = arith.mulf %562, %566 : vector<8x32xf32>
    %568 = arith.select %51, %542, %503 : vector<8x32xi1>, vector<8x32xf32>
    %569 = arith.select %37, %567, %505 : vector<8x32xi1>, vector<8x32xf32>
    %c56_130 = arith.constant 56 : index
    %c0_131 = arith.constant 0 : index
    %570 = vector.load %arg17[%c56_130, %c0_131] : memref<64x32xf32, #tpu.memory_space<vmem>>, vector<8x32xf32>
    tpu.vector_store %arg17[%c56_130, %c0_131], %568 {strides = array<i32>} : memref<64x32xf32, #tpu.memory_space<vmem>>, vector<8x32xf32>,
    %c0_132 = arith.constant 0 : index
    %c0_133 = arith.constant 0 : index
    %571 = vector.load %arg18[%c0_132, %c0_133] : memref<64x32xf32, #tpu.memory_space<vmem>>, vector<8x32xf32>
    tpu.vector_store %arg18[%c0_132, %c0_133], %569 {strides = array<i32>} : memref<64x32xf32, #tpu.memory_space<vmem>>, vector<8x32xf32>,
    %c0_134 = arith.constant 0 : index
    %c0_135 = arith.constant 0 : index
    %572 = vector.load %arg17[%c0_134, %c0_135] : memref<64x32xf32, #tpu.memory_space<vmem>>, vector<64x32xf32>
    %573 = arith.truncf %572 : vector<64x32xf32> to vector<64x32xbf16>
    %c0_136 = arith.constant 0 : index
    %c0_137 = arith.constant 0 : index
    %574 = vector.load %arg8[%c0_136, %c0_137] : memref<32x256xbf16, #tpu.memory_space<vmem>>, vector<32x256xbf16>
    %cst_138 = arith.constant dense<0.000000e+00> : vector<64x256xf32>
    %575 = tpu.matmul %573, %574, %cst_138 {dimension_numbers = #tpu.dot_dimension_numbers<[1], [0], [0], [1], [0, 0, 1, 1], [], []>} : vector<64x32xbf16>, vector<32x256xbf16>, vector<64x256xf32> -> vector<64x256xf32>
    %c0_139 = arith.constant 0 : index
    %c0_140 = arith.constant 0 : index
    %576 = vector.load %arg18[%c0_139, %c0_140] : memref<64x32xf32, #tpu.memory_space<vmem>>, vector<64x32xf32>
    %577 = arith.truncf %576 : vector<64x32xf32> to vector<64x32xbf16>
    %c0_141 = arith.constant 0 : index
    %c0_142 = arith.constant 0 : index
    %578 = vector.load %arg9[%c0_141, %c0_142] : memref<32x256xbf16, #tpu.memory_space<vmem>>, vector<32x256xbf16>
    %cst_143 = arith.constant dense<0.000000e+00> : vector<64x256xf32>
    %579 = tpu.matmul %577, %578, %cst_143 {dimension_numbers = #tpu.dot_dimension_numbers<[1], [0], [0], [1], [0, 0, 1, 1], [], []>} : vector<64x32xbf16>, vector<32x256xbf16>, vector<64x256xf32> -> vector<64x256xf32>
    %580 = arith.addf %575, %579 : vector<64x256xf32>
    %c0_144 = arith.constant 0 : index
    %c0_145 = arith.constant 0 : index
    %581 = vector.load %arg11[%c0_144, %c0_145] : memref<1x256xf32, #tpu.memory_space<vmem>>, vector<1x256xf32>
    %582 = vector.broadcast %581 : vector<1x256xf32> to vector<64x256xf32>
    %583 = arith.addf %580, %582 : vector<64x256xf32>
    %c0_146 = arith.constant 0 : index
    %c0_147 = arith.constant 0 : index
    %584 = vector.load %arg16[%c0_146, %c0_147] : memref<64x256xf32, #tpu.memory_space<vmem>>, vector<64x256xf32>
    tpu.vector_store %arg16[%c0_146, %c0_147], %583 {strides = array<i32>} : memref<64x256xf32, #tpu.memory_space<vmem>>, vector<64x256xf32>,
    %c0_148 = arith.constant 0 : index
    %c0_149 = arith.constant 0 : index
    %585 = vector.load %arg10[%c0_148, %c0_149] : memref<64x256xbf16, #tpu.memory_space<vmem>>, vector<64x256xbf16>
    %586 = tpu.concatenate %52, %52 in 1 : vector<8x32xf32>, vector<8x32xf32> -> vector<8x64xf32>
    %587 = arith.truncf %586 : vector<8x64xf32> to vector<8x64xbf16>
    %cst_150 = arith.constant dense<0.000000e+00> : vector<8x256xf32>
    %588 = tpu.matmul %587, %585, %cst_150 {dimension_numbers = #tpu.dot_dimension_numbers<[1], [0], [0], [1], [0, 0, 1, 1], [], []>} : vector<8x64xbf16>, vector<64x256xbf16>, vector<8x256xf32> -> vector<8x256xf32>
    %c0_151 = arith.constant 0 : index
    %c0_152 = arith.constant 0 : index
    %589 = vector.load %arg16[%c0_151, %c0_152] : memref<64x256xf32, #tpu.memory_space<vmem>>, vector<8x128xf32>
    %590 = vector.extract_strided_slice %588 {offsets = [0, 0], sizes = [8, 128], strides = [1, 1]} : vector<8x256xf32> to vector<8x128xf32>
    %591 = arith.addf %589, %590 : vector<8x128xf32>
    %c56_153 = arith.constant 56 : index
    %c128_154 = arith.constant 128 : index
    %592 = vector.load %arg16[%c56_153, %c128_154] : memref<64x256xf32, #tpu.memory_space<vmem>>, vector<8x128xf32>
    %593 = vector.extract_strided_slice %588 {offsets = [0, 128], sizes = [8, 128], strides = [1, 1]} : vector<8x256xf32> to vector<8x128xf32>
    %594 = arith.addf %592, %593 : vector<8x128xf32>
    %595 = vector.extract_strided_slice %591 {offsets = [0, 0], sizes = [8, 32], strides = [1, 1]} : vector<8x128xf32> to vector<8x32xf32>
    %596 = arith.negf %595 : vector<8x32xf32>
    %597 = math.exp %596 : vector<8x32xf32>
    %cst_155 = arith.constant 1.000000e+00 : f32
    %598 = vector.broadcast %cst_155 : f32 to vector<8x32xf32>
    %599 = arith.addf %598, %597 : vector<8x32xf32>
    %600 = arith.divf %598, %599 : vector<8x32xf32>
    %601 = vector.extract_strided_slice %591 {offsets = [0, 32], sizes = [8, 32], strides = [1, 1]} : vector<8x128xf32> to vector<8x32xf32>
    %602 = arith.negf %601 : vector<8x32xf32>
    %603 = math.exp %602 : vector<8x32xf32>
    %cst_156 = arith.constant 1.000000e+00 : f32
    %604 = vector.broadcast %cst_156 : f32 to vector<8x32xf32>
    %605 = arith.addf %604, %603 : vector<8x32xf32>
    %606 = arith.divf %604, %605 : vector<8x32xf32>
    %607 = vector.extract_strided_slice %591 {offsets = [0, 64], sizes = [8, 32], strides = [1, 1]} : vector<8x128xf32> to vector<8x32xf32>
    %608 = math.tanh %607 : vector<8x32xf32>
    %609 = vector.extract_strided_slice %591 {offsets = [0, 96], sizes = [8, 32], strides = [1, 1]} : vector<8x128xf32> to vector<8x32xf32>
    %610 = arith.negf %609 : vector<8x32xf32>
    %611 = math.exp %610 : vector<8x32xf32>
    %cst_157 = arith.constant 1.000000e+00 : f32
    %612 = vector.broadcast %cst_157 : f32 to vector<8x32xf32>
    %613 = arith.addf %612, %611 : vector<8x32xf32>
    %614 = arith.divf %612, %613 : vector<8x32xf32>
    %615 = arith.mulf %606, %52 : vector<8x32xf32>
    %616 = arith.mulf %600, %608 : vector<8x32xf32>
    %617 = arith.addf %615, %616 : vector<8x32xf32>
    %618 = math.tanh %617 : vector<8x32xf32>
    %619 = arith.mulf %614, %618 : vector<8x32xf32>
    %620 = vector.extract_strided_slice %594 {offsets = [0, 0], sizes = [8, 32], strides = [1, 1]} : vector<8x128xf32> to vector<8x32xf32>
    %621 = arith.negf %620 : vector<8x32xf32>
    %622 = math.exp %621 : vector<8x32xf32>
    %cst_158 = arith.constant 1.000000e+00 : f32
    %623 = vector.broadcast %cst_158 : f32 to vector<8x32xf32>
    %624 = arith.addf %623, %622 : vector<8x32xf32>
    %625 = arith.divf %623, %624 : vector<8x32xf32>
    %626 = vector.extract_strided_slice %594 {offsets = [0, 32], sizes = [8, 32], strides = [1, 1]} : vector<8x128xf32> to vector<8x32xf32>
    %627 = arith.negf %626 : vector<8x32xf32>
    %628 = math.exp %627 : vector<8x32xf32>
    %cst_159 = arith.constant 1.000000e+00 : f32
    %629 = vector.broadcast %cst_159 : f32 to vector<8x32xf32>
    %630 = arith.addf %629, %628 : vector<8x32xf32>
    %631 = arith.divf %629, %630 : vector<8x32xf32>
    %632 = vector.extract_strided_slice %594 {offsets = [0, 64], sizes = [8, 32], strides = [1, 1]} : vector<8x128xf32> to vector<8x32xf32>
    %633 = math.tanh %632 : vector<8x32xf32>
    %634 = vector.extract_strided_slice %594 {offsets = [0, 96], sizes = [8, 32], strides = [1, 1]} : vector<8x128xf32> to vector<8x32xf32>
    %635 = arith.negf %634 : vector<8x32xf32>
    %636 = math.exp %635 : vector<8x32xf32>
    %cst_160 = arith.constant 1.000000e+00 : f32
    %637 = vector.broadcast %cst_160 : f32 to vector<8x32xf32>
    %638 = arith.addf %637, %636 : vector<8x32xf32>
    %639 = arith.divf %637, %638 : vector<8x32xf32>
    %640 = arith.mulf %631, %52 : vector<8x32xf32>
    %641 = arith.mulf %625, %633 : vector<8x32xf32>
    %642 = arith.addf %640, %641 : vector<8x32xf32>
    %643 = math.tanh %642 : vector<8x32xf32>
    %644 = arith.mulf %639, %643 : vector<8x32xf32>
    %645 = arith.select %37, %619, %52 : vector<8x32xi1>, vector<8x32xf32>
    %646 = arith.select %37, %617, %52 : vector<8x32xi1>, vector<8x32xf32>
    %647 = arith.select %51, %644, %52 : vector<8x32xi1>, vector<8x32xf32>
    %648 = arith.select %51, %642, %52 : vector<8x32xi1>, vector<8x32xf32>
    %649 = tpu.concatenate %645, %647 in 1 : vector<8x32xf32>, vector<8x32xf32> -> vector<8x64xf32>
    %650 = arith.truncf %649 : vector<8x64xf32> to vector<8x64xbf16>
    %cst_161 = arith.constant dense<0.000000e+00> : vector<8x256xf32>
    %651 = tpu.matmul %650, %585, %cst_161 {dimension_numbers = #tpu.dot_dimension_numbers<[1], [0], [0], [1], [0, 0, 1, 1], [], []>} : vector<8x64xbf16>, vector<64x256xbf16>, vector<8x256xf32> -> vector<8x256xf32>
    %c8_162 = arith.constant 8 : index
    %c0_163 = arith.constant 0 : index
    %652 = vector.load %arg16[%c8_162, %c0_163] : memref<64x256xf32, #tpu.memory_space<vmem>>, vector<8x128xf32>
    %653 = vector.extract_strided_slice %651 {offsets = [0, 0], sizes = [8, 128], strides = [1, 1]} : vector<8x256xf32> to vector<8x128xf32>
    %654 = arith.addf %652, %653 : vector<8x128xf32>
    %c48_164 = arith.constant 48 : index
    %c128_165 = arith.constant 128 : index
    %655 = vector.load %arg16[%c48_164, %c128_165] : memref<64x256xf32, #tpu.memory_space<vmem>>, vector<8x128xf32>
    %656 = vector.extract_strided_slice %651 {offsets = [0, 128], sizes = [8, 128], strides = [1, 1]} : vector<8x256xf32> to vector<8x128xf32>
    %657 = arith.addf %655, %656 : vector<8x128xf32>
    %658 = vector.extract_strided_slice %654 {offsets = [0, 0], sizes = [8, 32], strides = [1, 1]} : vector<8x128xf32> to vector<8x32xf32>
    %659 = arith.negf %658 : vector<8x32xf32>
    %660 = math.exp %659 : vector<8x32xf32>
    %cst_166 = arith.constant 1.000000e+00 : f32
    %661 = vector.broadcast %cst_166 : f32 to vector<8x32xf32>
    %662 = arith.addf %661, %660 : vector<8x32xf32>
    %663 = arith.divf %661, %662 : vector<8x32xf32>
    %664 = vector.extract_strided_slice %654 {offsets = [0, 32], sizes = [8, 32], strides = [1, 1]} : vector<8x128xf32> to vector<8x32xf32>
    %665 = arith.negf %664 : vector<8x32xf32>
    %666 = math.exp %665 : vector<8x32xf32>
    %cst_167 = arith.constant 1.000000e+00 : f32
    %667 = vector.broadcast %cst_167 : f32 to vector<8x32xf32>
    %668 = arith.addf %667, %666 : vector<8x32xf32>
    %669 = arith.divf %667, %668 : vector<8x32xf32>
    %670 = vector.extract_strided_slice %654 {offsets = [0, 64], sizes = [8, 32], strides = [1, 1]} : vector<8x128xf32> to vector<8x32xf32>
    %671 = math.tanh %670 : vector<8x32xf32>
    %672 = vector.extract_strided_slice %654 {offsets = [0, 96], sizes = [8, 32], strides = [1, 1]} : vector<8x128xf32> to vector<8x32xf32>
    %673 = arith.negf %672 : vector<8x32xf32>
    %674 = math.exp %673 : vector<8x32xf32>
    %cst_168 = arith.constant 1.000000e+00 : f32
    %675 = vector.broadcast %cst_168 : f32 to vector<8x32xf32>
    %676 = arith.addf %675, %674 : vector<8x32xf32>
    %677 = arith.divf %675, %676 : vector<8x32xf32>
    %678 = arith.mulf %669, %646 : vector<8x32xf32>
    %679 = arith.mulf %663, %671 : vector<8x32xf32>
    %680 = arith.addf %678, %679 : vector<8x32xf32>
    %681 = math.tanh %680 : vector<8x32xf32>
    %682 = arith.mulf %677, %681 : vector<8x32xf32>
    %683 = vector.extract_strided_slice %657 {offsets = [0, 0], sizes = [8, 32], strides = [1, 1]} : vector<8x128xf32> to vector<8x32xf32>
    %684 = arith.negf %683 : vector<8x32xf32>
    %685 = math.exp %684 : vector<8x32xf32>
    %cst_169 = arith.constant 1.000000e+00 : f32
    %686 = vector.broadcast %cst_169 : f32 to vector<8x32xf32>
    %687 = arith.addf %686, %685 : vector<8x32xf32>
    %688 = arith.divf %686, %687 : vector<8x32xf32>
    %689 = vector.extract_strided_slice %657 {offsets = [0, 32], sizes = [8, 32], strides = [1, 1]} : vector<8x128xf32> to vector<8x32xf32>
    %690 = arith.negf %689 : vector<8x32xf32>
    %691 = math.exp %690 : vector<8x32xf32>
    %cst_170 = arith.constant 1.000000e+00 : f32
    %692 = vector.broadcast %cst_170 : f32 to vector<8x32xf32>
    %693 = arith.addf %692, %691 : vector<8x32xf32>
    %694 = arith.divf %692, %693 : vector<8x32xf32>
    %695 = vector.extract_strided_slice %657 {offsets = [0, 64], sizes = [8, 32], strides = [1, 1]} : vector<8x128xf32> to vector<8x32xf32>
    %696 = math.tanh %695 : vector<8x32xf32>
    %697 = vector.extract_strided_slice %657 {offsets = [0, 96], sizes = [8, 32], strides = [1, 1]} : vector<8x128xf32> to vector<8x32xf32>
    %698 = arith.negf %697 : vector<8x32xf32>
    %699 = math.exp %698 : vector<8x32xf32>
    %cst_171 = arith.constant 1.000000e+00 : f32
    %700 = vector.broadcast %cst_171 : f32 to vector<8x32xf32>
    %701 = arith.addf %700, %699 : vector<8x32xf32>
    %702 = arith.divf %700, %701 : vector<8x32xf32>
    %703 = arith.mulf %694, %648 : vector<8x32xf32>
    %704 = arith.mulf %688, %696 : vector<8x32xf32>
    %705 = arith.addf %703, %704 : vector<8x32xf32>
    %706 = math.tanh %705 : vector<8x32xf32>
    %707 = arith.mulf %702, %706 : vector<8x32xf32>
    %708 = arith.select %39, %682, %645 : vector<8x32xi1>, vector<8x32xf32>
    %709 = arith.select %39, %680, %646 : vector<8x32xi1>, vector<8x32xf32>
    %710 = arith.select %49, %707, %647 : vector<8x32xi1>, vector<8x32xf32>
    %711 = arith.select %49, %705, %648 : vector<8x32xi1>, vector<8x32xf32>
    %712 = tpu.concatenate %708, %710 in 1 : vector<8x32xf32>, vector<8x32xf32> -> vector<8x64xf32>
    %713 = arith.truncf %712 : vector<8x64xf32> to vector<8x64xbf16>
    %cst_172 = arith.constant dense<0.000000e+00> : vector<8x256xf32>
    %714 = tpu.matmul %713, %585, %cst_172 {dimension_numbers = #tpu.dot_dimension_numbers<[1], [0], [0], [1], [0, 0, 1, 1], [], []>} : vector<8x64xbf16>, vector<64x256xbf16>, vector<8x256xf32> -> vector<8x256xf32>
    %c16_173 = arith.constant 16 : index
    %c0_174 = arith.constant 0 : index
    %715 = vector.load %arg16[%c16_173, %c0_174] : memref<64x256xf32, #tpu.memory_space<vmem>>, vector<8x128xf32>
    %716 = vector.extract_strided_slice %714 {offsets = [0, 0], sizes = [8, 128], strides = [1, 1]} : vector<8x256xf32> to vector<8x128xf32>
    %717 = arith.addf %715, %716 : vector<8x128xf32>
    %c40_175 = arith.constant 40 : index
    %c128_176 = arith.constant 128 : index
    %718 = vector.load %arg16[%c40_175, %c128_176] : memref<64x256xf32, #tpu.memory_space<vmem>>, vector<8x128xf32>
    %719 = vector.extract_strided_slice %714 {offsets = [0, 128], sizes = [8, 128], strides = [1, 1]} : vector<8x256xf32> to vector<8x128xf32>
    %720 = arith.addf %718, %719 : vector<8x128xf32>
    %721 = vector.extract_strided_slice %717 {offsets = [0, 0], sizes = [8, 32], strides = [1, 1]} : vector<8x128xf32> to vector<8x32xf32>
    %722 = arith.negf %721 : vector<8x32xf32>
    %723 = math.exp %722 : vector<8x32xf32>
    %cst_177 = arith.constant 1.000000e+00 : f32
    %724 = vector.broadcast %cst_177 : f32 to vector<8x32xf32>
    %725 = arith.addf %724, %723 : vector<8x32xf32>
    %726 = arith.divf %724, %725 : vector<8x32xf32>
    %727 = vector.extract_strided_slice %717 {offsets = [0, 32], sizes = [8, 32], strides = [1, 1]} : vector<8x128xf32> to vector<8x32xf32>
    %728 = arith.negf %727 : vector<8x32xf32>
    %729 = math.exp %728 : vector<8x32xf32>
    %cst_178 = arith.constant 1.000000e+00 : f32
    %730 = vector.broadcast %cst_178 : f32 to vector<8x32xf32>
    %731 = arith.addf %730, %729 : vector<8x32xf32>
    %732 = arith.divf %730, %731 : vector<8x32xf32>
    %733 = vector.extract_strided_slice %717 {offsets = [0, 64], sizes = [8, 32], strides = [1, 1]} : vector<8x128xf32> to vector<8x32xf32>
    %734 = math.tanh %733 : vector<8x32xf32>
    %735 = vector.extract_strided_slice %717 {offsets = [0, 96], sizes = [8, 32], strides = [1, 1]} : vector<8x128xf32> to vector<8x32xf32>
    %736 = arith.negf %735 : vector<8x32xf32>
    %737 = math.exp %736 : vector<8x32xf32>
    %cst_179 = arith.constant 1.000000e+00 : f32
    %738 = vector.broadcast %cst_179 : f32 to vector<8x32xf32>
    %739 = arith.addf %738, %737 : vector<8x32xf32>
    %740 = arith.divf %738, %739 : vector<8x32xf32>
    %741 = arith.mulf %732, %709 : vector<8x32xf32>
    %742 = arith.mulf %726, %734 : vector<8x32xf32>
    %743 = arith.addf %741, %742 : vector<8x32xf32>
    %744 = math.tanh %743 : vector<8x32xf32>
    %745 = arith.mulf %740, %744 : vector<8x32xf32>
    %746 = vector.extract_strided_slice %720 {offsets = [0, 0], sizes = [8, 32], strides = [1, 1]} : vector<8x128xf32> to vector<8x32xf32>
    %747 = arith.negf %746 : vector<8x32xf32>
    %748 = math.exp %747 : vector<8x32xf32>
    %cst_180 = arith.constant 1.000000e+00 : f32
    %749 = vector.broadcast %cst_180 : f32 to vector<8x32xf32>
    %750 = arith.addf %749, %748 : vector<8x32xf32>
    %751 = arith.divf %749, %750 : vector<8x32xf32>
    %752 = vector.extract_strided_slice %720 {offsets = [0, 32], sizes = [8, 32], strides = [1, 1]} : vector<8x128xf32> to vector<8x32xf32>
    %753 = arith.negf %752 : vector<8x32xf32>
    %754 = math.exp %753 : vector<8x32xf32>
    %cst_181 = arith.constant 1.000000e+00 : f32
    %755 = vector.broadcast %cst_181 : f32 to vector<8x32xf32>
    %756 = arith.addf %755, %754 : vector<8x32xf32>
    %757 = arith.divf %755, %756 : vector<8x32xf32>
    %758 = vector.extract_strided_slice %720 {offsets = [0, 64], sizes = [8, 32], strides = [1, 1]} : vector<8x128xf32> to vector<8x32xf32>
    %759 = math.tanh %758 : vector<8x32xf32>
    %760 = vector.extract_strided_slice %720 {offsets = [0, 96], sizes = [8, 32], strides = [1, 1]} : vector<8x128xf32> to vector<8x32xf32>
    %761 = arith.negf %760 : vector<8x32xf32>
    %762 = math.exp %761 : vector<8x32xf32>
    %cst_182 = arith.constant 1.000000e+00 : f32
    %763 = vector.broadcast %cst_182 : f32 to vector<8x32xf32>
    %764 = arith.addf %763, %762 : vector<8x32xf32>
    %765 = arith.divf %763, %764 : vector<8x32xf32>
    %766 = arith.mulf %757, %711 : vector<8x32xf32>
    %767 = arith.mulf %751, %759 : vector<8x32xf32>
    %768 = arith.addf %766, %767 : vector<8x32xf32>
    %769 = math.tanh %768 : vector<8x32xf32>
    %770 = arith.mulf %765, %769 : vector<8x32xf32>
    %771 = arith.select %41, %745, %708 : vector<8x32xi1>, vector<8x32xf32>
    %772 = arith.select %41, %743, %709 : vector<8x32xi1>, vector<8x32xf32>
    %773 = arith.select %47, %770, %710 : vector<8x32xi1>, vector<8x32xf32>
    %774 = arith.select %47, %768, %711 : vector<8x32xi1>, vector<8x32xf32>
    %775 = tpu.concatenate %771, %773 in 1 : vector<8x32xf32>, vector<8x32xf32> -> vector<8x64xf32>
    %776 = arith.truncf %775 : vector<8x64xf32> to vector<8x64xbf16>
    %cst_183 = arith.constant dense<0.000000e+00> : vector<8x256xf32>
    %777 = tpu.matmul %776, %585, %cst_183 {dimension_numbers = #tpu.dot_dimension_numbers<[1], [0], [0], [1], [0, 0, 1, 1], [], []>} : vector<8x64xbf16>, vector<64x256xbf16>, vector<8x256xf32> -> vector<8x256xf32>
    %c24_184 = arith.constant 24 : index
    %c0_185 = arith.constant 0 : index
    %778 = vector.load %arg16[%c24_184, %c0_185] : memref<64x256xf32, #tpu.memory_space<vmem>>, vector<8x128xf32>
    %779 = vector.extract_strided_slice %777 {offsets = [0, 0], sizes = [8, 128], strides = [1, 1]} : vector<8x256xf32> to vector<8x128xf32>
    %780 = arith.addf %778, %779 : vector<8x128xf32>
    %c32_186 = arith.constant 32 : index
    %c128_187 = arith.constant 128 : index
    %781 = vector.load %arg16[%c32_186, %c128_187] : memref<64x256xf32, #tpu.memory_space<vmem>>, vector<8x128xf32>
    %782 = vector.extract_strided_slice %777 {offsets = [0, 128], sizes = [8, 128], strides = [1, 1]} : vector<8x256xf32> to vector<8x128xf32>
    %783 = arith.addf %781, %782 : vector<8x128xf32>
    %784 = vector.extract_strided_slice %780 {offsets = [0, 0], sizes = [8, 32], strides = [1, 1]} : vector<8x128xf32> to vector<8x32xf32>
    %785 = arith.negf %784 : vector<8x32xf32>
    %786 = math.exp %785 : vector<8x32xf32>
    %cst_188 = arith.constant 1.000000e+00 : f32
    %787 = vector.broadcast %cst_188 : f32 to vector<8x32xf32>
    %788 = arith.addf %787, %786 : vector<8x32xf32>
    %789 = arith.divf %787, %788 : vector<8x32xf32>
    %790 = vector.extract_strided_slice %780 {offsets = [0, 32], sizes = [8, 32], strides = [1, 1]} : vector<8x128xf32> to vector<8x32xf32>
    %791 = arith.negf %790 : vector<8x32xf32>
    %792 = math.exp %791 : vector<8x32xf32>
    %cst_189 = arith.constant 1.000000e+00 : f32
    %793 = vector.broadcast %cst_189 : f32 to vector<8x32xf32>
    %794 = arith.addf %793, %792 : vector<8x32xf32>
    %795 = arith.divf %793, %794 : vector<8x32xf32>
    %796 = vector.extract_strided_slice %780 {offsets = [0, 64], sizes = [8, 32], strides = [1, 1]} : vector<8x128xf32> to vector<8x32xf32>
    %797 = math.tanh %796 : vector<8x32xf32>
    %798 = vector.extract_strided_slice %780 {offsets = [0, 96], sizes = [8, 32], strides = [1, 1]} : vector<8x128xf32> to vector<8x32xf32>
    %799 = arith.negf %798 : vector<8x32xf32>
    %800 = math.exp %799 : vector<8x32xf32>
    %cst_190 = arith.constant 1.000000e+00 : f32
    %801 = vector.broadcast %cst_190 : f32 to vector<8x32xf32>
    %802 = arith.addf %801, %800 : vector<8x32xf32>
    %803 = arith.divf %801, %802 : vector<8x32xf32>
    %804 = arith.mulf %795, %772 : vector<8x32xf32>
    %805 = arith.mulf %789, %797 : vector<8x32xf32>
    %806 = arith.addf %804, %805 : vector<8x32xf32>
    %807 = math.tanh %806 : vector<8x32xf32>
    %808 = arith.mulf %803, %807 : vector<8x32xf32>
    %809 = vector.extract_strided_slice %783 {offsets = [0, 0], sizes = [8, 32], strides = [1, 1]} : vector<8x128xf32> to vector<8x32xf32>
    %810 = arith.negf %809 : vector<8x32xf32>
    %811 = math.exp %810 : vector<8x32xf32>
    %cst_191 = arith.constant 1.000000e+00 : f32
    %812 = vector.broadcast %cst_191 : f32 to vector<8x32xf32>
    %813 = arith.addf %812, %811 : vector<8x32xf32>
    %814 = arith.divf %812, %813 : vector<8x32xf32>
    %815 = vector.extract_strided_slice %783 {offsets = [0, 32], sizes = [8, 32], strides = [1, 1]} : vector<8x128xf32> to vector<8x32xf32>
    %816 = arith.negf %815 : vector<8x32xf32>
    %817 = math.exp %816 : vector<8x32xf32>
    %cst_192 = arith.constant 1.000000e+00 : f32
    %818 = vector.broadcast %cst_192 : f32 to vector<8x32xf32>
    %819 = arith.addf %818, %817 : vector<8x32xf32>
    %820 = arith.divf %818, %819 : vector<8x32xf32>
    %821 = vector.extract_strided_slice %783 {offsets = [0, 64], sizes = [8, 32], strides = [1, 1]} : vector<8x128xf32> to vector<8x32xf32>
    %822 = math.tanh %821 : vector<8x32xf32>
    %823 = vector.extract_strided_slice %783 {offsets = [0, 96], sizes = [8, 32], strides = [1, 1]} : vector<8x128xf32> to vector<8x32xf32>
    %824 = arith.negf %823 : vector<8x32xf32>
    %825 = math.exp %824 : vector<8x32xf32>
    %cst_193 = arith.constant 1.000000e+00 : f32
    %826 = vector.broadcast %cst_193 : f32 to vector<8x32xf32>
    %827 = arith.addf %826, %825 : vector<8x32xf32>
    %828 = arith.divf %826, %827 : vector<8x32xf32>
    %829 = arith.mulf %820, %774 : vector<8x32xf32>
    %830 = arith.mulf %814, %822 : vector<8x32xf32>
    %831 = arith.addf %829, %830 : vector<8x32xf32>
    %832 = math.tanh %831 : vector<8x32xf32>
    %833 = arith.mulf %828, %832 : vector<8x32xf32>
    %834 = arith.select %43, %808, %771 : vector<8x32xi1>, vector<8x32xf32>
    %835 = arith.select %43, %806, %772 : vector<8x32xi1>, vector<8x32xf32>
    %836 = arith.select %45, %833, %773 : vector<8x32xi1>, vector<8x32xf32>
    %837 = arith.select %45, %831, %774 : vector<8x32xi1>, vector<8x32xf32>
    %838 = tpu.concatenate %834, %836 in 1 : vector<8x32xf32>, vector<8x32xf32> -> vector<8x64xf32>
    %839 = arith.truncf %838 : vector<8x64xf32> to vector<8x64xbf16>
    %cst_194 = arith.constant dense<0.000000e+00> : vector<8x256xf32>
    %840 = tpu.matmul %839, %585, %cst_194 {dimension_numbers = #tpu.dot_dimension_numbers<[1], [0], [0], [1], [0, 0, 1, 1], [], []>} : vector<8x64xbf16>, vector<64x256xbf16>, vector<8x256xf32> -> vector<8x256xf32>
    %c32_195 = arith.constant 32 : index
    %c0_196 = arith.constant 0 : index
    %841 = vector.load %arg16[%c32_195, %c0_196] : memref<64x256xf32, #tpu.memory_space<vmem>>, vector<8x128xf32>
    %842 = vector.extract_strided_slice %840 {offsets = [0, 0], sizes = [8, 128], strides = [1, 1]} : vector<8x256xf32> to vector<8x128xf32>
    %843 = arith.addf %841, %842 : vector<8x128xf32>
    %c24_197 = arith.constant 24 : index
    %c128_198 = arith.constant 128 : index
    %844 = vector.load %arg16[%c24_197, %c128_198] : memref<64x256xf32, #tpu.memory_space<vmem>>, vector<8x128xf32>
    %845 = vector.extract_strided_slice %840 {offsets = [0, 128], sizes = [8, 128], strides = [1, 1]} : vector<8x256xf32> to vector<8x128xf32>
    %846 = arith.addf %844, %845 : vector<8x128xf32>
    %847 = vector.extract_strided_slice %843 {offsets = [0, 0], sizes = [8, 32], strides = [1, 1]} : vector<8x128xf32> to vector<8x32xf32>
    %848 = arith.negf %847 : vector<8x32xf32>
    %849 = math.exp %848 : vector<8x32xf32>
    %cst_199 = arith.constant 1.000000e+00 : f32
    %850 = vector.broadcast %cst_199 : f32 to vector<8x32xf32>
    %851 = arith.addf %850, %849 : vector<8x32xf32>
    %852 = arith.divf %850, %851 : vector<8x32xf32>
    %853 = vector.extract_strided_slice %843 {offsets = [0, 32], sizes = [8, 32], strides = [1, 1]} : vector<8x128xf32> to vector<8x32xf32>
    %854 = arith.negf %853 : vector<8x32xf32>
    %855 = math.exp %854 : vector<8x32xf32>
    %cst_200 = arith.constant 1.000000e+00 : f32
    %856 = vector.broadcast %cst_200 : f32 to vector<8x32xf32>
    %857 = arith.addf %856, %855 : vector<8x32xf32>
    %858 = arith.divf %856, %857 : vector<8x32xf32>
    %859 = vector.extract_strided_slice %843 {offsets = [0, 64], sizes = [8, 32], strides = [1, 1]} : vector<8x128xf32> to vector<8x32xf32>
    %860 = math.tanh %859 : vector<8x32xf32>
    %861 = vector.extract_strided_slice %843 {offsets = [0, 96], sizes = [8, 32], strides = [1, 1]} : vector<8x128xf32> to vector<8x32xf32>
    %862 = arith.negf %861 : vector<8x32xf32>
    %863 = math.exp %862 : vector<8x32xf32>
    %cst_201 = arith.constant 1.000000e+00 : f32
    %864 = vector.broadcast %cst_201 : f32 to vector<8x32xf32>
    %865 = arith.addf %864, %863 : vector<8x32xf32>
    %866 = arith.divf %864, %865 : vector<8x32xf32>
    %867 = arith.mulf %858, %835 : vector<8x32xf32>
    %868 = arith.mulf %852, %860 : vector<8x32xf32>
    %869 = arith.addf %867, %868 : vector<8x32xf32>
    %870 = math.tanh %869 : vector<8x32xf32>
    %871 = arith.mulf %866, %870 : vector<8x32xf32>
    %872 = vector.extract_strided_slice %846 {offsets = [0, 0], sizes = [8, 32], strides = [1, 1]} : vector<8x128xf32> to vector<8x32xf32>
    %873 = arith.negf %872 : vector<8x32xf32>
    %874 = math.exp %873 : vector<8x32xf32>
    %cst_202 = arith.constant 1.000000e+00 : f32
    %875 = vector.broadcast %cst_202 : f32 to vector<8x32xf32>
    %876 = arith.addf %875, %874 : vector<8x32xf32>
    %877 = arith.divf %875, %876 : vector<8x32xf32>
    %878 = vector.extract_strided_slice %846 {offsets = [0, 32], sizes = [8, 32], strides = [1, 1]} : vector<8x128xf32> to vector<8x32xf32>
    %879 = arith.negf %878 : vector<8x32xf32>
    %880 = math.exp %879 : vector<8x32xf32>
    %cst_203 = arith.constant 1.000000e+00 : f32
    %881 = vector.broadcast %cst_203 : f32 to vector<8x32xf32>
    %882 = arith.addf %881, %880 : vector<8x32xf32>
    %883 = arith.divf %881, %882 : vector<8x32xf32>
    %884 = vector.extract_strided_slice %846 {offsets = [0, 64], sizes = [8, 32], strides = [1, 1]} : vector<8x128xf32> to vector<8x32xf32>
    %885 = math.tanh %884 : vector<8x32xf32>
    %886 = vector.extract_strided_slice %846 {offsets = [0, 96], sizes = [8, 32], strides = [1, 1]} : vector<8x128xf32> to vector<8x32xf32>
    %887 = arith.negf %886 : vector<8x32xf32>
    %888 = math.exp %887 : vector<8x32xf32>
    %cst_204 = arith.constant 1.000000e+00 : f32
    %889 = vector.broadcast %cst_204 : f32 to vector<8x32xf32>
    %890 = arith.addf %889, %888 : vector<8x32xf32>
    %891 = arith.divf %889, %890 : vector<8x32xf32>
    %892 = arith.mulf %883, %837 : vector<8x32xf32>
    %893 = arith.mulf %877, %885 : vector<8x32xf32>
    %894 = arith.addf %892, %893 : vector<8x32xf32>
    %895 = math.tanh %894 : vector<8x32xf32>
    %896 = arith.mulf %891, %895 : vector<8x32xf32>
    %897 = arith.select %45, %871, %834 : vector<8x32xi1>, vector<8x32xf32>
    %898 = arith.select %45, %869, %835 : vector<8x32xi1>, vector<8x32xf32>
    %899 = arith.select %43, %896, %836 : vector<8x32xi1>, vector<8x32xf32>
    %900 = arith.select %43, %894, %837 : vector<8x32xi1>, vector<8x32xf32>
    %901 = tpu.concatenate %897, %899 in 1 : vector<8x32xf32>, vector<8x32xf32> -> vector<8x64xf32>
    %902 = arith.truncf %901 : vector<8x64xf32> to vector<8x64xbf16>
    %cst_205 = arith.constant dense<0.000000e+00> : vector<8x256xf32>
    %903 = tpu.matmul %902, %585, %cst_205 {dimension_numbers = #tpu.dot_dimension_numbers<[1], [0], [0], [1], [0, 0, 1, 1], [], []>} : vector<8x64xbf16>, vector<64x256xbf16>, vector<8x256xf32> -> vector<8x256xf32>
    %c40_206 = arith.constant 40 : index
    %c0_207 = arith.constant 0 : index
    %904 = vector.load %arg16[%c40_206, %c0_207] : memref<64x256xf32, #tpu.memory_space<vmem>>, vector<8x128xf32>
    %905 = vector.extract_strided_slice %903 {offsets = [0, 0], sizes = [8, 128], strides = [1, 1]} : vector<8x256xf32> to vector<8x128xf32>
    %906 = arith.addf %904, %905 : vector<8x128xf32>
    %c16_208 = arith.constant 16 : index
    %c128_209 = arith.constant 128 : index
    %907 = vector.load %arg16[%c16_208, %c128_209] : memref<64x256xf32, #tpu.memory_space<vmem>>, vector<8x128xf32>
    %908 = vector.extract_strided_slice %903 {offsets = [0, 128], sizes = [8, 128], strides = [1, 1]} : vector<8x256xf32> to vector<8x128xf32>
    %909 = arith.addf %907, %908 : vector<8x128xf32>
    %910 = vector.extract_strided_slice %906 {offsets = [0, 0], sizes = [8, 32], strides = [1, 1]} : vector<8x128xf32> to vector<8x32xf32>
    %911 = arith.negf %910 : vector<8x32xf32>
    %912 = math.exp %911 : vector<8x32xf32>
    %cst_210 = arith.constant 1.000000e+00 : f32
    %913 = vector.broadcast %cst_210 : f32 to vector<8x32xf32>
    %914 = arith.addf %913, %912 : vector<8x32xf32>
    %915 = arith.divf %913, %914 : vector<8x32xf32>
    %916 = vector.extract_strided_slice %906 {offsets = [0, 32], sizes = [8, 32], strides = [1, 1]} : vector<8x128xf32> to vector<8x32xf32>
    %917 = arith.negf %916 : vector<8x32xf32>
    %918 = math.exp %917 : vector<8x32xf32>
    %cst_211 = arith.constant 1.000000e+00 : f32
    %919 = vector.broadcast %cst_211 : f32 to vector<8x32xf32>
    %920 = arith.addf %919, %918 : vector<8x32xf32>
    %921 = arith.divf %919, %920 : vector<8x32xf32>
    %922 = vector.extract_strided_slice %906 {offsets = [0, 64], sizes = [8, 32], strides = [1, 1]} : vector<8x128xf32> to vector<8x32xf32>
    %923 = math.tanh %922 : vector<8x32xf32>
    %924 = vector.extract_strided_slice %906 {offsets = [0, 96], sizes = [8, 32], strides = [1, 1]} : vector<8x128xf32> to vector<8x32xf32>
    %925 = arith.negf %924 : vector<8x32xf32>
    %926 = math.exp %925 : vector<8x32xf32>
    %cst_212 = arith.constant 1.000000e+00 : f32
    %927 = vector.broadcast %cst_212 : f32 to vector<8x32xf32>
    %928 = arith.addf %927, %926 : vector<8x32xf32>
    %929 = arith.divf %927, %928 : vector<8x32xf32>
    %930 = arith.mulf %921, %898 : vector<8x32xf32>
    %931 = arith.mulf %915, %923 : vector<8x32xf32>
    %932 = arith.addf %930, %931 : vector<8x32xf32>
    %933 = math.tanh %932 : vector<8x32xf32>
    %934 = arith.mulf %929, %933 : vector<8x32xf32>
    %935 = vector.extract_strided_slice %909 {offsets = [0, 0], sizes = [8, 32], strides = [1, 1]} : vector<8x128xf32> to vector<8x32xf32>
    %936 = arith.negf %935 : vector<8x32xf32>
    %937 = math.exp %936 : vector<8x32xf32>
    %cst_213 = arith.constant 1.000000e+00 : f32
    %938 = vector.broadcast %cst_213 : f32 to vector<8x32xf32>
    %939 = arith.addf %938, %937 : vector<8x32xf32>
    %940 = arith.divf %938, %939 : vector<8x32xf32>
    %941 = vector.extract_strided_slice %909 {offsets = [0, 32], sizes = [8, 32], strides = [1, 1]} : vector<8x128xf32> to vector<8x32xf32>
    %942 = arith.negf %941 : vector<8x32xf32>
    %943 = math.exp %942 : vector<8x32xf32>
    %cst_214 = arith.constant 1.000000e+00 : f32
    %944 = vector.broadcast %cst_214 : f32 to vector<8x32xf32>
    %945 = arith.addf %944, %943 : vector<8x32xf32>
    %946 = arith.divf %944, %945 : vector<8x32xf32>
    %947 = vector.extract_strided_slice %909 {offsets = [0, 64], sizes = [8, 32], strides = [1, 1]} : vector<8x128xf32> to vector<8x32xf32>
    %948 = math.tanh %947 : vector<8x32xf32>
    %949 = vector.extract_strided_slice %909 {offsets = [0, 96], sizes = [8, 32], strides = [1, 1]} : vector<8x128xf32> to vector<8x32xf32>
    %950 = arith.negf %949 : vector<8x32xf32>
    %951 = math.exp %950 : vector<8x32xf32>
    %cst_215 = arith.constant 1.000000e+00 : f32
    %952 = vector.broadcast %cst_215 : f32 to vector<8x32xf32>
    %953 = arith.addf %952, %951 : vector<8x32xf32>
    %954 = arith.divf %952, %953 : vector<8x32xf32>
    %955 = arith.mulf %946, %900 : vector<8x32xf32>
    %956 = arith.mulf %940, %948 : vector<8x32xf32>
    %957 = arith.addf %955, %956 : vector<8x32xf32>
    %958 = math.tanh %957 : vector<8x32xf32>
    %959 = arith.mulf %954, %958 : vector<8x32xf32>
    %960 = arith.select %47, %934, %897 : vector<8x32xi1>, vector<8x32xf32>
    %961 = arith.select %47, %932, %898 : vector<8x32xi1>, vector<8x32xf32>
    %962 = arith.select %41, %959, %899 : vector<8x32xi1>, vector<8x32xf32>
    %963 = arith.select %41, %957, %900 : vector<8x32xi1>, vector<8x32xf32>
    %964 = tpu.concatenate %960, %962 in 1 : vector<8x32xf32>, vector<8x32xf32> -> vector<8x64xf32>
    %965 = arith.truncf %964 : vector<8x64xf32> to vector<8x64xbf16>
    %cst_216 = arith.constant dense<0.000000e+00> : vector<8x256xf32>
    %966 = tpu.matmul %965, %585, %cst_216 {dimension_numbers = #tpu.dot_dimension_numbers<[1], [0], [0], [1], [0, 0, 1, 1], [], []>} : vector<8x64xbf16>, vector<64x256xbf16>, vector<8x256xf32> -> vector<8x256xf32>
    %c48_217 = arith.constant 48 : index
    %c0_218 = arith.constant 0 : index
    %967 = vector.load %arg16[%c48_217, %c0_218] : memref<64x256xf32, #tpu.memory_space<vmem>>, vector<8x128xf32>
    %968 = vector.extract_strided_slice %966 {offsets = [0, 0], sizes = [8, 128], strides = [1, 1]} : vector<8x256xf32> to vector<8x128xf32>
    %969 = arith.addf %967, %968 : vector<8x128xf32>
    %c8_219 = arith.constant 8 : index
    %c128_220 = arith.constant 128 : index
    %970 = vector.load %arg16[%c8_219, %c128_220] : memref<64x256xf32, #tpu.memory_space<vmem>>, vector<8x128xf32>
    %971 = vector.extract_strided_slice %966 {offsets = [0, 128], sizes = [8, 128], strides = [1, 1]} : vector<8x256xf32> to vector<8x128xf32>
    %972 = arith.addf %970, %971 : vector<8x128xf32>
    %973 = vector.extract_strided_slice %969 {offsets = [0, 0], sizes = [8, 32], strides = [1, 1]} : vector<8x128xf32> to vector<8x32xf32>
    %974 = arith.negf %973 : vector<8x32xf32>
    %975 = math.exp %974 : vector<8x32xf32>
    %cst_221 = arith.constant 1.000000e+00 : f32
    %976 = vector.broadcast %cst_221 : f32 to vector<8x32xf32>
    %977 = arith.addf %976, %975 : vector<8x32xf32>
    %978 = arith.divf %976, %977 : vector<8x32xf32>
    %979 = vector.extract_strided_slice %969 {offsets = [0, 32], sizes = [8, 32], strides = [1, 1]} : vector<8x128xf32> to vector<8x32xf32>
    %980 = arith.negf %979 : vector<8x32xf32>
    %981 = math.exp %980 : vector<8x32xf32>
    %cst_222 = arith.constant 1.000000e+00 : f32
    %982 = vector.broadcast %cst_222 : f32 to vector<8x32xf32>
    %983 = arith.addf %982, %981 : vector<8x32xf32>
    %984 = arith.divf %982, %983 : vector<8x32xf32>
    %985 = vector.extract_strided_slice %969 {offsets = [0, 64], sizes = [8, 32], strides = [1, 1]} : vector<8x128xf32> to vector<8x32xf32>
    %986 = math.tanh %985 : vector<8x32xf32>
    %987 = vector.extract_strided_slice %969 {offsets = [0, 96], sizes = [8, 32], strides = [1, 1]} : vector<8x128xf32> to vector<8x32xf32>
    %988 = arith.negf %987 : vector<8x32xf32>
    %989 = math.exp %988 : vector<8x32xf32>
    %cst_223 = arith.constant 1.000000e+00 : f32
    %990 = vector.broadcast %cst_223 : f32 to vector<8x32xf32>
    %991 = arith.addf %990, %989 : vector<8x32xf32>
    %992 = arith.divf %990, %991 : vector<8x32xf32>
    %993 = arith.mulf %984, %961 : vector<8x32xf32>
    %994 = arith.mulf %978, %986 : vector<8x32xf32>
    %995 = arith.addf %993, %994 : vector<8x32xf32>
    %996 = math.tanh %995 : vector<8x32xf32>
    %997 = arith.mulf %992, %996 : vector<8x32xf32>
    %998 = vector.extract_strided_slice %972 {offsets = [0, 0], sizes = [8, 32], strides = [1, 1]} : vector<8x128xf32> to vector<8x32xf32>
    %999 = arith.negf %998 : vector<8x32xf32>
    %1000 = math.exp %999 : vector<8x32xf32>
    %cst_224 = arith.constant 1.000000e+00 : f32
    %1001 = vector.broadcast %cst_224 : f32 to vector<8x32xf32>
    %1002 = arith.addf %1001, %1000 : vector<8x32xf32>
    %1003 = arith.divf %1001, %1002 : vector<8x32xf32>
    %1004 = vector.extract_strided_slice %972 {offsets = [0, 32], sizes = [8, 32], strides = [1, 1]} : vector<8x128xf32> to vector<8x32xf32>
    %1005 = arith.negf %1004 : vector<8x32xf32>
    %1006 = math.exp %1005 : vector<8x32xf32>
    %cst_225 = arith.constant 1.000000e+00 : f32
    %1007 = vector.broadcast %cst_225 : f32 to vector<8x32xf32>
    %1008 = arith.addf %1007, %1006 : vector<8x32xf32>
    %1009 = arith.divf %1007, %1008 : vector<8x32xf32>
    %1010 = vector.extract_strided_slice %972 {offsets = [0, 64], sizes = [8, 32], strides = [1, 1]} : vector<8x128xf32> to vector<8x32xf32>
    %1011 = math.tanh %1010 : vector<8x32xf32>
    %1012 = vector.extract_strided_slice %972 {offsets = [0, 96], sizes = [8, 32], strides = [1, 1]} : vector<8x128xf32> to vector<8x32xf32>
    %1013 = arith.negf %1012 : vector<8x32xf32>
    %1014 = math.exp %1013 : vector<8x32xf32>
    %cst_226 = arith.constant 1.000000e+00 : f32
    %1015 = vector.broadcast %cst_226 : f32 to vector<8x32xf32>
    %1016 = arith.addf %1015, %1014 : vector<8x32xf32>
    %1017 = arith.divf %1015, %1016 : vector<8x32xf32>
    %1018 = arith.mulf %1009, %963 : vector<8x32xf32>
    %1019 = arith.mulf %1003, %1011 : vector<8x32xf32>
    %1020 = arith.addf %1018, %1019 : vector<8x32xf32>
    %1021 = math.tanh %1020 : vector<8x32xf32>
    %1022 = arith.mulf %1017, %1021 : vector<8x32xf32>
    %1023 = arith.select %49, %997, %960 : vector<8x32xi1>, vector<8x32xf32>
    %1024 = arith.select %49, %995, %961 : vector<8x32xi1>, vector<8x32xf32>
    %1025 = arith.select %39, %1022, %962 : vector<8x32xi1>, vector<8x32xf32>
    %1026 = arith.select %39, %1020, %963 : vector<8x32xi1>, vector<8x32xf32>
    %1027 = tpu.concatenate %1023, %1025 in 1 : vector<8x32xf32>, vector<8x32xf32> -> vector<8x64xf32>
    %1028 = arith.truncf %1027 : vector<8x64xf32> to vector<8x64xbf16>
    %cst_227 = arith.constant dense<0.000000e+00> : vector<8x256xf32>
    %1029 = tpu.matmul %1028, %585, %cst_227 {dimension_numbers = #tpu.dot_dimension_numbers<[1], [0], [0], [1], [0, 0, 1, 1], [], []>} : vector<8x64xbf16>, vector<64x256xbf16>, vector<8x256xf32> -> vector<8x256xf32>
    %c56_228 = arith.constant 56 : index
    %c0_229 = arith.constant 0 : index
    %1030 = vector.load %arg16[%c56_228, %c0_229] : memref<64x256xf32, #tpu.memory_space<vmem>>, vector<8x128xf32>
    %1031 = vector.extract_strided_slice %1029 {offsets = [0, 0], sizes = [8, 128], strides = [1, 1]} : vector<8x256xf32> to vector<8x128xf32>
    %1032 = arith.addf %1030, %1031 : vector<8x128xf32>
    %c0_230 = arith.constant 0 : index
    %c128_231 = arith.constant 128 : index
    %1033 = vector.load %arg16[%c0_230, %c128_231] : memref<64x256xf32, #tpu.memory_space<vmem>>, vector<8x128xf32>
    %1034 = vector.extract_strided_slice %1029 {offsets = [0, 128], sizes = [8, 128], strides = [1, 1]} : vector<8x256xf32> to vector<8x128xf32>
    %1035 = arith.addf %1033, %1034 : vector<8x128xf32>
    %1036 = vector.extract_strided_slice %1032 {offsets = [0, 0], sizes = [8, 32], strides = [1, 1]} : vector<8x128xf32> to vector<8x32xf32>
    %1037 = arith.negf %1036 : vector<8x32xf32>
    %1038 = math.exp %1037 : vector<8x32xf32>
    %cst_232 = arith.constant 1.000000e+00 : f32
    %1039 = vector.broadcast %cst_232 : f32 to vector<8x32xf32>
    %1040 = arith.addf %1039, %1038 : vector<8x32xf32>
    %1041 = arith.divf %1039, %1040 : vector<8x32xf32>
    %1042 = vector.extract_strided_slice %1032 {offsets = [0, 32], sizes = [8, 32], strides = [1, 1]} : vector<8x128xf32> to vector<8x32xf32>
    %1043 = arith.negf %1042 : vector<8x32xf32>
    %1044 = math.exp %1043 : vector<8x32xf32>
    %cst_233 = arith.constant 1.000000e+00 : f32
    %1045 = vector.broadcast %cst_233 : f32 to vector<8x32xf32>
    %1046 = arith.addf %1045, %1044 : vector<8x32xf32>
    %1047 = arith.divf %1045, %1046 : vector<8x32xf32>
    %1048 = vector.extract_strided_slice %1032 {offsets = [0, 64], sizes = [8, 32], strides = [1, 1]} : vector<8x128xf32> to vector<8x32xf32>
    %1049 = math.tanh %1048 : vector<8x32xf32>
    %1050 = vector.extract_strided_slice %1032 {offsets = [0, 96], sizes = [8, 32], strides = [1, 1]} : vector<8x128xf32> to vector<8x32xf32>
    %1051 = arith.negf %1050 : vector<8x32xf32>
    %1052 = math.exp %1051 : vector<8x32xf32>
    %cst_234 = arith.constant 1.000000e+00 : f32
    %1053 = vector.broadcast %cst_234 : f32 to vector<8x32xf32>
    %1054 = arith.addf %1053, %1052 : vector<8x32xf32>
    %1055 = arith.divf %1053, %1054 : vector<8x32xf32>
    %1056 = arith.mulf %1047, %1024 : vector<8x32xf32>
    %1057 = arith.mulf %1041, %1049 : vector<8x32xf32>
    %1058 = arith.addf %1056, %1057 : vector<8x32xf32>
    %1059 = math.tanh %1058 : vector<8x32xf32>
    %1060 = arith.mulf %1055, %1059 : vector<8x32xf32>
    %1061 = vector.extract_strided_slice %1035 {offsets = [0, 0], sizes = [8, 32], strides = [1, 1]} : vector<8x128xf32> to vector<8x32xf32>
    %1062 = arith.negf %1061 : vector<8x32xf32>
    %1063 = math.exp %1062 : vector<8x32xf32>
    %cst_235 = arith.constant 1.000000e+00 : f32
    %1064 = vector.broadcast %cst_235 : f32 to vector<8x32xf32>
    %1065 = arith.addf %1064, %1063 : vector<8x32xf32>
    %1066 = arith.divf %1064, %1065 : vector<8x32xf32>
    %1067 = vector.extract_strided_slice %1035 {offsets = [0, 32], sizes = [8, 32], strides = [1, 1]} : vector<8x128xf32> to vector<8x32xf32>
    %1068 = arith.negf %1067 : vector<8x32xf32>
    %1069 = math.exp %1068 : vector<8x32xf32>
    %cst_236 = arith.constant 1.000000e+00 : f32
    %1070 = vector.broadcast %cst_236 : f32 to vector<8x32xf32>
    %1071 = arith.addf %1070, %1069 : vector<8x32xf32>
    %1072 = arith.divf %1070, %1071 : vector<8x32xf32>
    %1073 = vector.extract_strided_slice %1035 {offsets = [0, 64], sizes = [8, 32], strides = [1, 1]} : vector<8x128xf32> to vector<8x32xf32>
    %1074 = math.tanh %1073 : vector<8x32xf32>
    %1075 = vector.extract_strided_slice %1035 {offsets = [0, 96], sizes = [8, 32], strides = [1, 1]} : vector<8x128xf32> to vector<8x32xf32>
    %1076 = arith.negf %1075 : vector<8x32xf32>
    %1077 = math.exp %1076 : vector<8x32xf32>
    %cst_237 = arith.constant 1.000000e+00 : f32
    %1078 = vector.broadcast %cst_237 : f32 to vector<8x32xf32>
    %1079 = arith.addf %1078, %1077 : vector<8x32xf32>
    %1080 = arith.divf %1078, %1079 : vector<8x32xf32>
    %1081 = arith.mulf %1072, %1026 : vector<8x32xf32>
    %1082 = arith.mulf %1066, %1074 : vector<8x32xf32>
    %1083 = arith.addf %1081, %1082 : vector<8x32xf32>
    %1084 = math.tanh %1083 : vector<8x32xf32>
    %1085 = arith.mulf %1080, %1084 : vector<8x32xf32>
    %1086 = arith.select %51, %1060, %1023 : vector<8x32xi1>, vector<8x32xf32>
    %1087 = arith.select %37, %1085, %1025 : vector<8x32xi1>, vector<8x32xf32>
    %1088 = arith.truncf %1086 : vector<8x32xf32> to vector<8x32xbf16>
    %c0_238 = arith.constant 0 : index
    %c0_239 = arith.constant 0 : index
    %1089 = vector.load %arg12[%c0_238, %c0_239] : memref<32x128xbf16, #tpu.memory_space<vmem>>, vector<32x128xbf16>
    %cst_240 = arith.constant dense<0.000000e+00> : vector<8x128xf32>
    %1090 = tpu.matmul %1088, %1089, %cst_240 {dimension_numbers = #tpu.dot_dimension_numbers<[1], [0], [0], [1], [0, 0, 1, 1], [], []>} : vector<8x32xbf16>, vector<32x128xbf16>, vector<8x128xf32> -> vector<8x128xf32>
    %1091 = arith.truncf %1087 : vector<8x32xf32> to vector<8x32xbf16>
    %c0_241 = arith.constant 0 : index
    %c0_242 = arith.constant 0 : index
    %1092 = vector.load %arg13[%c0_241, %c0_242] : memref<32x128xbf16, #tpu.memory_space<vmem>>, vector<32x128xbf16>
    %cst_243 = arith.constant dense<0.000000e+00> : vector<8x128xf32>
    %1093 = tpu.matmul %1091, %1092, %cst_243 {dimension_numbers = #tpu.dot_dimension_numbers<[1], [0], [0], [1], [0, 0, 1, 1], [], []>} : vector<8x32xbf16>, vector<32x128xbf16>, vector<8x128xf32> -> vector<8x128xf32>
    %1094 = arith.addf %1090, %1093 : vector<8x128xf32>
    %c0_244 = arith.constant 0 : index
    %c0_245 = arith.constant 0 : index
    %1095 = vector.load %arg14[%c0_244, %c0_245] : memref<1x128xf32, #tpu.memory_space<vmem>>, vector<1x128xf32>
    %1096 = vector.broadcast %1095 : vector<1x128xf32> to vector<8x128xf32>
    %1097 = arith.addf %1094, %1096 : vector<8x128xf32>
    %c0_246 = arith.constant 0 : index
    %c0_247 = arith.constant 0 : index
    %1098 = vector.load %arg15[%c0_246, %c0_247] : memref<8x128xf32, #tpu.memory_space<vmem>>, vector<8x128xf32>
    tpu.vector_store %arg15[%c0_246, %c0_247], %1097 {strides = array<i32>} : memref<8x128xf32, #tpu.memory_space<vmem>>, vector<8x128xf32>,
    return
  }
  func.func @transform_0(%arg0: i32) -> (i32, i32) {
    %c0_i32 = arith.constant 0 : i32
    %c0_i32_0 = arith.constant 0 : i32
    return %arg0, %c0_i32 : i32, i32
  }
  func.func @transform_1(%arg0: i32) -> (i32, i32, i32) {
    %c0_i32 = arith.constant 0 : i32
    %c0_i32_0 = arith.constant 0 : i32
    %c0_i32_1 = arith.constant 0 : i32
    return %arg0, %c0_i32, %c0_i32_0 : i32, i32, i32
  }
  func.func @transform_2(%arg0: i32) -> (i32, i32) {
    %c0_i32 = arith.constant 0 : i32
    %c0_i32_0 = arith.constant 0 : i32
    %c0_i32_1 = arith.constant 0 : i32
    return %c0_i32, %c0_i32_0 : i32, i32
  }
  func.func @transform_3(%arg0: i32) -> (i32, i32) {
    %c0_i32 = arith.constant 0 : i32
    %c0_i32_0 = arith.constant 0 : i32
    %c0_i32_1 = arith.constant 0 : i32
    return %c0_i32, %c0_i32_0 : i32, i32
  }
  func.func @transform_4(%arg0: i32) -> (i32, i32) {
    %c0_i32 = arith.constant 0 : i32
    %c0_i32_0 = arith.constant 0 : i32
    %c0_i32_1 = arith.constant 0 : i32
    return %c0_i32, %c0_i32_0 : i32, i32
  }
  func.func @transform_5(%arg0: i32) -> (i32, i32) {
    %c0_i32 = arith.constant 0 : i32
    %c0_i32_0 = arith.constant 0 : i32
    %c0_i32_1 = arith.constant 0 : i32
    return %c0_i32, %c0_i32_0 : i32, i32
  }
  func.func @transform_6(%arg0: i32) -> (i32, i32) {
    %c0_i32 = arith.constant 0 : i32
    %c0_i32_0 = arith.constant 0 : i32
    %c0_i32_1 = arith.constant 0 : i32
    return %c0_i32, %c0_i32_0 : i32, i32
  }
  func.func @transform_7(%arg0: i32) -> (i32, i32) {
    %c0_i32 = arith.constant 0 : i32
    %c0_i32_0 = arith.constant 0 : i32
    %c0_i32_1 = arith.constant 0 : i32
    return %c0_i32, %c0_i32_0 : i32, i32
  }
  func.func @transform_8(%arg0: i32) -> (i32, i32) {
    %c0_i32 = arith.constant 0 : i32
    %c0_i32_0 = arith.constant 0 : i32
    %c0_i32_1 = arith.constant 0 : i32
    return %c0_i32, %c0_i32_0 : i32, i32
  }
  func.func @transform_9(%arg0: i32) -> (i32, i32) {
    %c0_i32 = arith.constant 0 : i32
    %c0_i32_0 = arith.constant 0 : i32
    %c0_i32_1 = arith.constant 0 : i32
    return %c0_i32, %c0_i32_0 : i32, i32
  }
  func.func @transform_10(%arg0: i32) -> (i32, i32) {
    %c0_i32 = arith.constant 0 : i32
    %c0_i32_0 = arith.constant 0 : i32
    %c0_i32_1 = arith.constant 0 : i32
    return %c0_i32, %c0_i32_0 : i32, i32
  }
  func.func @transform_11(%arg0: i32) -> (i32, i32) {
    %c0_i32 = arith.constant 0 : i32
    %c0_i32_0 = arith.constant 0 : i32
    %c0_i32_1 = arith.constant 0 : i32
    return %c0_i32, %c0_i32_0 : i32, i32
  }
  func.func @transform_12(%arg0: i32) -> (i32, i32) {
    %c0_i32 = arith.constant 0 : i32
    %c0_i32_0 = arith.constant 0 : i32
    %c0_i32_1 = arith.constant 0 : i32
    return %c0_i32, %c0_i32_0 : i32, i32
  }
  func.func @transform_13(%arg0: i32) -> (i32, i32) {
    %c0_i32 = arith.constant 0 : i32
    %c0_i32_0 = arith.constant 0 : i32
    %c0_i32_1 = arith.constant 0 : i32
    return %c0_i32, %c0_i32_0 : i32, i32
  }
  func.func @transform_14(%arg0: i32) -> (i32, i32) {
    %c0_i32 = arith.constant 0 : i32
    %c0_i32_0 = arith.constant 0 : i32
    return %arg0, %c0_i32 : i32, i32
  }
}

</mosaic_0001>

<llo_original>
// kernel: intent_forward.1
$region0: #{intent_forward.1}
  #allocation0 [shape = 'u32[]', space=smem, size = 0x4, offset = 0x4, fixed_abs, tag = 'smem constant byte address 0x4 - core index']
  #allocation1 [shape = 'u32[144,128]{1,0:T(1,128)}', space=vmem, size = 0x12000, scoped, tag = 'internal scratch']
  #allocation2 [shape = 'f32[64,256]{1,0:T(8,128)}', space=vmem, size = 0x10000, scoped, tag = 'scratch operand']
  #allocation3 [shape = 'f32[64,32]{1,0:T(8,128)}', space=vmem, size = 0x8000, scoped, tag = 'scratch operand']
  #allocation4 [shape = 'f32[64,32]{1,0:T(8,128)}', space=vmem, size = 0x8000, scoped, tag = 'scratch operand']
  %s0 = inlined_call_operand.vmem [shape: s32[8,1], index: 0, kind: input, shape index: {}]
  %s1 = inlined_call_operand.vmem [shape: f32[1,64,32], index: 1, kind: input, shape index: {}]
  %s2 = inlined_call_operand.vmem [shape: f32[1,32], index: 2, kind: input, shape index: {}]
  %s3 = inlined_call_operand.vmem [shape: f32[1,32], index: 3, kind: input, shape index: {}]
  %s4 = inlined_call_operand.vmem [shape: bf16[32,256], index: 4, kind: input, shape index: {}]
  %s5 = inlined_call_operand.vmem [shape: bf16[64,256], index: 5, kind: input, shape index: {}]
  %s6 = inlined_call_operand.vmem [shape: f32[1,256], index: 6, kind: input, shape index: {}]
  %s7 = inlined_call_operand.vmem [shape: bf16[32,256], index: 7, kind: input, shape index: {}]
  %s8 = inlined_call_operand.vmem [shape: bf16[32,256], index: 8, kind: input, shape index: {}]
  %s9 = inlined_call_operand.vmem [shape: bf16[64,256], index: 9, kind: input, shape index: {}]
  %s10 = inlined_call_operand.vmem [shape: f32[1,256], index: 10, kind: input, shape index: {}]
  %s11 = inlined_call_operand.vmem [shape: bf16[32,128], index: 11, kind: input, shape index: {}]
  %s12 = inlined_call_operand.vmem [shape: bf16[32,128], index: 12, kind: input, shape index: {}]
  %s13 = inlined_call_operand.vmem [shape: f32[1,128], index: 13, kind: input, shape index: {}]
  %s14 = inlined_call_operand.vmem [shape: f32[8,128], index: 14, kind: output, shape index: {}]
  %s15 = sld [smem:[#allocation0]]
  $region66: #{intent_forward.1} parent=0
    _
  %s17 = ssub.s32 1, %s15
  %s18 = scalar_select 0, %s17, %s15
  // Predicated region
  $region2: #{intent_forward.1} parent=0 // pred_check
    _
  $region3: #{intent_forward.1} parent=0 // pred_check_branch
    %20 = sbr.rel (0) target = $region5
  $region4: #{intent_forward.1} parent=0 // pred_region
    _
  $region5: #{intent_forward.1} parent=0 // pred_fallthru
    _
  // Predicated region
  $region6: #{intent_forward.1} parent=0 // pred_check
    _
  $region7: #{intent_forward.1} parent=0 // pred_check_branch
    %22 = sbr.rel (0) target = $region9
  $region8: #{intent_forward.1} parent=0 // pred_region
    _
  $region9: #{intent_forward.1} parent=0 // pred_fallthru
    _
  // Predicated region
  $region10: #{intent_forward.1} parent=0 // pred_check
    _
  $region11: #{intent_forward.1} parent=0 // pred_check_branch
    %24 = sbr.rel (0) target = $region13
  $region12: #{intent_forward.1} parent=0 // pred_region
    _
  $region13: #{intent_forward.1} parent=0 // pred_fallthru
    _
  // Predicated region
  $region14: #{intent_forward.1} parent=0 // pred_check
    _
  $region15: #{intent_forward.1} parent=0 // pred_check_branch
    %26 = sbr.rel (0) target = $region17
  $region16: #{intent_forward.1} parent=0 // pred_region
    _
  $region17: #{intent_forward.1} parent=0 // pred_fallthru
    _
  // Predicated region
  $region18: #{intent_forward.1} parent=0 // pred_check
    _
  $region19: #{intent_forward.1} parent=0 // pred_check_branch
    %28 = sbr.rel (0) target = $region21
  $region20: #{intent_forward.1} parent=0 // pred_region
    _
  $region21: #{intent_forward.1} parent=0 // pred_fallthru
    _
  // Predicated region
  $region22: #{intent_forward.1} parent=0 // pred_check
    _
  $region23: #{intent_forward.1} parent=0 // pred_check_branch
    %30 = sbr.rel (0) target = $region25
  $region24: #{intent_forward.1} parent=0 // pred_region
    _
  $region25: #{intent_forward.1} parent=0 // pred_fallthru
    _
  // Predicated region
  $region26: #{intent_forward.1} parent=0 // pred_check
    _
  $region27: #{intent_forward.1} parent=0 // pred_check_branch
    %32 = sbr.rel (0) target = $region29
  $region28: #{intent_forward.1} parent=0 // pred_region
    _
  $region29: #{intent_forward.1} parent=0 // pred_fallthru
    _
  // Predicated region
  $region30: #{intent_forward.1} parent=0 // pred_check
    _
  $region31: #{intent_forward.1} parent=0 // pred_check_branch
    %34 = sbr.rel (0) target = $region33
  $region32: #{intent_forward.1} parent=0 // pred_region
    _
  $region33: #{intent_forward.1} parent=0 // pred_fallthru
    _
  // Predicated region
  $region34: #{intent_forward.1} parent=0 // pred_check
    _
  $region35: #{intent_forward.1} parent=0 // pred_check_branch
    %36 = sbr.rel (0) target = $region37
  $region36: #{intent_forward.1} parent=0 // pred_region
    _
  $region37: #{intent_forward.1} parent=0 // pred_fallthru
    _
  // Predicated region
  $region38: #{intent_forward.1} parent=0 // pred_check
    _
  $region39: #{intent_forward.1} parent=0 // pred_check_branch
    %38 = sbr.rel (0) target = $region41
  $region40: #{intent_forward.1} parent=0 // pred_region
    _
  $region41: #{intent_forward.1} parent=0 // pred_fallthru
    _
  // Predicated region
  $region42: #{intent_forward.1} parent=0 // pred_check
    _
  $region43: #{intent_forward.1} parent=0 // pred_check_branch
    %40 = sbr.rel (0) target = $region45
  $region44: #{intent_forward.1} parent=0 // pred_region
    _
  $region45: #{intent_forward.1} parent=0 // pred_fallthru
    _
  // Predicated region
  $region46: #{intent_forward.1} parent=0 // pred_check
    _
  $region47: #{intent_forward.1} parent=0 // pred_check_branch
    %42 = sbr.rel (0) target = $region49
  $region48: #{intent_forward.1} parent=0 // pred_region
    _
  $region49: #{intent_forward.1} parent=0 // pred_fallthru
    _
  // Predicated region
  $region50: #{intent_forward.1} parent=0 // pred_check
    _
  $region51: #{intent_forward.1} parent=0 // pred_check_branch
    %44 = sbr.rel (0) target = $region53
  $region52: #{intent_forward.1} parent=0 // pred_region
    _
  $region53: #{intent_forward.1} parent=0 // pred_fallthru
    _
  // Predicated region
  $region54: #{intent_forward.1} parent=0 // pred_check
    _
  $region55: #{intent_forward.1} parent=0 // pred_check_branch
    %46 = sbr.rel (0) target = $region57
  $region56: #{intent_forward.1} parent=0 // pred_region
    _
  $region57: #{intent_forward.1} parent=0 // pred_fallthru
    _
  %v48 = vld [vmem:[%s1] sm:$0xff]
  %v49 = vld [vmem:[%s1 + $0x8] sm:$0xff]
  %v50 = vld [vmem:[%s1 + $0x10] sm:$0xff]
  %v51 = vld [vmem:[%s1 + $0x18] sm:$0xff]
  %v52 = vld [vmem:[%s1 + $0x20] sm:$0xff]
  %v53 = vld [vmem:[%s1 + $0x28] sm:$0xff]
  %v54 = vld [vmem:[%s1 + $0x30] sm:$0xff]
  %v55 = vld [vmem:[%s1 + $0x38] sm:$0xff]
  %vm56 = vcmask 261120
  %v57 = vsel %vm56, %v48, 0.0
  %58 = vadd.xlane.f32.xlu0 %v57
  %v59 = vpop.xlane.xlu0 %58
  %v60 = vsel %vm56, %v49, 0.0
  %61 = vadd.xlane.f32.xlu0 %v60
  %v62 = vpop.xlane.xlu0 %61
  %v63 = vsel %vm56, %v50, 0.0
  %64 = vadd.xlane.f32.xlu0 %v63
  %v65 = vpop.xlane.xlu0 %64
  %v66 = vsel %vm56, %v51, 0.0
  %67 = vadd.xlane.f32.xlu0 %v66
  %v68 = vpop.xlane.xlu0 %67
  %v69 = vsel %vm56, %v52, 0.0
  %70 = vadd.xlane.f32.xlu0 %v69
  %v71 = vpop.xlane.xlu0 %70
  %v72 = vsel %vm56, %v53, 0.0
  %73 = vadd.xlane.f32.xlu0 %v72
  %v74 = vpop.xlane.xlu0 %73
  %v75 = vsel %vm56, %v54, 0.0
  %76 = vadd.xlane.f32.xlu0 %v75
  %v77 = vpop.xlane.xlu0 %76
  %v78 = vsel %vm56, %v55, 0.0
  %79 = vadd.xlane.f32.xlu0 %v78
  %v80 = vpop.xlane.xlu0 %79
  %v81 = vrcp.pop 32.0
  %v82 = vmul.f32 %v59, %v81
  %v83 = vmul.f32 %v62, %v81
  %v84 = vmul.f32 %v65, %v81
  %v85 = vmul.f32 %v68, %v81
  %v86 = vmul.f32 %v71, %v81
  %v87 = vmul.f32 %v74, %v81
  %v88 = vmul.f32 %v77, %v81
  %v89 = vmul.f32 %v80, %v81
  %v90 = vsub.f32 %v48, %v82
  %v91 = vsub.f32 %v49, %v83
  %v92 = vsub.f32 %v50, %v84
  %v93 = vsub.f32 %v51, %v85
  %v94 = vsub.f32 %v52, %v86
  %v95 = vsub.f32 %v53, %v87
  %v96 = vsub.f32 %v54, %v88
  %v97 = vsub.f32 %v55, %v89
  %v98 = vmul.f32 %v90, %v90
  %v99 = vmul.f32 %v91, %v91
  %v100 = vmul.f32 %v92, %v92
  %v101 = vmul.f32 %v93, %v93
  %v102 = vmul.f32 %v94, %v94
  %v103 = vmul.f32 %v95, %v95
  %v104 = vmul.f32 %v96, %v96
  %v105 = vmul.f32 %v97, %v97
  %v106 = vsel %vm56, %v98, 0.0
  %107 = vadd.xlane.f32.xlu0 %v106
  %v108 = vpop.xlane.xlu0 %107
  %v109 = vsel %vm56, %v99, 0.0
  %110 = vadd.xlane.f32.xlu0 %v109
  %v111 = vpop.xlane.xlu0 %110
  %v112 = vsel %vm56, %v100, 0.0
  %113 = vadd.xlane.f32.xlu0 %v112
  %v114 = vpop.xlane.xlu0 %113
  %v115 = vsel %vm56, %v101, 0.0
  %116 = vadd.xlane.f32.xlu0 %v115
  %v117 = vpop.xlane.xlu0 %116
  %v118 = vsel %vm56, %v102, 0.0
  %119 = vadd.xlane.f32.xlu0 %v118
  %v120 = vpop.xlane.xlu0 %119
  %v121 = vsel %vm56, %v103, 0.0
  %122 = vadd.xlane.f32.xlu0 %v121
  %v123 = vpop.xlane.xlu0 %122
  %v124 = vsel %vm56, %v104, 0.0
  %125 = vadd.xlane.f32.xlu0 %v124
  %v126 = vpop.xlane.xlu0 %125
  %v127 = vsel %vm56, %v105, 0.0
  %128 = vadd.xlane.f32.xlu0 %v127
  %v129 = vpop.xlane.xlu0 %128
  %v130 = vmul.f32 %v108, %v81
  %v131 = vmul.f32 %v111, %v81
  %v132 = vmul.f32 %v114, %v81
  %v133 = vmul.f32 %v117, %v81
  %v134 = vmul.f32 %v120, %v81
  %v135 = vmul.f32 %v123, %v81
  %v136 = vmul.f32 %v126, %v81
  %v137 = vmul.f32 %v129, %v81
  %v138 = vadd.f32 %v130, 1e-05
  %v139 = vadd.f32 %v131, 1e-05
  %v140 = vadd.f32 %v132, 1e-05
  %v141 = vadd.f32 %v133, 1e-05
  %v142 = vadd.f32 %v134, 1e-05
  %v143 = vadd.f32 %v135, 1e-05
  %v144 = vadd.f32 %v136, 1e-05
  %v145 = vadd.f32 %v137, 1e-05
  %v146 = vrsqrt.pop %v138
  %v147 = vrsqrt.pop %v139
  %v148 = vrsqrt.pop %v140
  %v149 = vrsqrt.pop %v141
  %v150 = vrsqrt.pop %v142
  %v151 = vrsqrt.pop %v143
  %v152 = vrsqrt.pop %v144
  %v153 = vrsqrt.pop %v145
  %v154 = vmul.f32 %v90, %v146
  %v155 = vmul.f32 %v91, %v147
  %v156 = vmul.f32 %v92, %v148
  %v157 = vmul.f32 %v93, %v149
  %v158 = vmul.f32 %v94, %v150
  %v159 = vmul.f32 %v95, %v151
  %v160 = vmul.f32 %v96, %v152
  %v161 = vmul.f32 %v97, %v153
  %v162 = vld [vmem:[%s2] sm:$0x1]
  %v164 = vlaneseq
  %v165 = vshrl.u32 %v164, 7
  %v166 = vsub.s32 0, %v165
  %v167 = vrot.slane %v162, %v166
  %v169 = vmul.f32 %v154, %v167
  %v170 = vmul.f32 %v155, %v167
  %v171 = vmul.f32 %v156, %v167
  %v172 = vmul.f32 %v157, %v167
  %v173 = vmul.f32 %v158, %v167
  %v174 = vmul.f32 %v159, %v167
  %v175 = vmul.f32 %v160, %v167
  %v176 = vmul.f32 %v161, %v167
  %v177 = vld [vmem:[%s3] sm:$0x1]
  %v179 = vlaneseq
  %v180 = vshrl.u32 %v179, 7
  %v181 = vsub.s32 0, %v180
  %v182 = vrot.slane %v177, %v181
  %v184 = vadd.f32 %v169, %v182
  %v185 = vadd.f32 %v170, %v182
  %v186 = vadd.f32 %v171, %v182
  %v187 = vadd.f32 %v172, %v182
  %v188 = vadd.f32 %v173, %v182
  %v189 = vadd.f32 %v174, %v182
  %v190 = vadd.f32 %v175, %v182
  %v191 = vadd.f32 %v176, %v182
  %v192 = vpack.c.bf16 %v185, %v184
  %v193 = vpack.c.bf16 %v187, %v186
  %v194 = vpack.c.bf16 %v189, %v188
  %v195 = vpack.c.bf16 %v191, %v190
  %v196 = vld [vmem:[%s4] sm:$0xff]
  %v197 = vld [vmem:[%s4 + $0x8] sm:$0xff]
  %v198 = vld [vmem:[%s4 + $0x10] sm:$0xff]
  %v199 = vld [vmem:[%s4 + $0x18] sm:$0xff]
  %v200 = vld [vmem:[%s6] sm:$0x3]
  %v202 = vlaneseq
  %v203 = vshrl.u32 %v202, 7
  %v204 = vsub.s32 0, %v203
  %v205 = vrot.slane %v200, %v204
  %v206 = vlaneseq
  %v207 = vshrl.u32 %v206, 7
  %v208 = vsub.s32 1, %v207
  %v209 = vrot.slane %v200, %v208
  %v216 = vunpack.c.l.b16 %v196
  %v217 = vunpack.c.h.b16 %v196
  %v218 = vunpack.c.l.b16 %v197
  %v219 = vunpack.c.h.b16 %v197
  %v220 = vunpack.c.l.b16 %v198
  %v221 = vunpack.c.h.b16 %v198
  %v222 = vunpack.c.l.b16 %v199
  %v223 = vunpack.c.h.b16 %v199
  %v224 = vpack.c.b16 %v218, %v216
  %v225 = vpack.c.b16 %v219, %v217
  %v226 = vpack.c.b16 %v222, %v220
  %v227 = vpack.c.b16 %v223, %v221
  %v233 = vsel %vm56, %v192, 0
  %v236 = vsel %vm56, %v193, 0
  %v239 = vsel %vm56, %v194, 0
  %v242 = vsel %vm56, %v195, 0
  %244 = vmatprep.subr.bf16.mxu0 0
  %245 = vmatpush1.bf16.msra.mxu0 0
  %246 = vmatprep.subr.bf16.mxu0 0
  %247 = vmatpush1.bf16.msra.mxu0 0
  %248 = vmatprep.subr.bf16.mxu0 0
  %249 = vmatpush1.bf16.msra.mxu0 0
  %250 = vmatprep.subr.bf16.mxu0 0
  %251 = vmatpush1.bf16.msra.mxu0 0
  %252 = vmatprep.subr.bf16.mxu0 0
  %253 = vmatpush1.bf16.msra.mxu0 0
  %254 = vmatprep.subr.bf16.mxu0 0
  %255 = vmatpush1.bf16.msra.mxu0 0
  %256 = vmatprep.subr.bf16.mxu0 %v227
  %257 = vmatpush1.bf16.msra.mxu0 %v226
  %258 = vmatprep.subr.bf16.mxu0 %v225
  %259 = vmatpush1.bf16.msra.mxu0 %v224
  %260 = vmatprep.subr.bf16.mxu0 0
  %261 = vmatpush2.bf16.msra.mxu0 0
  %262 = vmatprep.subr.bf16.mxu0 0
  %263 = vmatpush2.bf16.msra.mxu0 0
  %264 = vmatprep.subr.bf16.mxu0 0
  %265 = vmatpush2.bf16.msra.mxu0 0
  %266 = vmatprep.subr.bf16.mxu0 0
  %267 = vmatpush2.bf16.msra.mxu0 0
  %268 = vmatprep.subr.bf16.mxu0 0
  %269 = vmatpush2.bf16.msra.mxu0 0
  %270 = vmatprep.subr.bf16.mxu0 0
  %271 = vmatpush2.bf16.msra.mxu0 0
  %272 = vmatprep.subr.bf16.mxu0 0
  %273 = vmatpush2.bf16.msra.mxu0 0
  %274 = vmatprep.subr.bf16.mxu0 0
  %275 = vmatpush2.bf16.msra.mxu0 0
  %276 = vmatprep.mubr.bf16.mxu0 0
  %277 = vmatmul.mubr.bf16.gmra.mxu0 %v233
  %v278 = vpop.f32.mrf.mxu0
  %v279 = vadd.f32 %v205, %v278
  %v280 = vpop.f32.mrf.mxu0
  %v281 = vadd.f32 %v209, %v280
  %v282 = vpop.f32.mrf.mxu0
  %v283 = vadd.f32 %v205, %v282
  %v284 = vpop.f32.mrf.mxu0
  %v285 = vadd.f32 %v209, %v284
  %286 = vmatprep.mubr.bf16.mxu0 0
  %287 = vmatmul.mubr.bf16.gmra.mxu0 %v236
  %v288 = vpop.f32.mrf.mxu0
  %v289 = vadd.f32 %v205, %v288
  %v290 = vpop.f32.mrf.mxu0
  %v291 = vadd.f32 %v209, %v290
  %v292 = vpop.f32.mrf.mxu0
  %v293 = vadd.f32 %v205, %v292
  %v294 = vpop.f32.mrf.mxu0
  %v295 = vadd.f32 %v209, %v294
  %296 = vmatprep.mubr.bf16.mxu0 0
  %297 = vmatmul.mubr.bf16.gmra.mxu0 %v239
  %v298 = vpop.f32.mrf.mxu0
  %v299 = vadd.f32 %v205, %v298
  %v300 = vpop.f32.mrf.mxu0
  %v301 = vadd.f32 %v209, %v300
  %v302 = vpop.f32.mrf.mxu0
  %v303 = vadd.f32 %v205, %v302
  %v304 = vpop.f32.mrf.mxu0
  %v305 = vadd.f32 %v209, %v304
  %306 = vmatprep.mubr.bf16.mxu0 0
  %307 = vmatmul.mubr.bf16.gmra.mxu0 %v242
  %v308 = vpop.f32.mrf.mxu0
  %v309 = vadd.f32 %v205, %v308
  %v310 = vpop.f32.mrf.mxu0
  %v311 = vadd.f32 %v209, %v310
  %v312 = vpop.f32.mrf.mxu0
  %v313 = vadd.f32 %v205, %v312
  %v314 = vpop.f32.mrf.mxu0
  %v315 = vadd.f32 %v209, %v314
  %316 = vdwg.mxu0
  %317 = vst [vmem:[#allocation2] sm:$0xff] %v279
  %318 = vst [vmem:[#allocation2 + $0x8] sm:$0xff] %v281
  %319 = vst [vmem:[#allocation2 + $0x10] sm:$0xff] %v283
  %320 = vst [vmem:[#allocation2 + $0x18] sm:$0xff] %v285
  %321 = vst [vmem:[#allocation2 + $0x20] sm:$0xff] %v289
  %322 = vst [vmem:[#allocation2 + $0x28] sm:$0xff] %v291
  %323 = vst [vmem:[#allocation2 + $0x30] sm:$0xff] %v293
  %324 = vst [vmem:[#allocation2 + $0x38] sm:$0xff] %v295
  %325 = vst [vmem:[#allocation2 + $0x40] sm:$0xff] %v299
  %326 = vst [vmem:[#allocation2 + $0x48] sm:$0xff] %v301
  %327 = vst [vmem:[#allocation2 + $0x50] sm:$0xff] %v303
  %328 = vst [vmem:[#allocation2 + $0x58] sm:$0xff] %v305
  %329 = vst [vmem:[#allocation2 + $0x60] sm:$0xff] %v309
  %330 = vst [vmem:[#allocation2 + $0x68] sm:$0xff] %v311
  %331 = vst [vmem:[#allocation2 + $0x70] sm:$0xff] %v313
  %332 = vst [vmem:[#allocation2 + $0x78] sm:$0xff] %v315
  %v333 = vld [vmem:[%s0] sm:$0xff]
  %334 = vset.pattern.permute.xlu0 0
  %335 = vperm.xlu0 %334, %v333
  %v336 = vpop.permute.xlu0 %335
  %vm337 = vcmp.gt.s32.totalorder %v336, 0
  %vm338 = vcmp.gt.s32.totalorder %v336, 1
  %vm339 = vcmp.gt.s32.totalorder %v336, 2
  %vm340 = vcmp.gt.s32.totalorder %v336, 3
  %vm341 = vcmp.gt.s32.totalorder %v336, 4
  %vm342 = vcmp.gt.s32.totalorder %v336, 5
  %vm343 = vcmp.gt.s32.totalorder %v336, 6
  %vm344 = vcmp.gt.s32.totalorder %v336, 7
  %v345 = vld [vmem:[%s5] sm:$0xff]
  %v346 = vld [vmem:[%s5 + $0x8] sm:$0xff]
  %v347 = vld [vmem:[%s5 + $0x10] sm:$0xff]
  %v348 = vld [vmem:[%s5 + $0x18] sm:$0xff]
  %v349 = vld [vmem:[%s5 + $0x20] sm:$0xff]
  %v350 = vld [vmem:[%s5 + $0x28] sm:$0xff]
  %v351 = vld [vmem:[%s5 + $0x30] sm:$0xff]
  %v352 = vld [vmem:[%s5 + $0x38] sm:$0xff]
  %v353 = vpack.c.bf16 0.0, 0.0
  %v362 = vunpack.c.l.b16 %v345
  %v363 = vunpack.c.h.b16 %v345
  %v364 = vunpack.c.l.b16 %v346
  %v365 = vunpack.c.h.b16 %v346
  %v366 = vunpack.c.l.b16 %v347
  %v367 = vunpack.c.h.b16 %v347
  %v368 = vunpack.c.l.b16 %v348
  %v369 = vunpack.c.h.b16 %v348
  %v370 = vunpack.c.l.b16 %v349
  %v371 = vunpack.c.h.b16 %v349
  %v372 = vunpack.c.l.b16 %v350
  %v373 = vunpack.c.h.b16 %v350
  %v374 = vunpack.c.l.b16 %v351
  %v375 = vunpack.c.h.b16 %v351
  %v376 = vunpack.c.l.b16 %v352
  %v377 = vunpack.c.h.b16 %v352
  %v378 = vpack.c.b16 %v364, %v362
  %v379 = vpack.c.b16 %v365, %v363
  %v380 = vpack.c.b16 %v368, %v366
  %v381 = vpack.c.b16 %v369, %v367
  %v382 = vpack.c.b16 %v372, %v370
  %v383 = vpack.c.b16 %v373, %v371
  %v384 = vpack.c.b16 %v376, %v374
  %v385 = vpack.c.b16 %v377, %v375
  %vm394 = vcmask 523264
  %v396 = vsel %vm394, %v353, 0
  %398 = vmatprep.subr.bf16.mxu0 0
  %399 = vmatpush1.bf16.msra.mxu0 0
  %400 = vmatprep.subr.bf16.mxu0 0
  %401 = vmatpush1.bf16.msra.mxu0 0
  %402 = vmatprep.subr.bf16.mxu0 0
  %403 = vmatpush1.bf16.msra.mxu0 0
  %404 = vmatprep.subr.bf16.mxu0 0
  %405 = vmatpush1.bf16.msra.mxu0 0
  %406 = vmatprep.subr.bf16.mxu0 %v385
  %407 = vmatpush1.bf16.msra.mxu0 %v384
  %408 = vmatprep.subr.bf16.mxu0 %v383
  %409 = vmatpush1.bf16.msra.mxu0 %v382
  %410 = vmatprep.subr.bf16.mxu0 %v381
  %411 = vmatpush1.bf16.msra.mxu0 %v380
  %412 = vmatprep.subr.bf16.mxu0 %v379
  %413 = vmatpush1.bf16.msra.mxu0 %v378
  %414 = vmatprep.subr.bf16.mxu0 0
  %415 = vmatpush2.bf16.msra.mxu0 0
  %416 = vmatprep.subr.bf16.mxu0 0
  %417 = vmatpush2.bf16.msra.mxu0 0
  %418 = vmatprep.subr.bf16.mxu0 0
  %419 = vmatpush2.bf16.msra.mxu0 0
  %420 = vmatprep.subr.bf16.mxu0 0
  %421 = vmatpush2.bf16.msra.mxu0 0
  %422 = vmatprep.subr.bf16.mxu0 0
  %423 = vmatpush2.bf16.msra.mxu0 0
  %424 = vmatprep.subr.bf16.mxu0 0
  %425 = vmatpush2.bf16.msra.mxu0 0
  %426 = vmatprep.subr.bf16.mxu0 0
  %427 = vmatpush2.bf16.msra.mxu0 0
  %428 = vmatprep.subr.bf16.mxu0 0
  %429 = vmatpush2.bf16.msra.mxu0 0
  %430 = vmatprep.mubr.bf16.mxu0 0
  %431 = vmatmul.mubr.bf16.gmra.mxu0 %v396
  %v432 = vpop.f32.mrf.mxu0
  %v433 = vadd.f32 0.0, %v432
  %v434 = vpop.f32.mrf.mxu0
  %v435 = vadd.f32 0.0, %v434
  %v436 = vpop.f32.mrf.mxu0
  %v437 = vpop.f32.mrf.mxu0
  %438 = vdwg.mxu0
  %v439 = vld [vmem:[#allocation2] sm:$0xff]
  %v440 = vadd.f32 %v439, %v433
  %v441 = vld [vmem:[#allocation2 + $0x78] sm:$0xff]
  %v442 = vadd.f32 %v441, %v435
  %v443 = vxor.u32 %v440, 2147483648
  %v444 = vmul.f32 %v443, 1.442695
  %v445 = vpow.pop %v444
  %v446 = vadd.f32 %v445, 1.0
  %v447 = vrcp.pop %v446
  %v448 = vmul.f32 1.0, %v447
  %v449 = vtanh.pop %v440
  %v450 = vmul.f32 %v448, 0.0
  %452 = vrot.lane.b32.xlu0 %v449, 64
  %v453 = vpop.permute.xlu0 %452
  %v455 = vmul.f32 %v448, %v453
  %457 = vrot.lane.b32.xlu0 %v455, 32
  %v458 = vpop.permute.xlu0 %457
  %v460 = vadd.f32 %v450, %v458
  %v461 = vtanh.pop %v460
  %463 = vrot.lane.b32.xlu0 %v461, 64
  %v464 = vpop.permute.xlu0 %463
  %v466 = vmul.f32 %v448, %v464
  %v467 = vxor.u32 %v442, 2147483648
  %v468 = vmul.f32 %v467, 1.442695
  %v469 = vpow.pop %v468
  %v470 = vadd.f32 %v469, 1.0
  %v471 = vrcp.pop %v470
  %v472 = vmul.f32 1.0, %v471
  %v473 = vtanh.pop %v442
  %v474 = vmul.f32 %v472, 0.0
  %476 = vrot.lane.b32.xlu0 %v473, 64
  %v477 = vpop.permute.xlu0 %476
  %v479 = vmul.f32 %v472, %v477
  %481 = vrot.lane.b32.xlu0 %v479, 32
  %v482 = vpop.permute.xlu0 %481
  %v484 = vadd.f32 %v474, %v482
  %v485 = vtanh.pop %v484
  %487 = vrot.lane.b32.xlu0 %v485, 64
  %v488 = vpop.permute.xlu0 %487
  %v490 = vmul.f32 %v472, %v488
  %v491 = vsel %vm337, %v466, 0.0
  %v492 = vsel %vm337, %v460, 0.0
  %v493 = vsel %vm344, %v490, 0.0
  %v494 = vsel %vm344, %v484, 0.0
  %496 = vrot.lane.b32.xlu0 %v491, 32
  %v497 = vpop.permute.xlu0 %496
  %499 = vst.msk [vmem:[#allocation3] sm:$0xff] %vm56, %v497
  %501 = vrot.lane.b32.xlu0 %v493, 32
  %v502 = vpop.permute.xlu0 %501
  %504 = vst.msk [vmem:[#allocation4 + $0x38] sm:$0xff] %vm56, %v502
  %505 = vrot.lane.b32.xlu0 %v493, 64
  %v506 = vpop.permute.xlu0 %505
  %v508 = vsel %vm56, %v497, %v506
  %v509 = vpack.c.bf16 %v508, %v508
  %v511 = vsel %vm394, %v509, 0
  %513 = vmatprep.subr.bf16.mxu0 0
  %514 = vmatpush1.bf16.msra.mxu0 0
  %515 = vmatprep.subr.bf16.mxu0 0
  %516 = vmatpush1.bf16.msra.mxu0 0
  %517 = vmatprep.subr.bf16.mxu0 0
  %518 = vmatpush1.bf16.msra.mxu0 0
  %519 = vmatprep.subr.bf16.mxu0 0
  %520 = vmatpush1.bf16.msra.mxu0 0
  %521 = vmatprep.subr.bf16.mxu0 %v385
  %522 = vmatpush1.bf16.msra.mxu0 %v384
  %523 = vmatprep.subr.bf16.mxu0 %v383
  %524 = vmatpush1.bf16.msra.mxu0 %v382
  %525 = vmatprep.subr.bf16.mxu0 %v381
  %526 = vmatpush1.bf16.msra.mxu0 %v380
  %527 = vmatprep.subr.bf16.mxu0 %v379
  %528 = vmatpush1.bf16.msra.mxu0 %v378
  %529 = vmatprep.subr.bf16.mxu0 0
  %530 = vmatpush2.bf16.msra.mxu0 0
  %531 = vmatprep.subr.bf16.mxu0 0
  %532 = vmatpush2.bf16.msra.mxu0 0
  %533 = vmatprep.subr.bf16.mxu0 0
  %534 = vmatpush2.bf16.msra.mxu0 0
  %535 = vmatprep.subr.bf16.mxu0 0
  %536 = vmatpush2.bf16.msra.mxu0 0
  %537 = vmatprep.subr.bf16.mxu0 0
  %538 = vmatpush2.bf16.msra.mxu0 0
  %539 = vmatprep.subr.bf16.mxu0 0
  %540 = vmatpush2.bf16.msra.mxu0 0
  %541 = vmatprep.subr.bf16.mxu0 0
  %542 = vmatpush2.bf16.msra.mxu0 0
  %543 = vmatprep.subr.bf16.mxu0 0
  %544 = vmatpush2.bf16.msra.mxu0 0
  %545 = vmatprep.mubr.bf16.mxu0 0
  %546 = vmatmul.mubr.bf16.gmra.mxu0 %v511
  %v547 = vpop.f32.mrf.mxu0
  %v548 = vadd.f32 0.0, %v547
  %v549 = vpop.f32.mrf.mxu0
  %v550 = vadd.f32 0.0, %v549
  %v551 = vpop.f32.mrf.mxu0
  %v552 = vpop.f32.mrf.mxu0
  %553 = vdwg.mxu0
  %v554 = vld [vmem:[#allocation2 + $0x10] sm:$0xff]
  %v555 = vadd.f32 %v554, %v548
  %v556 = vld [vmem:[#allocation2 + $0x68] sm:$0xff]
  %v557 = vadd.f32 %v556, %v550
  %v558 = vxor.u32 %v555, 2147483648
  %v559 = vmul.f32 %v558, 1.442695
  %v560 = vpow.pop %v559
  %v561 = vadd.f32 %v560, 1.0
  %v562 = vrcp.pop %v561
  %v563 = vmul.f32 1.0, %v562
  %v564 = vtanh.pop %v555
  %v565 = vmul.f32 %v563, %v492
  %567 = vrot.lane.b32.xlu0 %v564, 64
  %v568 = vpop.permute.xlu0 %567
  %v570 = vmul.f32 %v563, %v568
  %572 = vrot.lane.b32.xlu0 %v570, 32
  %v573 = vpop.permute.xlu0 %572
  %v575 = vadd.f32 %v565, %v573
  %v576 = vtanh.pop %v575
  %578 = vrot.lane.b32.xlu0 %v576, 64
  %v579 = vpop.permute.xlu0 %578
  %v581 = vmul.f32 %v563, %v579
  %v582 = vxor.u32 %v557, 2147483648
  %v583 = vmul.f32 %v582, 1.442695
  %v584 = vpow.pop %v583
  %v585 = vadd.f32 %v584, 1.0
  %v586 = vrcp.pop %v585
  %v587 = vmul.f32 1.0, %v586
  %v588 = vtanh.pop %v557
  %v589 = vmul.f32 %v587, %v494
  %591 = vrot.lane.b32.xlu0 %v588, 64
  %v592 = vpop.permute.xlu0 %591
  %v594 = vmul.f32 %v587, %v592
  %596 = vrot.lane.b32.xlu0 %v594, 32
  %v597 = vpop.permute.xlu0 %596
  %v599 = vadd.f32 %v589, %v597
  %v600 = vtanh.pop %v599
  %602 = vrot.lane.b32.xlu0 %v600, 64
  %v603 = vpop.permute.xlu0 %602
  %v605 = vmul.f32 %v587, %v603
  %v606 = vsel %vm338, %v581, %v491
  %v607 = vsel %vm338, %v575, %v492
  %v608 = vsel %vm343, %v605, %v493
  %v609 = vsel %vm343, %v599, %v494
  %611 = vrot.lane.b32.xlu0 %v606, 32
  %v612 = vpop.permute.xlu0 %611
  %614 = vst.msk [vmem:[#allocation3 + $0x8] sm:$0xff] %vm56, %v612
  %616 = vrot.lane.b32.xlu0 %v608, 32
  %v617 = vpop.permute.xlu0 %616
  %619 = vst.msk [vmem:[#allocation4 + $0x30] sm:$0xff] %vm56, %v617
  %620 = vrot.lane.b32.xlu0 %v608, 64
  %v621 = vpop.permute.xlu0 %620
  %v623 = vsel %vm56, %v612, %v621
  %v624 = vpack.c.bf16 %v623, %v623
  %v626 = vsel %vm394, %v624, 0
  %628 = vmatprep.subr.bf16.mxu0 0
  %629 = vmatpush1.bf16.msra.mxu0 0
  %630 = vmatprep.subr.bf16.mxu0 0
  %631 = vmatpush1.bf16.msra.mxu0 0
  %632 = vmatprep.subr.bf16.mxu0 0
  %633 = vmatpush1.bf16.msra.mxu0 0
  %634 = vmatprep.subr.bf16.mxu0 0
  %635 = vmatpush1.bf16.msra.mxu0 0
  %636 = vmatprep.subr.bf16.mxu0 %v385
  %637 = vmatpush1.bf16.msra.mxu0 %v384
  %638 = vmatprep.subr.bf16.mxu0 %v383
  %639 = vmatpush1.bf16.msra.mxu0 %v382
  %640 = vmatprep.subr.bf16.mxu0 %v381
  %641 = vmatpush1.bf16.msra.mxu0 %v380
  %642 = vmatprep.subr.bf16.mxu0 %v379
  %643 = vmatpush1.bf16.msra.mxu0 %v378
  %644 = vmatprep.subr.bf16.mxu0 0
  %645 = vmatpush2.bf16.msra.mxu0 0
  %646 = vmatprep.subr.bf16.mxu0 0
  %647 = vmatpush2.bf16.msra.mxu0 0
  %648 = vmatprep.subr.bf16.mxu0 0
  %649 = vmatpush2.bf16.msra.mxu0 0
  %650 = vmatprep.subr.bf16.mxu0 0
  %651 = vmatpush2.bf16.msra.mxu0 0
  %652 = vmatprep.subr.bf16.mxu0 0
  %653 = vmatpush2.bf16.msra.mxu0 0
  %654 = vmatprep.subr.bf16.mxu0 0
  %655 = vmatpush2.bf16.msra.mxu0 0
  %656 = vmatprep.subr.bf16.mxu0 0
  %657 = vmatpush2.bf16.msra.mxu0 0
  %658 = vmatprep.subr.bf16.mxu0 0
  %659 = vmatpush2.bf16.msra.mxu0 0
  %660 = vmatprep.mubr.bf16.mxu0 0
  %661 = vmatmul.mubr.bf16.gmra.mxu0 %v626
  %v662 = vpop.f32.mrf.mxu0
  %v663 = vadd.f32 0.0, %v662
  %v664 = vpop.f32.mrf.mxu0
  %v665 = vadd.f32 0.0, %v664
  %v666 = vpop.f32.mrf.mxu0
  %v667 = vpop.f32.mrf.mxu0
  %668 = vdwg.mxu0
  %v669 = vld [vmem:[#allocation2 + $0x20] sm:$0xff]
  %v670 = vadd.f32 %v669, %v663
  %v671 = vld [vmem:[#allocation2 + $0x58] sm:$0xff]
  %v672 = vadd.f32 %v671, %v665
  %v673 = vxor.u32 %v670, 2147483648
  %v674 = vmul.f32 %v673, 1.442695
  %v675 = vpow.pop %v674
  %v676 = vadd.f32 %v675, 1.0
  %v677 = vrcp.pop %v676
  %v678 = vmul.f32 1.0, %v677
  %v679 = vtanh.pop %v670
  %v680 = vmul.f32 %v678, %v607
  %682 = vrot.lane.b32.xlu0 %v679, 64
  %v683 = vpop.permute.xlu0 %682
  %v685 = vmul.f32 %v678, %v683
  %687 = vrot.lane.b32.xlu0 %v685, 32
  %v688 = vpop.permute.xlu0 %687
  %v690 = vadd.f32 %v680, %v688
  %v691 = vtanh.pop %v690
  %693 = vrot.lane.b32.xlu0 %v691, 64
  %v694 = vpop.permute.xlu0 %693
  %v696 = vmul.f32 %v678, %v694
  %v697 = vxor.u32 %v672, 2147483648
  %v698 = vmul.f32 %v697, 1.442695
  %v699 = vpow.pop %v698
  %v700 = vadd.f32 %v699, 1.0
  %v701 = vrcp.pop %v700
  %v702 = vmul.f32 1.0, %v701
  %v703 = vtanh.pop %v672
  %v704 = vmul.f32 %v702, %v609
  %706 = vrot.lane.b32.xlu0 %v703, 64
  %v707 = vpop.permute.xlu0 %706
  %v709 = vmul.f32 %v702, %v707
  %711 = vrot.lane.b32.xlu0 %v709, 32
  %v712 = vpop.permute.xlu0 %711
  %v714 = vadd.f32 %v704, %v712
  %v715 = vtanh.pop %v714
  %717 = vrot.lane.b32.xlu0 %v715, 64
  %v718 = vpop.permute.xlu0 %717
  %v720 = vmul.f32 %v702, %v718
  %v721 = vsel %vm339, %v696, %v606
  %v722 = vsel %vm339, %v690, %v607
  %v723 = vsel %vm342, %v720, %v608
  %v724 = vsel %vm342, %v714, %v609
  %726 = vrot.lane.b32.xlu0 %v721, 32
  %v727 = vpop.permute.xlu0 %726
  %729 = vst.msk [vmem:[#allocation3 + $0x10] sm:$0xff] %vm56, %v727
  %731 = vrot.lane.b32.xlu0 %v723, 32
  %v732 = vpop.permute.xlu0 %731
  %734 = vst.msk [vmem:[#allocation4 + $0x28] sm:$0xff] %vm56, %v732
  %735 = vrot.lane.b32.xlu0 %v723, 64
  %v736 = vpop.permute.xlu0 %735
  %v738 = vsel %vm56, %v727, %v736
  %v739 = vpack.c.bf16 %v738, %v738
  %v741 = vsel %vm394, %v739, 0
  %743 = vmatprep.subr.bf16.mxu0 0
  %744 = vmatpush1.bf16.msra.mxu0 0
  %745 = vmatprep.subr.bf16.mxu0 0
  %746 = vmatpush1.bf16.msra.mxu0 0
  %747 = vmatprep.subr.bf16.mxu0 0
  %748 = vmatpush1.bf16.msra.mxu0 0
  %749 = vmatprep.subr.bf16.mxu0 0
  %750 = vmatpush1.bf16.msra.mxu0 0
  %751 = vmatprep.subr.bf16.mxu0 %v385
  %752 = vmatpush1.bf16.msra.mxu0 %v384
  %753 = vmatprep.subr.bf16.mxu0 %v383
  %754 = vmatpush1.bf16.msra.mxu0 %v382
  %755 = vmatprep.subr.bf16.mxu0 %v381
  %756 = vmatpush1.bf16.msra.mxu0 %v380
  %757 = vmatprep.subr.bf16.mxu0 %v379
  %758 = vmatpush1.bf16.msra.mxu0 %v378
  %759 = vmatprep.subr.bf16.mxu0 0
  %760 = vmatpush2.bf16.msra.mxu0 0
  %761 = vmatprep.subr.bf16.mxu0 0
  %762 = vmatpush2.bf16.msra.mxu0 0
  %763 = vmatprep.subr.bf16.mxu0 0
  %764 = vmatpush2.bf16.msra.mxu0 0
  %765 = vmatprep.subr.bf16.mxu0 0
  %766 = vmatpush2.bf16.msra.mxu0 0
  %767 = vmatprep.subr.bf16.mxu0 0
  %768 = vmatpush2.bf16.msra.mxu0 0
  %769 = vmatprep.subr.bf16.mxu0 0
  %770 = vmatpush2.bf16.msra.mxu0 0
  %771 = vmatprep.subr.bf16.mxu0 0
  %772 = vmatpush2.bf16.msra.mxu0 0
  %773 = vmatprep.subr.bf16.mxu0 0
  %774 = vmatpush2.bf16.msra.mxu0 0
  %775 = vmatprep.mubr.bf16.mxu0 0
  %776 = vmatmul.mubr.bf16.gmra.mxu0 %v741
  %v777 = vpop.f32.mrf.mxu0
  %v778 = vadd.f32 0.0, %v777
  %v779 = vpop.f32.mrf.mxu0
  %v780 = vadd.f32 0.0, %v779
  %v781 = vpop.f32.mrf.mxu0
  %v782 = vpop.f32.mrf.mxu0
  %783 = vdwg.mxu0
  %v784 = vld [vmem:[#allocation2 + $0x30] sm:$0xff]
  %v785 = vadd.f32 %v784, %v778
  %v786 = vld [vmem:[#allocation2 + $0x48] sm:$0xff]
  %v787 = vadd.f32 %v786, %v780
  %v788 = vxor.u32 %v785, 2147483648
  %v789 = vmul.f32 %v788, 1.442695
  %v790 = vpow.pop %v789
  %v791 = vadd.f32 %v790, 1.0
  %v792 = vrcp.pop %v791
  %v793 = vmul.f32 1.0, %v792
  %v794 = vtanh.pop %v785
  %v795 = vmul.f32 %v793, %v722
  %797 = vrot.lane.b32.xlu0 %v794, 64
  %v798 = vpop.permute.xlu0 %797
  %v800 = vmul.f32 %v793, %v798
  %802 = vrot.lane.b32.xlu0 %v800, 32
  %v803 = vpop.permute.xlu0 %802
  %v805 = vadd.f32 %v795, %v803
  %v806 = vtanh.pop %v805
  %808 = vrot.lane.b32.xlu0 %v806, 64
  %v809 = vpop.permute.xlu0 %808
  %v811 = vmul.f32 %v793, %v809
  %v812 = vxor.u32 %v787, 2147483648
  %v813 = vmul.f32 %v812, 1.442695
  %v814 = vpow.pop %v813
  %v815 = vadd.f32 %v814, 1.0
  %v816 = vrcp.pop %v815
  %v817 = vmul.f32 1.0, %v816
  %v818 = vtanh.pop %v787
  %v819 = vmul.f32 %v817, %v724
  %821 = vrot.lane.b32.xlu0 %v818, 64
  %v822 = vpop.permute.xlu0 %821
  %v824 = vmul.f32 %v817, %v822
  %826 = vrot.lane.b32.xlu0 %v824, 32
  %v827 = vpop.permute.xlu0 %826
  %v829 = vadd.f32 %v819, %v827
  %v830 = vtanh.pop %v829
  %832 = vrot.lane.b32.xlu0 %v830, 64
  %v833 = vpop.permute.xlu0 %832
  %v835 = vmul.f32 %v817, %v833
  %v836 = vsel %vm340, %v811, %v721
  %v837 = vsel %vm340, %v805, %v722
  %v838 = vsel %vm341, %v835, %v723
  %v839 = vsel %vm341, %v829, %v724
  %841 = vrot.lane.b32.xlu0 %v836, 32
  %v842 = vpop.permute.xlu0 %841
  %844 = vst.msk [vmem:[#allocation3 + $0x18] sm:$0xff] %vm56, %v842
  %846 = vrot.lane.b32.xlu0 %v838, 32
  %v847 = vpop.permute.xlu0 %846
  %849 = vst.msk [vmem:[#allocation4 + $0x20] sm:$0xff] %vm56, %v847
  %850 = vrot.lane.b32.xlu0 %v838, 64
  %v851 = vpop.permute.xlu0 %850
  %v853 = vsel %vm56, %v842, %v851
  %v854 = vpack.c.bf16 %v853, %v853
  %v856 = vsel %vm394, %v854, 0
  %858 = vmatprep.subr.bf16.mxu0 0
  %859 = vmatpush1.bf16.msra.mxu0 0
  %860 = vmatprep.subr.bf16.mxu0 0
  %861 = vmatpush1.bf16.msra.mxu0 0
  %862 = vmatprep.subr.bf16.mxu0 0
  %863 = vmatpush1.bf16.msra.mxu0 0
  %864 = vmatprep.subr.bf16.mxu0 0
  %865 = vmatpush1.bf16.msra.mxu0 0
  %866 = vmatprep.subr.bf16.mxu0 %v385
  %867 = vmatpush1.bf16.msra.mxu0 %v384
  %868 = vmatprep.subr.bf16.mxu0 %v383
  %869 = vmatpush1.bf16.msra.mxu0 %v382
  %870 = vmatprep.subr.bf16.mxu0 %v381
  %871 = vmatpush1.bf16.msra.mxu0 %v380
  %872 = vmatprep.subr.bf16.mxu0 %v379
  %873 = vmatpush1.bf16.msra.mxu0 %v378
  %874 = vmatprep.subr.bf16.mxu0 0
  %875 = vmatpush2.bf16.msra.mxu0 0
  %876 = vmatprep.subr.bf16.mxu0 0
  %877 = vmatpush2.bf16.msra.mxu0 0
  %878 = vmatprep.subr.bf16.mxu0 0
  %879 = vmatpush2.bf16.msra.mxu0 0
  %880 = vmatprep.subr.bf16.mxu0 0
  %881 = vmatpush2.bf16.msra.mxu0 0
  %882 = vmatprep.subr.bf16.mxu0 0
  %883 = vmatpush2.bf16.msra.mxu0 0
  %884 = vmatprep.subr.bf16.mxu0 0
  %885 = vmatpush2.bf16.msra.mxu0 0
  %886 = vmatprep.subr.bf16.mxu0 0
  %887 = vmatpush2.bf16.msra.mxu0 0
  %888 = vmatprep.subr.bf16.mxu0 0
  %889 = vmatpush2.bf16.msra.mxu0 0
  %890 = vmatprep.mubr.bf16.mxu0 0
  %891 = vmatmul.mubr.bf16.gmra.mxu0 %v856
  %v892 = vpop.f32.mrf.mxu0
  %v893 = vadd.f32 0.0, %v892
  %v894 = vpop.f32.mrf.mxu0
  %v895 = vadd.f32 0.0, %v894
  %v896 = vpop.f32.mrf.mxu0
  %v897 = vpop.f32.mrf.mxu0
  %898 = vdwg.mxu0
  %v899 = vld [vmem:[#allocation2 + $0x40] sm:$0xff]
  %v900 = vadd.f32 %v899, %v893
  %v901 = vld [vmem:[#allocation2 + $0x38] sm:$0xff]
  %v902 = vadd.f32 %v901, %v895
  %v903 = vxor.u32 %v900, 2147483648
  %v904 = vmul.f32 %v903, 1.442695
  %v905 = vpow.pop %v904
  %v906 = vadd.f32 %v905, 1.0
  %v907 = vrcp.pop %v906
  %v908 = vmul.f32 1.0, %v907
  %v909 = vtanh.pop %v900
  %v910 = vmul.f32 %v908, %v837
  %912 = vrot.lane.b32.xlu0 %v909, 64
  %v913 = vpop.permute.xlu0 %912
  %v915 = vmul.f32 %v908, %v913
  %917 = vrot.lane.b32.xlu0 %v915, 32
  %v918 = vpop.permute.xlu0 %917
  %v920 = vadd.f32 %v910, %v918
  %v921 = vtanh.pop %v920
  %923 = vrot.lane.b32.xlu0 %v921, 64
  %v924 = vpop.permute.xlu0 %923
  %v926 = vmul.f32 %v908, %v924
  %v927 = vxor.u32 %v902, 2147483648
  %v928 = vmul.f32 %v927, 1.442695
  %v929 = vpow.pop %v928
  %v930 = vadd.f32 %v929, 1.0
  %v931 = vrcp.pop %v930
  %v932 = vmul.f32 1.0, %v931
  %v933 = vtanh.pop %v902
  %v934 = vmul.f32 %v932, %v839
  %936 = vrot.lane.b32.xlu0 %v933, 64
  %v937 = vpop.permute.xlu0 %936
  %v939 = vmul.f32 %v932, %v937
  %941 = vrot.lane.b32.xlu0 %v939, 32
  %v942 = vpop.permute.xlu0 %941
  %v944 = vadd.f32 %v934, %v942
  %v945 = vtanh.pop %v944
  %947 = vrot.lane.b32.xlu0 %v945, 64
  %v948 = vpop.permute.xlu0 %947
  %v950 = vmul.f32 %v932, %v948
  %v951 = vsel %vm341, %v926, %v836
  %v952 = vsel %vm341, %v920, %v837
  %v953 = vsel %vm340, %v950, %v838
  %v954 = vsel %vm340, %v944, %v839
  %956 = vrot.lane.b32.xlu0 %v951, 32
  %v957 = vpop.permute.xlu0 %956
  %959 = vst.msk [vmem:[#allocation3 + $0x20] sm:$0xff] %vm56, %v957
  %961 = vrot.lane.b32.xlu0 %v953, 32
  %v962 = vpop.permute.xlu0 %961
  %964 = vst.msk [vmem:[#allocation4 + $0x18] sm:$0xff] %vm56, %v962
  %965 = vrot.lane.b32.xlu0 %v953, 64
  %v966 = vpop.permute.xlu0 %965
  %v968 = vsel %vm56, %v957, %v966
  %v969 = vpack.c.bf16 %v968, %v968
  %v971 = vsel %vm394, %v969, 0
  %973 = vmatprep.subr.bf16.mxu0 0
  %974 = vmatpush1.bf16.msra.mxu0 0
  %975 = vmatprep.subr.bf16.mxu0 0
  %976 = vmatpush1.bf16.msra.mxu0 0
  %977 = vmatprep.subr.bf16.mxu0 0
  %978 = vmatpush1.bf16.msra.mxu0 0
  %979 = vmatprep.subr.bf16.mxu0 0
  %980 = vmatpush1.bf16.msra.mxu0 0
  %981 = vmatprep.subr.bf16.mxu0 %v385
  %982 = vmatpush1.bf16.msra.mxu0 %v384
  %983 = vmatprep.subr.bf16.mxu0 %v383
  %984 = vmatpush1.bf16.msra.mxu0 %v382
  %985 = vmatprep.subr.bf16.mxu0 %v381
  %986 = vmatpush1.bf16.msra.mxu0 %v380
  %987 = vmatprep.subr.bf16.mxu0 %v379
  %988 = vmatpush1.bf16.msra.mxu0 %v378
  %989 = vmatprep.subr.bf16.mxu0 0
  %990 = vmatpush2.bf16.msra.mxu0 0
  %991 = vmatprep.subr.bf16.mxu0 0
  %992 = vmatpush2.bf16.msra.mxu0 0
  %993 = vmatprep.subr.bf16.mxu0 0
  %994 = vmatpush2.bf16.msra.mxu0 0
  %995 = vmatprep.subr.bf16.mxu0 0
  %996 = vmatpush2.bf16.msra.mxu0 0
  %997 = vmatprep.subr.bf16.mxu0 0
  %998 = vmatpush2.bf16.msra.mxu0 0
  %999 = vmatprep.subr.bf16.mxu0 0
  %1000 = vmatpush2.bf16.msra.mxu0 0
  %1001 = vmatprep.subr.bf16.mxu0 0
  %1002 = vmatpush2.bf16.msra.mxu0 0
  %1003 = vmatprep.subr.bf16.mxu0 0
  %1004 = vmatpush2.bf16.msra.mxu0 0
  %1005 = vmatprep.mubr.bf16.mxu0 0
  %1006 = vmatmul.mubr.bf16.gmra.mxu0 %v971
  %v1007 = vpop.f32.mrf.mxu0
  %v1008 = vadd.f32 0.0, %v1007
  %v1009 = vpop.f32.mrf.mxu0
  %v1010 = vadd.f32 0.0, %v1009
  %v1011 = vpop.f32.mrf.mxu0
  %v1012 = vpop.f32.mrf.mxu0
  %1013 = vdwg.mxu0
  %v1014 = vld [vmem:[#allocation2 + $0x50] sm:$0xff]
  %v1015 = vadd.f32 %v1014, %v1008
  %v1016 = vld [vmem:[#allocation2 + $0x28] sm:$0xff]
  %v1017 = vadd.f32 %v1016, %v1010
  %v1018 = vxor.u32 %v1015, 2147483648
  %v1019 = vmul.f32 %v1018, 1.442695
  %v1020 = vpow.pop %v1019
  %v1021 = vadd.f32 %v1020, 1.0
  %v1022 = vrcp.pop %v1021
  %v1023 = vmul.f32 1.0, %v1022
  %v1024 = vtanh.pop %v1015
  %v1025 = vmul.f32 %v1023, %v952
  %1027 = vrot.lane.b32.xlu0 %v1024, 64
  %v1028 = vpop.permute.xlu0 %1027
  %v1030 = vmul.f32 %v1023, %v1028
  %1032 = vrot.lane.b32.xlu0 %v1030, 32
  %v1033 = vpop.permute.xlu0 %1032
  %v1035 = vadd.f32 %v1025, %v1033
  %v1036 = vtanh.pop %v1035
  %1038 = vrot.lane.b32.xlu0 %v1036, 64
  %v1039 = vpop.permute.xlu0 %1038
  %v1041 = vmul.f32 %v1023, %v1039
  %v1042 = vxor.u32 %v1017, 2147483648
  %v1043 = vmul.f32 %v1042, 1.442695
  %v1044 = vpow.pop %v1043
  %v1045 = vadd.f32 %v1044, 1.0
  %v1046 = vrcp.pop %v1045
  %v1047 = vmul.f32 1.0, %v1046
  %v1048 = vtanh.pop %v1017
  %v1049 = vmul.f32 %v1047, %v954
  %1051 = vrot.lane.b32.xlu0 %v1048, 64
  %v1052 = vpop.permute.xlu0 %1051
  %v1054 = vmul.f32 %v1047, %v1052
  %1056 = vrot.lane.b32.xlu0 %v1054, 32
  %v1057 = vpop.permute.xlu0 %1056
  %v1059 = vadd.f32 %v1049, %v1057
  %v1060 = vtanh.pop %v1059
  %1062 = vrot.lane.b32.xlu0 %v1060, 64
  %v1063 = vpop.permute.xlu0 %1062
  %v1065 = vmul.f32 %v1047, %v1063
  %v1066 = vsel %vm342, %v1041, %v951
  %v1067 = vsel %vm342, %v1035, %v952
  %v1068 = vsel %vm339, %v1065, %v953
  %v1069 = vsel %vm339, %v1059, %v954
  %1071 = vrot.lane.b32.xlu0 %v1066, 32
  %v1072 = vpop.permute.xlu0 %1071
  %1074 = vst.msk [vmem:[#allocation3 + $0x28] sm:$0xff] %vm56, %v1072
  %1076 = vrot.lane.b32.xlu0 %v1068, 32
  %v1077 = vpop.permute.xlu0 %1076
  %1079 = vst.msk [vmem:[#allocation4 + $0x10] sm:$0xff] %vm56, %v1077
  %1080 = vrot.lane.b32.xlu0 %v1068, 64
  %v1081 = vpop.permute.xlu0 %1080
  %v1083 = vsel %vm56, %v1072, %v1081
  %v1084 = vpack.c.bf16 %v1083, %v1083
  %v1086 = vsel %vm394, %v1084, 0
  %1088 = vmatprep.subr.bf16.mxu0 0
  %1089 = vmatpush1.bf16.msra.mxu0 0
  %1090 = vmatprep.subr.bf16.mxu0 0
  %1091 = vmatpush1.bf16.msra.mxu0 0
  %1092 = vmatprep.subr.bf16.mxu0 0
  %1093 = vmatpush1.bf16.msra.mxu0 0
  %1094 = vmatprep.subr.bf16.mxu0 0
  %1095 = vmatpush1.bf16.msra.mxu0 0
  %1096 = vmatprep.subr.bf16.mxu0 %v385
  %1097 = vmatpush1.bf16.msra.mxu0 %v384
  %1098 = vmatprep.subr.bf16.mxu0 %v383
  %1099 = vmatpush1.bf16.msra.mxu0 %v382
  %1100 = vmatprep.subr.bf16.mxu0 %v381
  %1101 = vmatpush1.bf16.msra.mxu0 %v380
  %1102 = vmatprep.subr.bf16.mxu0 %v379
  %1103 = vmatpush1.bf16.msra.mxu0 %v378
  %1104 = vmatprep.subr.bf16.mxu0 0
  %1105 = vmatpush2.bf16.msra.mxu0 0
  %1106 = vmatprep.subr.bf16.mxu0 0
  %1107 = vmatpush2.bf16.msra.mxu0 0
  %1108 = vmatprep.subr.bf16.mxu0 0
  %1109 = vmatpush2.bf16.msra.mxu0 0
  %1110 = vmatprep.subr.bf16.mxu0 0
  %1111 = vmatpush2.bf16.msra.mxu0 0
  %1112 = vmatprep.subr.bf16.mxu0 0
  %1113 = vmatpush2.bf16.msra.mxu0 0
  %1114 = vmatprep.subr.bf16.mxu0 0
  %1115 = vmatpush2.bf16.msra.mxu0 0
  %1116 = vmatprep.subr.bf16.mxu0 0
  %1117 = vmatpush2.bf16.msra.mxu0 0
  %1118 = vmatprep.subr.bf16.mxu0 0
  %1119 = vmatpush2.bf16.msra.mxu0 0
  %1120 = vmatprep.mubr.bf16.mxu0 0
  %1121 = vmatmul.mubr.bf16.gmra.mxu0 %v1086
  %v1122 = vpop.f32.mrf.mxu0
  %v1123 = vadd.f32 0.0, %v1122
  %v1124 = vpop.f32.mrf.mxu0
  %v1125 = vadd.f32 0.0, %v1124
  %v1126 = vpop.f32.mrf.mxu0
  %v1127 = vpop.f32.mrf.mxu0
  %1128 = vdwg.mxu0
  %v1129 = vld [vmem:[#allocation2 + $0x60] sm:$0xff]
  %v1130 = vadd.f32 %v1129, %v1123
  %v1131 = vld [vmem:[#allocation2 + $0x18] sm:$0xff]
  %v1132 = vadd.f32 %v1131, %v1125
  %v1133 = vxor.u32 %v1130, 2147483648
  %v1134 = vmul.f32 %v1133, 1.442695
  %v1135 = vpow.pop %v1134
  %v1136 = vadd.f32 %v1135, 1.0
  %v1137 = vrcp.pop %v1136
  %v1138 = vmul.f32 1.0, %v1137
  %v1139 = vtanh.pop %v1130
  %v1140 = vmul.f32 %v1138, %v1067
  %1142 = vrot.lane.b32.xlu0 %v1139, 64
  %v1143 = vpop.permute.xlu0 %1142
  %v1145 = vmul.f32 %v1138, %v1143
  %1147 = vrot.lane.b32.xlu0 %v1145, 32
  %v1148 = vpop.permute.xlu0 %1147
  %v1150 = vadd.f32 %v1140, %v1148
  %v1151 = vtanh.pop %v1150
  %1153 = vrot.lane.b32.xlu0 %v1151, 64
  %v1154 = vpop.permute.xlu0 %1153
  %v1156 = vmul.f32 %v1138, %v1154
  %v1157 = vxor.u32 %v1132, 2147483648
  %v1158 = vmul.f32 %v1157, 1.442695
  %v1159 = vpow.pop %v1158
  %v1160 = vadd.f32 %v1159, 1.0
  %v1161 = vrcp.pop %v1160
  %v1162 = vmul.f32 1.0, %v1161
  %v1163 = vtanh.pop %v1132
  %v1164 = vmul.f32 %v1162, %v1069
  %1166 = vrot.lane.b32.xlu0 %v1163, 64
  %v1167 = vpop.permute.xlu0 %1166
  %v1169 = vmul.f32 %v1162, %v1167
  %1171 = vrot.lane.b32.xlu0 %v1169, 32
  %v1172 = vpop.permute.xlu0 %1171
  %v1174 = vadd.f32 %v1164, %v1172
  %v1175 = vtanh.pop %v1174
  %1177 = vrot.lane.b32.xlu0 %v1175, 64
  %v1178 = vpop.permute.xlu0 %1177
  %v1180 = vmul.f32 %v1162, %v1178
  %v1181 = vsel %vm343, %v1156, %v1066
  %v1182 = vsel %vm343, %v1150, %v1067
  %v1183 = vsel %vm338, %v1180, %v1068
  %v1184 = vsel %vm338, %v1174, %v1069
  %1186 = vrot.lane.b32.xlu0 %v1181, 32
  %v1187 = vpop.permute.xlu0 %1186
  %1189 = vst.msk [vmem:[#allocation3 + $0x30] sm:$0xff] %vm56, %v1187
  %1191 = vrot.lane.b32.xlu0 %v1183, 32
  %v1192 = vpop.permute.xlu0 %1191
  %1194 = vst.msk [vmem:[#allocation4 + $0x8] sm:$0xff] %vm56, %v1192
  %1195 = vrot.lane.b32.xlu0 %v1183, 64
  %v1196 = vpop.permute.xlu0 %1195
  %v1198 = vsel %vm56, %v1187, %v1196
  %v1199 = vpack.c.bf16 %v1198, %v1198
  %v1201 = vsel %vm394, %v1199, 0
  %1203 = vmatprep.subr.bf16.mxu0 0
  %1204 = vmatpush1.bf16.msra.mxu0 0
  %1205 = vmatprep.subr.bf16.mxu0 0
  %1206 = vmatpush1.bf16.msra.mxu0 0
  %1207 = vmatprep.subr.bf16.mxu0 0
  %1208 = vmatpush1.bf16.msra.mxu0 0
  %1209 = vmatprep.subr.bf16.mxu0 0
  %1210 = vmatpush1.bf16.msra.mxu0 0
  %1211 = vmatprep.subr.bf16.mxu0 %v385
  %1212 = vmatpush1.bf16.msra.mxu0 %v384
  %1213 = vmatprep.subr.bf16.mxu0 %v383
  %1214 = vmatpush1.bf16.msra.mxu0 %v382
  %1215 = vmatprep.subr.bf16.mxu0 %v381
  %1216 = vmatpush1.bf16.msra.mxu0 %v380
  %1217 = vmatprep.subr.bf16.mxu0 %v379
  %1218 = vmatpush1.bf16.msra.mxu0 %v378
  %1219 = vmatprep.subr.bf16.mxu0 0
  %1220 = vmatpush2.bf16.msra.mxu0 0
  %1221 = vmatprep.subr.bf16.mxu0 0
  %1222 = vmatpush2.bf16.msra.mxu0 0
  %1223 = vmatprep.subr.bf16.mxu0 0
  %1224 = vmatpush2.bf16.msra.mxu0 0
  %1225 = vmatprep.subr.bf16.mxu0 0
  %1226 = vmatpush2.bf16.msra.mxu0 0
  %1227 = vmatprep.subr.bf16.mxu0 0
  %1228 = vmatpush2.bf16.msra.mxu0 0
  %1229 = vmatprep.subr.bf16.mxu0 0
  %1230 = vmatpush2.bf16.msra.mxu0 0
  %1231 = vmatprep.subr.bf16.mxu0 0
  %1232 = vmatpush2.bf16.msra.mxu0 0
  %1233 = vmatprep.subr.bf16.mxu0 0
  %1234 = vmatpush2.bf16.msra.mxu0 0
  %1235 = vmatprep.mubr.bf16.mxu0 0
  %1236 = vmatmul.mubr.bf16.gmra.mxu0 %v1201
  %v1237 = vpop.f32.mrf.mxu0
  %v1238 = vadd.f32 0.0, %v1237
  %v1239 = vpop.f32.mrf.mxu0
  %v1240 = vadd.f32 0.0, %v1239
  %v1241 = vpop.f32.mrf.mxu0
  %v1242 = vpop.f32.mrf.mxu0
  %1243 = vdwg.mxu0
  %v1244 = vld [vmem:[#allocation2 + $0x70] sm:$0xff]
  %v1245 = vadd.f32 %v1244, %v1238
  %v1246 = vld [vmem:[#allocation2 + $0x8] sm:$0xff]
  %v1247 = vadd.f32 %v1246, %v1240
  %v1248 = vxor.u32 %v1245, 2147483648
  %v1249 = vmul.f32 %v1248, 1.442695
  %v1250 = vpow.pop %v1249
  %v1251 = vadd.f32 %v1250, 1.0
  %v1252 = vrcp.pop %v1251
  %v1253 = vmul.f32 1.0, %v1252
  %v1254 = vtanh.pop %v1245
  %v1255 = vmul.f32 %v1253, %v1182
  %1257 = vrot.lane.b32.xlu0 %v1254, 64
  %v1258 = vpop.permute.xlu0 %1257
  %v1260 = vmul.f32 %v1253, %v1258
  %1262 = vrot.lane.b32.xlu0 %v1260, 32
  %v1263 = vpop.permute.xlu0 %1262
  %v1265 = vadd.f32 %v1255, %v1263
  %v1266 = vtanh.pop %v1265
  %1268 = vrot.lane.b32.xlu0 %v1266, 64
  %v1269 = vpop.permute.xlu0 %1268
  %v1271 = vmul.f32 %v1253, %v1269
  %v1272 = vxor.u32 %v1247, 2147483648
  %v1273 = vmul.f32 %v1272, 1.442695
  %v1274 = vpow.pop %v1273
  %v1275 = vadd.f32 %v1274, 1.0
  %v1276 = vrcp.pop %v1275
  %v1277 = vmul.f32 1.0, %v1276
  %v1278 = vtanh.pop %v1247
  %v1279 = vmul.f32 %v1277, %v1184
  %1281 = vrot.lane.b32.xlu0 %v1278, 64
  %v1282 = vpop.permute.xlu0 %1281
  %v1284 = vmul.f32 %v1277, %v1282
  %1286 = vrot.lane.b32.xlu0 %v1284, 32
  %v1287 = vpop.permute.xlu0 %1286
  %v1289 = vadd.f32 %v1279, %v1287
  %v1290 = vtanh.pop %v1289
  %1292 = vrot.lane.b32.xlu0 %v1290, 64
  %v1293 = vpop.permute.xlu0 %1292
  %v1295 = vmul.f32 %v1277, %v1293
  %v1296 = vsel %vm344, %v1271, %v1181
  %v1297 = vsel %vm337, %v1295, %v1183
  %1299 = vrot.lane.b32.xlu0 %v1296, 32
  %v1300 = vpop.permute.xlu0 %1299
  %1302 = vst.msk [vmem:[#allocation3 + $0x38] sm:$0xff] %vm56, %v1300
  %1304 = vrot.lane.b32.xlu0 %v1297, 32
  %v1305 = vpop.permute.xlu0 %1304
  %1307 = vst.msk [vmem:[#allocation4] sm:$0xff] %vm56, %v1305
  %v1308 = vld [vmem:[#allocation3] sm:$0xff]
  %v1309 = vld [vmem:[#allocation3 + $0x8] sm:$0xff]
  %v1310 = vld [vmem:[#allocation3 + $0x10] sm:$0xff]
  %v1311 = vld [vmem:[#allocation3 + $0x18] sm:$0xff]
  %v1312 = vld [vmem:[#allocation3 + $0x20] sm:$0xff]
  %v1313 = vld [vmem:[#allocation3 + $0x28] sm:$0xff]
  %v1314 = vld [vmem:[#allocation3 + $0x30] sm:$0xff]
  %v1315 = vld [vmem:[#allocation3 + $0x38] sm:$0xff]
  %v1316 = vpack.c.bf16 %v1309, %v1308
  %v1317 = vpack.c.bf16 %v1311, %v1310
  %v1318 = vpack.c.bf16 %v1313, %v1312
  %v1319 = vpack.c.bf16 %v1315, %v1314
  %v1320 = vld [vmem:[%s7] sm:$0xff]
  %v1321 = vld [vmem:[%s7 + $0x8] sm:$0xff]
  %v1322 = vld [vmem:[%s7 + $0x10] sm:$0xff]
  %v1323 = vld [vmem:[%s7 + $0x18] sm:$0xff]
  %v1324 = vld [vmem:[#allocation4] sm:$0xff]
  %v1325 = vld [vmem:[#allocation4 + $0x8] sm:$0xff]
  %v1326 = vld [vmem:[#allocation4 + $0x10] sm:$0xff]
  %v1327 = vld [vmem:[#allocation4 + $0x18] sm:$0xff]
  %v1328 = vld [vmem:[#allocation4 + $0x20] sm:$0xff]
  %v1329 = vld [vmem:[#allocation4 + $0x28] sm:$0xff]
  %v1330 = vld [vmem:[#allocation4 + $0x30] sm:$0xff]
  %v1331 = vld [vmem:[#allocation4 + $0x38] sm:$0xff]
  %v1332 = vpack.c.bf16 %v1325, %v1324
  %v1333 = vpack.c.bf16 %v1327, %v1326
  %v1334 = vpack.c.bf16 %v1329, %v1328
  %v1335 = vpack.c.bf16 %v1331, %v1330
  %v1336 = vld [vmem:[%s8] sm:$0xff]
  %v1337 = vld [vmem:[%s8 + $0x8] sm:$0xff]
  %v1338 = vld [vmem:[%s8 + $0x10] sm:$0xff]
  %v1339 = vld [vmem:[%s8 + $0x18] sm:$0xff]
  %v1344 = vunpack.c.l.b16 %v1336
  %v1345 = vunpack.c.h.b16 %v1336
  %v1346 = vunpack.c.l.b16 %v1337
  %v1347 = vunpack.c.h.b16 %v1337
  %v1348 = vunpack.c.l.b16 %v1338
  %v1349 = vunpack.c.h.b16 %v1338
  %v1350 = vunpack.c.l.b16 %v1339
  %v1351 = vunpack.c.h.b16 %v1339
  %v1352 = vpack.c.b16 %v1346, %v1344
  %v1353 = vpack.c.b16 %v1347, %v1345
  %v1354 = vpack.c.b16 %v1350, %v1348
  %v1355 = vpack.c.b16 %v1351, %v1349
  %v1361 = vsel %vm56, %v1332, 0
  %v1364 = vsel %vm56, %v1333, 0
  %v1367 = vsel %vm56, %v1334, 0
  %v1370 = vsel %vm56, %v1335, 0
  %1372 = vmatprep.subr.bf16.mxu0 0
  %1373 = vmatpush1.bf16.msra.mxu0 0
  %1374 = vmatprep.subr.bf16.mxu0 0
  %1375 = vmatpush1.bf16.msra.mxu0 0
  %1376 = vmatprep.subr.bf16.mxu0 0
  %1377 = vmatpush1.bf16.msra.mxu0 0
  %1378 = vmatprep.subr.bf16.mxu0 0
  %1379 = vmatpush1.bf16.msra.mxu0 0
  %1380 = vmatprep.subr.bf16.mxu0 0
  %1381 = vmatpush1.bf16.msra.mxu0 0
  %1382 = vmatprep.subr.bf16.mxu0 0
  %1383 = vmatpush1.bf16.msra.mxu0 0
  %1384 = vmatprep.subr.bf16.mxu0 %v1355
  %1385 = vmatpush1.bf16.msra.mxu0 %v1354
  %1386 = vmatprep.subr.bf16.mxu0 %v1353
  %1387 = vmatpush1.bf16.msra.mxu0 %v1352
  %1388 = vmatprep.subr.bf16.mxu0 0
  %1389 = vmatpush2.bf16.msra.mxu0 0
  %1390 = vmatprep.subr.bf16.mxu0 0
  %1391 = vmatpush2.bf16.msra.mxu0 0
  %1392 = vmatprep.subr.bf16.mxu0 0
  %1393 = vmatpush2.bf16.msra.mxu0 0
  %1394 = vmatprep.subr.bf16.mxu0 0
  %1395 = vmatpush2.bf16.msra.mxu0 0
  %1396 = vmatprep.subr.bf16.mxu0 0
  %1397 = vmatpush2.bf16.msra.mxu0 0
  %1398 = vmatprep.subr.bf16.mxu0 0
  %1399 = vmatpush2.bf16.msra.mxu0 0
  %1400 = vmatprep.subr.bf16.mxu0 0
  %1401 = vmatpush2.bf16.msra.mxu0 0
  %1402 = vmatprep.subr.bf16.mxu0 0
  %1403 = vmatpush2.bf16.msra.mxu0 0
  %1404 = vmatprep.mubr.bf16.mxu0 0
  %1405 = vmatmul.mubr.bf16.gmra.mxu0 %v1361
  %v1406 = vpop.f32.mrf.mxu0
  %v1407 = vadd.f32 0.0, %v1406
  %v1408 = vpop.f32.mrf.mxu0
  %v1409 = vadd.f32 0.0, %v1408
  %v1410 = vpop.f32.mrf.mxu0
  %v1411 = vadd.f32 0.0, %v1410
  %v1412 = vpop.f32.mrf.mxu0
  %v1413 = vadd.f32 0.0, %v1412
  %1414 = vmatprep.mubr.bf16.mxu0 0
  %1415 = vmatmul.mubr.bf16.gmra.mxu0 %v1364
  %v1416 = vpop.f32.mrf.mxu0
  %v1417 = vadd.f32 0.0, %v1416
  %v1418 = vpop.f32.mrf.mxu0
  %v1419 = vadd.f32 0.0, %v1418
  %v1420 = vpop.f32.mrf.mxu0
  %v1421 = vadd.f32 0.0, %v1420
  %v1422 = vpop.f32.mrf.mxu0
  %v1423 = vadd.f32 0.0, %v1422
  %1424 = vmatprep.mubr.bf16.mxu0 0
  %1425 = vmatmul.mubr.bf16.gmra.mxu0 %v1367
  %v1426 = vpop.f32.mrf.mxu0
  %v1427 = vadd.f32 0.0, %v1426
  %v1428 = vpop.f32.mrf.mxu0
  %v1429 = vadd.f32 0.0, %v1428
  %v1430 = vpop.f32.mrf.mxu0
  %v1431 = vadd.f32 0.0, %v1430
  %v1432 = vpop.f32.mrf.mxu0
  %v1433 = vadd.f32 0.0, %v1432
  %1434 = vmatprep.mubr.bf16.mxu0 0
  %1435 = vmatmul.mubr.bf16.gmra.mxu0 %v1370
  %v1436 = vpop.f32.mrf.mxu0
  %v1437 = vadd.f32 0.0, %v1436
  %v1438 = vpop.f32.mrf.mxu0
  %v1439 = vadd.f32 0.0, %v1438
  %v1440 = vpop.f32.mrf.mxu0
  %v1441 = vadd.f32 0.0, %v1440
  %v1442 = vpop.f32.mrf.mxu0
  %v1443 = vadd.f32 0.0, %v1442
  %1444 = vdwg.mxu0
  %v1449 = vunpack.c.l.b16 %v1320
  %v1450 = vunpack.c.h.b16 %v1320
  %v1451 = vunpack.c.l.b16 %v1321
  %v1452 = vunpack.c.h.b16 %v1321
  %v1453 = vunpack.c.l.b16 %v1322
  %v1454 = vunpack.c.h.b16 %v1322
  %v1455 = vunpack.c.l.b16 %v1323
  %v1456 = vunpack.c.h.b16 %v1323
  %v1457 = vpack.c.b16 %v1451, %v1449
  %v1458 = vpack.c.b16 %v1452, %v1450
  %v1459 = vpack.c.b16 %v1455, %v1453
  %v1460 = vpack.c.b16 %v1456, %v1454
  %v1466 = vsel %vm56, %v1316, 0
  %v1469 = vsel %vm56, %v1317, 0
  %v1472 = vsel %vm56, %v1318, 0
  %v1475 = vsel %vm56, %v1319, 0
  %1477 = vmatprep.subr.bf16.mxu0 0
  %1478 = vmatpush1.bf16.msra.mxu0 0
  %1479 = vmatprep.subr.bf16.mxu0 0
  %1480 = vmatpush1.bf16.msra.mxu0 0
  %1481 = vmatprep.subr.bf16.mxu0 0
  %1482 = vmatpush1.bf16.msra.mxu0 0
  %1483 = vmatprep.subr.bf16.mxu0 0
  %1484 = vmatpush1.bf16.msra.mxu0 0
  %1485 = vmatprep.subr.bf16.mxu0 0
  %1486 = vmatpush1.bf16.msra.mxu0 0
  %1487 = vmatprep.subr.bf16.mxu0 0
  %1488 = vmatpush1.bf16.msra.mxu0 0
  %1489 = vmatprep.subr.bf16.mxu0 %v1460
  %1490 = vmatpush1.bf16.msra.mxu0 %v1459
  %1491 = vmatprep.subr.bf16.mxu0 %v1458
  %1492 = vmatpush1.bf16.msra.mxu0 %v1457
  %1493 = vmatprep.subr.bf16.mxu0 0
  %1494 = vmatpush2.bf16.msra.mxu0 0
  %1495 = vmatprep.subr.bf16.mxu0 0
  %1496 = vmatpush2.bf16.msra.mxu0 0
  %1497 = vmatprep.subr.bf16.mxu0 0
  %1498 = vmatpush2.bf16.msra.mxu0 0
  %1499 = vmatprep.subr.bf16.mxu0 0
  %1500 = vmatpush2.bf16.msra.mxu0 0
  %1501 = vmatprep.subr.bf16.mxu0 0
  %1502 = vmatpush2.bf16.msra.mxu0 0
  %1503 = vmatprep.subr.bf16.mxu0 0
  %1504 = vmatpush2.bf16.msra.mxu0 0
  %1505 = vmatprep.subr.bf16.mxu0 0
  %1506 = vmatpush2.bf16.msra.mxu0 0
  %1507 = vmatprep.subr.bf16.mxu0 0
  %1508 = vmatpush2.bf16.msra.mxu0 0
  %1509 = vmatprep.mubr.bf16.mxu0 0
  %1510 = vmatmul.mubr.bf16.gmra.mxu0 %v1466
  %v1511 = vpop.f32.mrf.mxu0
  %v1512 = vadd.f32 %v1407, %v1511
  %v1513 = vpop.f32.mrf.mxu0
  %v1514 = vadd.f32 %v1409, %v1513
  %v1515 = vpop.f32.mrf.mxu0
  %v1516 = vadd.f32 %v1411, %v1515
  %v1517 = vpop.f32.mrf.mxu0
  %v1518 = vadd.f32 %v1413, %v1517
  %1519 = vmatprep.mubr.bf16.mxu0 0
  %1520 = vmatmul.mubr.bf16.gmra.mxu0 %v1469
  %v1521 = vpop.f32.mrf.mxu0
  %v1522 = vadd.f32 %v1417, %v1521
  %v1523 = vpop.f32.mrf.mxu0
  %v1524 = vadd.f32 %v1419, %v1523
  %v1525 = vpop.f32.mrf.mxu0
  %v1526 = vadd.f32 %v1421, %v1525
  %v1527 = vpop.f32.mrf.mxu0
  %v1528 = vadd.f32 %v1423, %v1527
  %1529 = vmatprep.mubr.bf16.mxu0 0
  %1530 = vmatmul.mubr.bf16.gmra.mxu0 %v1472
  %v1531 = vpop.f32.mrf.mxu0
  %v1532 = vadd.f32 %v1427, %v1531
  %v1533 = vpop.f32.mrf.mxu0
  %v1534 = vadd.f32 %v1429, %v1533
  %v1535 = vpop.f32.mrf.mxu0
  %v1536 = vadd.f32 %v1431, %v1535
  %v1537 = vpop.f32.mrf.mxu0
  %v1538 = vadd.f32 %v1433, %v1537
  %1539 = vmatprep.mubr.bf16.mxu0 0
  %1540 = vmatmul.mubr.bf16.gmra.mxu0 %v1475
  %v1541 = vpop.f32.mrf.mxu0
  %v1542 = vadd.f32 %v1437, %v1541
  %v1543 = vpop.f32.mrf.mxu0
  %v1544 = vadd.f32 %v1439, %v1543
  %v1545 = vpop.f32.mrf.mxu0
  %v1546 = vadd.f32 %v1441, %v1545
  %v1547 = vpop.f32.mrf.mxu0
  %v1548 = vadd.f32 %v1443, %v1547
  %1549 = vdwg.mxu0
  %v1550 = vld [vmem:[%s10] sm:$0x3]
  %v1552 = vlaneseq
  %v1553 = vshrl.u32 %v1552, 7
  %v1554 = vsub.s32 0, %v1553
  %v1555 = vrot.slane %v1550, %v1554
  %v1556 = vlaneseq
  %v1557 = vshrl.u32 %v1556, 7
  %v1558 = vsub.s32 1, %v1557
  %v1559 = vrot.slane %v1550, %v1558
  %v1562 = vadd.f32 %v1512, %v1555
  %v1563 = vadd.f32 %v1514, %v1559
  %v1564 = vadd.f32 %v1516, %v1555
  %v1565 = vadd.f32 %v1518, %v1559
  %v1566 = vadd.f32 %v1522, %v1555
  %v1567 = vadd.f32 %v1524, %v1559
  %v1568 = vadd.f32 %v1526, %v1555
  %v1569 = vadd.f32 %v1528, %v1559
  %v1570 = vadd.f32 %v1532, %v1555
  %v1571 = vadd.f32 %v1534, %v1559
  %v1572 = vadd.f32 %v1536, %v1555
  %v1573 = vadd.f32 %v1538, %v1559
  %v1574 = vadd.f32 %v1542, %v1555
  %v1575 = vadd.f32 %v1544, %v1559
  %v1576 = vadd.f32 %v1546, %v1555
  %v1577 = vadd.f32 %v1548, %v1559
  %1578 = vst [vmem:[#allocation2] sm:$0xff] %v1562
  %1579 = vst [vmem:[#allocation2 + $0x8] sm:$0xff] %v1563
  %1580 = vst [vmem:[#allocation2 + $0x10] sm:$0xff] %v1564
  %1581 = vst [vmem:[#allocation2 + $0x18] sm:$0xff] %v1565
  %1582 = vst [vmem:[#allocation2 + $0x20] sm:$0xff] %v1566
  %1583 = vst [vmem:[#allocation2 + $0x28] sm:$0xff] %v1567
  %1584 = vst [vmem:[#allocation2 + $0x30] sm:$0xff] %v1568
  %1585 = vst [vmem:[#allocation2 + $0x38] sm:$0xff] %v1569
  %1586 = vst [vmem:[#allocation2 + $0x40] sm:$0xff] %v1570
  %1587 = vst [vmem:[#allocation2 + $0x48] sm:$0xff] %v1571
  %1588 = vst [vmem:[#allocation2 + $0x50] sm:$0xff] %v1572
  %1589 = vst [vmem:[#allocation2 + $0x58] sm:$0xff] %v1573
  %1590 = vst [vmem:[#allocation2 + $0x60] sm:$0xff] %v1574
  %1591 = vst [vmem:[#allocation2 + $0x68] sm:$0xff] %v1575
  %1592 = vst [vmem:[#allocation2 + $0x70] sm:$0xff] %v1576
  %1593 = vst [vmem:[#allocation2 + $0x78] sm:$0xff] %v1577
  %v1594 = vld [vmem:[%s9] sm:$0xff]
  %v1595 = vld [vmem:[%s9 + $0x8] sm:$0xff]
  %v1596 = vld [vmem:[%s9 + $0x10] sm:$0xff]
  %v1597 = vld [vmem:[%s9 + $0x18] sm:$0xff]
  %v1598 = vld [vmem:[%s9 + $0x20] sm:$0xff]
  %v1599 = vld [vmem:[%s9 + $0x28] sm:$0xff]
  %v1600 = vld [vmem:[%s9 + $0x30] sm:$0xff]
  %v1601 = vld [vmem:[%s9 + $0x38] sm:$0xff]
  %v1610 = vunpack.c.l.b16 %v1594
  %v1611 = vunpack.c.h.b16 %v1594
  %v1612 = vunpack.c.l.b16 %v1595
  %v1613 = vunpack.c.h.b16 %v1595
  %v1614 = vunpack.c.l.b16 %v1596
  %v1615 = vunpack.c.h.b16 %v1596
  %v1616 = vunpack.c.l.b16 %v1597
  %v1617 = vunpack.c.h.b16 %v1597
  %v1618 = vunpack.c.l.b16 %v1598
  %v1619 = vunpack.c.h.b16 %v1598
  %v1620 = vunpack.c.l.b16 %v1599
  %v1621 = vunpack.c.h.b16 %v1599
  %v1622 = vunpack.c.l.b16 %v1600
  %v1623 = vunpack.c.h.b16 %v1600
  %v1624 = vunpack.c.l.b16 %v1601
  %v1625 = vunpack.c.h.b16 %v1601
  %v1626 = vpack.c.b16 %v1612, %v1610
  %v1627 = vpack.c.b16 %v1613, %v1611
  %v1628 = vpack.c.b16 %v1616, %v1614
  %v1629 = vpack.c.b16 %v1617, %v1615
  %v1630 = vpack.c.b16 %v1620, %v1618
  %v1631 = vpack.c.b16 %v1621, %v1619
  %v1632 = vpack.c.b16 %v1624, %v1622
  %v1633 = vpack.c.b16 %v1625, %v1623
  %1642 = vmatprep.subr.bf16.mxu0 0
  %1643 = vmatpush1.bf16.msra.mxu0 0
  %1644 = vmatprep.subr.bf16.mxu0 0
  %1645 = vmatpush1.bf16.msra.mxu0 0
  %1646 = vmatprep.subr.bf16.mxu0 0
  %1647 = vmatpush1.bf16.msra.mxu0 0
  %1648 = vmatprep.subr.bf16.mxu0 0
  %1649 = vmatpush1.bf16.msra.mxu0 0
  %1650 = vmatprep.subr.bf16.mxu0 %v1633
  %1651 = vmatpush1.bf16.msra.mxu0 %v1632
  %1652 = vmatprep.subr.bf16.mxu0 %v1631
  %1653 = vmatpush1.bf16.msra.mxu0 %v1630
  %1654 = vmatprep.subr.bf16.mxu0 %v1629
  %1655 = vmatpush1.bf16.msra.mxu0 %v1628
  %1656 = vmatprep.subr.bf16.mxu0 %v1627
  %1657 = vmatpush1.bf16.msra.mxu0 %v1626
  %1658 = vmatprep.subr.bf16.mxu0 0
  %1659 = vmatpush2.bf16.msra.mxu0 0
  %1660 = vmatprep.subr.bf16.mxu0 0
  %1661 = vmatpush2.bf16.msra.mxu0 0
  %1662 = vmatprep.subr.bf16.mxu0 0
  %1663 = vmatpush2.bf16.msra.mxu0 0
  %1664 = vmatprep.subr.bf16.mxu0 0
  %1665 = vmatpush2.bf16.msra.mxu0 0
  %1666 = vmatprep.subr.bf16.mxu0 0
  %1667 = vmatpush2.bf16.msra.mxu0 0
  %1668 = vmatprep.subr.bf16.mxu0 0
  %1669 = vmatpush2.bf16.msra.mxu0 0
  %1670 = vmatprep.subr.bf16.mxu0 0
  %1671 = vmatpush2.bf16.msra.mxu0 0
  %1672 = vmatprep.subr.bf16.mxu0 0
  %1673 = vmatpush2.bf16.msra.mxu0 0
  %1674 = vmatprep.mubr.bf16.mxu0 0
  %1675 = vmatmul.mubr.bf16.gmra.mxu0 %v396
  %v1676 = vpop.f32.mrf.mxu0
  %v1677 = vadd.f32 0.0, %v1676
  %v1678 = vpop.f32.mrf.mxu0
  %v1679 = vadd.f32 0.0, %v1678
  %v1680 = vpop.f32.mrf.mxu0
  %v1681 = vpop.f32.mrf.mxu0
  %1682 = vdwg.mxu0
  %v1683 = vld [vmem:[#allocation2] sm:$0xff]
  %v1684 = vadd.f32 %v1683, %v1677
  %v1685 = vld [vmem:[#allocation2 + $0x78] sm:$0xff]
  %v1686 = vadd.f32 %v1685, %v1679
  %v1687 = vxor.u32 %v1684, 2147483648
  %v1688 = vmul.f32 %v1687, 1.442695
  %v1689 = vpow.pop %v1688
  %v1690 = vadd.f32 %v1689, 1.0
  %v1691 = vrcp.pop %v1690
  %v1692 = vmul.f32 1.0, %v1691
  %v1693 = vtanh.pop %v1684
  %v1694 = vmul.f32 %v1692, 0.0
  %1696 = vrot.lane.b32.xlu0 %v1693, 64
  %v1697 = vpop.permute.xlu0 %1696
  %v1699 = vmul.f32 %v1692, %v1697
  %1701 = vrot.lane.b32.xlu0 %v1699, 32
  %v1702 = vpop.permute.xlu0 %1701
  %v1704 = vadd.f32 %v1694, %v1702
  %v1705 = vtanh.pop %v1704
  %1707 = vrot.lane.b32.xlu0 %v1705, 64
  %v1708 = vpop.permute.xlu0 %1707
  %v1710 = vmul.f32 %v1692, %v1708
  %v1711 = vxor.u32 %v1686, 2147483648
  %v1712 = vmul.f32 %v1711, 1.442695
  %v1713 = vpow.pop %v1712
  %v1714 = vadd.f32 %v1713, 1.0
  %v1715 = vrcp.pop %v1714
  %v1716 = vmul.f32 1.0, %v1715
  %v1717 = vtanh.pop %v1686
  %v1718 = vmul.f32 %v1716, 0.0
  %1720 = vrot.lane.b32.xlu0 %v1717, 64
  %v1721 = vpop.permute.xlu0 %1720
  %v1723 = vmul.f32 %v1716, %v1721
  %1725 = vrot.lane.b32.xlu0 %v1723, 32
  %v1726 = vpop.permute.xlu0 %1725
  %v1728 = vadd.f32 %v1718, %v1726
  %v1729 = vtanh.pop %v1728
  %1731 = vrot.lane.b32.xlu0 %v1729, 64
  %v1732 = vpop.permute.xlu0 %1731
  %v1734 = vmul.f32 %v1716, %v1732
  %v1735 = vsel %vm337, %v1710, 0.0
  %v1736 = vsel %vm337, %v1704, 0.0
  %v1737 = vsel %vm344, %v1734, 0.0
  %v1738 = vsel %vm344, %v1728, 0.0
  %1740 = vrot.lane.b32.xlu0 %v1735, 32
  %v1741 = vpop.permute.xlu0 %1740
  %1744 = vrot.lane.b32.xlu0 %v1737, 64
  %v1745 = vpop.permute.xlu0 %1744
  %v1747 = vsel %vm56, %v1741, %v1745
  %v1748 = vpack.c.bf16 %v1747, %v1747
  %v1750 = vsel %vm394, %v1748, 0
  %1752 = vmatprep.subr.bf16.mxu0 0
  %1753 = vmatpush1.bf16.msra.mxu0 0
  %1754 = vmatprep.subr.bf16.mxu0 0
  %1755 = vmatpush1.bf16.msra.mxu0 0
  %1756 = vmatprep.subr.bf16.mxu0 0
  %1757 = vmatpush1.bf16.msra.mxu0 0
  %1758 = vmatprep.subr.bf16.mxu0 0
  %1759 = vmatpush1.bf16.msra.mxu0 0
  %1760 = vmatprep.subr.bf16.mxu0 %v1633
  %1761 = vmatpush1.bf16.msra.mxu0 %v1632
  %1762 = vmatprep.subr.bf16.mxu0 %v1631
  %1763 = vmatpush1.bf16.msra.mxu0 %v1630
  %1764 = vmatprep.subr.bf16.mxu0 %v1629
  %1765 = vmatpush1.bf16.msra.mxu0 %v1628
  %1766 = vmatprep.subr.bf16.mxu0 %v1627
  %1767 = vmatpush1.bf16.msra.mxu0 %v1626
  %1768 = vmatprep.subr.bf16.mxu0 0
  %1769 = vmatpush2.bf16.msra.mxu0 0
  %1770 = vmatprep.subr.bf16.mxu0 0
  %1771 = vmatpush2.bf16.msra.mxu0 0
  %1772 = vmatprep.subr.bf16.mxu0 0
  %1773 = vmatpush2.bf16.msra.mxu0 0
  %1774 = vmatprep.subr.bf16.mxu0 0
  %1775 = vmatpush2.bf16.msra.mxu0 0
  %1776 = vmatprep.subr.bf16.mxu0 0
  %1777 = vmatpush2.bf16.msra.mxu0 0
  %1778 = vmatprep.subr.bf16.mxu0 0
  %1779 = vmatpush2.bf16.msra.mxu0 0
  %1780 = vmatprep.subr.bf16.mxu0 0
  %1781 = vmatpush2.bf16.msra.mxu0 0
  %1782 = vmatprep.subr.bf16.mxu0 0
  %1783 = vmatpush2.bf16.msra.mxu0 0
  %1784 = vmatprep.mubr.bf16.mxu0 0
  %1785 = vmatmul.mubr.bf16.gmra.mxu0 %v1750
  %v1786 = vpop.f32.mrf.mxu0
  %v1787 = vadd.f32 0.0, %v1786
  %v1788 = vpop.f32.mrf.mxu0
  %v1789 = vadd.f32 0.0, %v1788
  %v1790 = vpop.f32.mrf.mxu0
  %v1791 = vpop.f32.mrf.mxu0
  %1792 = vdwg.mxu0
  %v1793 = vld [vmem:[#allocation2 + $0x10] sm:$0xff]
  %v1794 = vadd.f32 %v1793, %v1787
  %v1795 = vld [vmem:[#allocation2 + $0x68] sm:$0xff]
  %v1796 = vadd.f32 %v1795, %v1789
  %v1797 = vxor.u32 %v1794, 2147483648
  %v1798 = vmul.f32 %v1797, 1.442695
  %v1799 = vpow.pop %v1798
  %v1800 = vadd.f32 %v1799, 1.0
  %v1801 = vrcp.pop %v1800
  %v1802 = vmul.f32 1.0, %v1801
  %v1803 = vtanh.pop %v1794
  %v1804 = vmul.f32 %v1802, %v1736
  %1806 = vrot.lane.b32.xlu0 %v1803, 64
  %v1807 = vpop.permute.xlu0 %1806
  %v1809 = vmul.f32 %v1802, %v1807
  %1811 = vrot.lane.b32.xlu0 %v1809, 32
  %v1812 = vpop.permute.xlu0 %1811
  %v1814 = vadd.f32 %v1804, %v1812
  %v1815 = vtanh.pop %v1814
  %1817 = vrot.lane.b32.xlu0 %v1815, 64
  %v1818 = vpop.permute.xlu0 %1817
  %v1820 = vmul.f32 %v1802, %v1818
  %v1821 = vxor.u32 %v1796, 2147483648
  %v1822 = vmul.f32 %v1821, 1.442695
  %v1823 = vpow.pop %v1822
  %v1824 = vadd.f32 %v1823, 1.0
  %v1825 = vrcp.pop %v1824
  %v1826 = vmul.f32 1.0, %v1825
  %v1827 = vtanh.pop %v1796
  %v1828 = vmul.f32 %v1826, %v1738
  %1830 = vrot.lane.b32.xlu0 %v1827, 64
  %v1831 = vpop.permute.xlu0 %1830
  %v1833 = vmul.f32 %v1826, %v1831
  %1835 = vrot.lane.b32.xlu0 %v1833, 32
  %v1836 = vpop.permute.xlu0 %1835
  %v1838 = vadd.f32 %v1828, %v1836
  %v1839 = vtanh.pop %v1838
  %1841 = vrot.lane.b32.xlu0 %v1839, 64
  %v1842 = vpop.permute.xlu0 %1841
  %v1844 = vmul.f32 %v1826, %v1842
  %v1845 = vsel %vm338, %v1820, %v1735
  %v1846 = vsel %vm338, %v1814, %v1736
  %v1847 = vsel %vm343, %v1844, %v1737
  %v1848 = vsel %vm343, %v1838, %v1738
  %1850 = vrot.lane.b32.xlu0 %v1845, 32
  %v1851 = vpop.permute.xlu0 %1850
  %1854 = vrot.lane.b32.xlu0 %v1847, 64
  %v1855 = vpop.permute.xlu0 %1854
  %v1857 = vsel %vm56, %v1851, %v1855
  %v1858 = vpack.c.bf16 %v1857, %v1857
  %v1860 = vsel %vm394, %v1858, 0
  %1862 = vmatprep.subr.bf16.mxu0 0
  %1863 = vmatpush1.bf16.msra.mxu0 0
  %1864 = vmatprep.subr.bf16.mxu0 0
  %1865 = vmatpush1.bf16.msra.mxu0 0
  %1866 = vmatprep.subr.bf16.mxu0 0
  %1867 = vmatpush1.bf16.msra.mxu0 0
  %1868 = vmatprep.subr.bf16.mxu0 0
  %1869 = vmatpush1.bf16.msra.mxu0 0
  %1870 = vmatprep.subr.bf16.mxu0 %v1633
  %1871 = vmatpush1.bf16.msra.mxu0 %v1632
  %1872 = vmatprep.subr.bf16.mxu0 %v1631
  %1873 = vmatpush1.bf16.msra.mxu0 %v1630
  %1874 = vmatprep.subr.bf16.mxu0 %v1629
  %1875 = vmatpush1.bf16.msra.mxu0 %v1628
  %1876 = vmatprep.subr.bf16.mxu0 %v1627
  %1877 = vmatpush1.bf16.msra.mxu0 %v1626
  %1878 = vmatprep.subr.bf16.mxu0 0
  %1879 = vmatpush2.bf16.msra.mxu0 0
  %1880 = vmatprep.subr.bf16.mxu0 0
  %1881 = vmatpush2.bf16.msra.mxu0 0
  %1882 = vmatprep.subr.bf16.mxu0 0
  %1883 = vmatpush2.bf16.msra.mxu0 0
  %1884 = vmatprep.subr.bf16.mxu0 0
  %1885 = vmatpush2.bf16.msra.mxu0 0
  %1886 = vmatprep.subr.bf16.mxu0 0
  %1887 = vmatpush2.bf16.msra.mxu0 0
  %1888 = vmatprep.subr.bf16.mxu0 0
  %1889 = vmatpush2.bf16.msra.mxu0 0
  %1890 = vmatprep.subr.bf16.mxu0 0
  %1891 = vmatpush2.bf16.msra.mxu0 0
  %1892 = vmatprep.subr.bf16.mxu0 0
  %1893 = vmatpush2.bf16.msra.mxu0 0
  %1894 = vmatprep.mubr.bf16.mxu0 0
  %1895 = vmatmul.mubr.bf16.gmra.mxu0 %v1860
  %v1896 = vpop.f32.mrf.mxu0
  %v1897 = vadd.f32 0.0, %v1896
  %v1898 = vpop.f32.mrf.mxu0
  %v1899 = vadd.f32 0.0, %v1898
  %v1900 = vpop.f32.mrf.mxu0
  %v1901 = vpop.f32.mrf.mxu0
  %1902 = vdwg.mxu0
  %v1903 = vld [vmem:[#allocation2 + $0x20] sm:$0xff]
  %v1904 = vadd.f32 %v1903, %v1897
  %v1905 = vld [vmem:[#allocation2 + $0x58] sm:$0xff]
  %v1906 = vadd.f32 %v1905, %v1899
  %v1907 = vxor.u32 %v1904, 2147483648
  %v1908 = vmul.f32 %v1907, 1.442695
  %v1909 = vpow.pop %v1908
  %v1910 = vadd.f32 %v1909, 1.0
  %v1911 = vrcp.pop %v1910
  %v1912 = vmul.f32 1.0, %v1911
  %v1913 = vtanh.pop %v1904
  %v1914 = vmul.f32 %v1912, %v1846
  %1916 = vrot.lane.b32.xlu0 %v1913, 64
  %v1917 = vpop.permute.xlu0 %1916
  %v1919 = vmul.f32 %v1912, %v1917
  %1921 = vrot.lane.b32.xlu0 %v1919, 32
  %v1922 = vpop.permute.xlu0 %1921
  %v1924 = vadd.f32 %v1914, %v1922
  %v1925 = vtanh.pop %v1924
  %1927 = vrot.lane.b32.xlu0 %v1925, 64
  %v1928 = vpop.permute.xlu0 %1927
  %v1930 = vmul.f32 %v1912, %v1928
  %v1931 = vxor.u32 %v1906, 2147483648
  %v1932 = vmul.f32 %v1931, 1.442695
  %v1933 = vpow.pop %v1932
  %v1934 = vadd.f32 %v1933, 1.0
  %v1935 = vrcp.pop %v1934
  %v1936 = vmul.f32 1.0, %v1935
  %v1937 = vtanh.pop %v1906
  %v1938 = vmul.f32 %v1936, %v1848
  %1940 = vrot.lane.b32.xlu0 %v1937, 64
  %v1941 = vpop.permute.xlu0 %1940
  %v1943 = vmul.f32 %v1936, %v1941
  %1945 = vrot.lane.b32.xlu0 %v1943, 32
  %v1946 = vpop.permute.xlu0 %1945
  %v1948 = vadd.f32 %v1938, %v1946
  %v1949 = vtanh.pop %v1948
  %1951 = vrot.lane.b32.xlu0 %v1949, 64
  %v1952 = vpop.permute.xlu0 %1951
  %v1954 = vmul.f32 %v1936, %v1952
  %v1955 = vsel %vm339, %v1930, %v1845
  %v1956 = vsel %vm339, %v1924, %v1846
  %v1957 = vsel %vm342, %v1954, %v1847
  %v1958 = vsel %vm342, %v1948, %v1848
  %1960 = vrot.lane.b32.xlu0 %v1955, 32
  %v1961 = vpop.permute.xlu0 %1960
  %1964 = vrot.lane.b32.xlu0 %v1957, 64
  %v1965 = vpop.permute.xlu0 %1964
  %v1967 = vsel %vm56, %v1961, %v1965
  %v1968 = vpack.c.bf16 %v1967, %v1967
  %v1970 = vsel %vm394, %v1968, 0
  %1972 = vmatprep.subr.bf16.mxu0 0
  %1973 = vmatpush1.bf16.msra.mxu0 0
  %1974 = vmatprep.subr.bf16.mxu0 0
  %1975 = vmatpush1.bf16.msra.mxu0 0
  %1976 = vmatprep.subr.bf16.mxu0 0
  %1977 = vmatpush1.bf16.msra.mxu0 0
  %1978 = vmatprep.subr.bf16.mxu0 0
  %1979 = vmatpush1.bf16.msra.mxu0 0
  %1980 = vmatprep.subr.bf16.mxu0 %v1633
  %1981 = vmatpush1.bf16.msra.mxu0 %v1632
  %1982 = vmatprep.subr.bf16.mxu0 %v1631
  %1983 = vmatpush1.bf16.msra.mxu0 %v1630
  %1984 = vmatprep.subr.bf16.mxu0 %v1629
  %1985 = vmatpush1.bf16.msra.mxu0 %v1628
  %1986 = vmatprep.subr.bf16.mxu0 %v1627
  %1987 = vmatpush1.bf16.msra.mxu0 %v1626
  %1988 = vmatprep.subr.bf16.mxu0 0
  %1989 = vmatpush2.bf16.msra.mxu0 0
  %1990 = vmatprep.subr.bf16.mxu0 0
  %1991 = vmatpush2.bf16.msra.mxu0 0
  %1992 = vmatprep.subr.bf16.mxu0 0
  %1993 = vmatpush2.bf16.msra.mxu0 0
  %1994 = vmatprep.subr.bf16.mxu0 0
  %1995 = vmatpush2.bf16.msra.mxu0 0
  %1996 = vmatprep.subr.bf16.mxu0 0
  %1997 = vmatpush2.bf16.msra.mxu0 0
  %1998 = vmatprep.subr.bf16.mxu0 0
  %1999 = vmatpush2.bf16.msra.mxu0 0
  %2000 = vmatprep.subr.bf16.mxu0 0
  %2001 = vmatpush2.bf16.msra.mxu0 0
  %2002 = vmatprep.subr.bf16.mxu0 0
  %2003 = vmatpush2.bf16.msra.mxu0 0
  %2004 = vmatprep.mubr.bf16.mxu0 0
  %2005 = vmatmul.mubr.bf16.gmra.mxu0 %v1970
  %v2006 = vpop.f32.mrf.mxu0
  %v2007 = vadd.f32 0.0, %v2006
  %v2008 = vpop.f32.mrf.mxu0
  %v2009 = vadd.f32 0.0, %v2008
  %v2010 = vpop.f32.mrf.mxu0
  %v2011 = vpop.f32.mrf.mxu0
  %2012 = vdwg.mxu0
  %v2013 = vld [vmem:[#allocation2 + $0x30] sm:$0xff]
  %v2014 = vadd.f32 %v2013, %v2007
  %v2015 = vld [vmem:[#allocation2 + $0x48] sm:$0xff]
  %v2016 = vadd.f32 %v2015, %v2009
  %v2017 = vxor.u32 %v2014, 2147483648
  %v2018 = vmul.f32 %v2017, 1.442695
  %v2019 = vpow.pop %v2018
  %v2020 = vadd.f32 %v2019, 1.0
  %v2021 = vrcp.pop %v2020
  %v2022 = vmul.f32 1.0, %v2021
  %v2023 = vtanh.pop %v2014
  %v2024 = vmul.f32 %v2022, %v1956
  %2026 = vrot.lane.b32.xlu0 %v2023, 64
  %v2027 = vpop.permute.xlu0 %2026
  %v2029 = vmul.f32 %v2022, %v2027
  %2031 = vrot.lane.b32.xlu0 %v2029, 32
  %v2032 = vpop.permute.xlu0 %2031
  %v2034 = vadd.f32 %v2024, %v2032
  %v2035 = vtanh.pop %v2034
  %2037 = vrot.lane.b32.xlu0 %v2035, 64
  %v2038 = vpop.permute.xlu0 %2037
  %v2040 = vmul.f32 %v2022, %v2038
  %v2041 = vxor.u32 %v2016, 2147483648
  %v2042 = vmul.f32 %v2041, 1.442695
  %v2043 = vpow.pop %v2042
  %v2044 = vadd.f32 %v2043, 1.0
  %v2045 = vrcp.pop %v2044
  %v2046 = vmul.f32 1.0, %v2045
  %v2047 = vtanh.pop %v2016
  %v2048 = vmul.f32 %v2046, %v1958
  %2050 = vrot.lane.b32.xlu0 %v2047, 64
  %v2051 = vpop.permute.xlu0 %2050
  %v2053 = vmul.f32 %v2046, %v2051
  %2055 = vrot.lane.b32.xlu0 %v2053, 32
  %v2056 = vpop.permute.xlu0 %2055
  %v2058 = vadd.f32 %v2048, %v2056
  %v2059 = vtanh.pop %v2058
  %2061 = vrot.lane.b32.xlu0 %v2059, 64
  %v2062 = vpop.permute.xlu0 %2061
  %v2064 = vmul.f32 %v2046, %v2062
  %v2065 = vsel %vm340, %v2040, %v1955
  %v2066 = vsel %vm340, %v2034, %v1956
  %v2067 = vsel %vm341, %v2064, %v1957
  %v2068 = vsel %vm341, %v2058, %v1958
  %2070 = vrot.lane.b32.xlu0 %v2065, 32
  %v2071 = vpop.permute.xlu0 %2070
  %2074 = vrot.lane.b32.xlu0 %v2067, 64
  %v2075 = vpop.permute.xlu0 %2074
  %v2077 = vsel %vm56, %v2071, %v2075
  %v2078 = vpack.c.bf16 %v2077, %v2077
  %v2080 = vsel %vm394, %v2078, 0
  %2082 = vmatprep.subr.bf16.mxu0 0
  %2083 = vmatpush1.bf16.msra.mxu0 0
  %2084 = vmatprep.subr.bf16.mxu0 0
  %2085 = vmatpush1.bf16.msra.mxu0 0
  %2086 = vmatprep.subr.bf16.mxu0 0
  %2087 = vmatpush1.bf16.msra.mxu0 0
  %2088 = vmatprep.subr.bf16.mxu0 0
  %2089 = vmatpush1.bf16.msra.mxu0 0
  %2090 = vmatprep.subr.bf16.mxu0 %v1633
  %2091 = vmatpush1.bf16.msra.mxu0 %v1632
  %2092 = vmatprep.subr.bf16.mxu0 %v1631
  %2093 = vmatpush1.bf16.msra.mxu0 %v1630
  %2094 = vmatprep.subr.bf16.mxu0 %v1629
  %2095 = vmatpush1.bf16.msra.mxu0 %v1628
  %2096 = vmatprep.subr.bf16.mxu0 %v1627
  %2097 = vmatpush1.bf16.msra.mxu0 %v1626
  %2098 = vmatprep.subr.bf16.mxu0 0
  %2099 = vmatpush2.bf16.msra.mxu0 0
  %2100 = vmatprep.subr.bf16.mxu0 0
  %2101 = vmatpush2.bf16.msra.mxu0 0
  %2102 = vmatprep.subr.bf16.mxu0 0
  %2103 = vmatpush2.bf16.msra.mxu0 0
  %2104 = vmatprep.subr.bf16.mxu0 0
  %2105 = vmatpush2.bf16.msra.mxu0 0
  %2106 = vmatprep.subr.bf16.mxu0 0
  %2107 = vmatpush2.bf16.msra.mxu0 0
  %2108 = vmatprep.subr.bf16.mxu0 0
  %2109 = vmatpush2.bf16.msra.mxu0 0
  %2110 = vmatprep.subr.bf16.mxu0 0
  %2111 = vmatpush2.bf16.msra.mxu0 0
  %2112 = vmatprep.subr.bf16.mxu0 0
  %2113 = vmatpush2.bf16.msra.mxu0 0
  %2114 = vmatprep.mubr.bf16.mxu0 0
  %2115 = vmatmul.mubr.bf16.gmra.mxu0 %v2080
  %v2116 = vpop.f32.mrf.mxu0
  %v2117 = vadd.f32 0.0, %v2116
  %v2118 = vpop.f32.mrf.mxu0
  %v2119 = vadd.f32 0.0, %v2118
  %v2120 = vpop.f32.mrf.mxu0
  %v2121 = vpop.f32.mrf.mxu0
  %2122 = vdwg.mxu0
  %v2123 = vld [vmem:[#allocation2 + $0x40] sm:$0xff]
  %v2124 = vadd.f32 %v2123, %v2117
  %v2125 = vld [vmem:[#allocation2 + $0x38] sm:$0xff]
  %v2126 = vadd.f32 %v2125, %v2119
  %v2127 = vxor.u32 %v2124, 2147483648
  %v2128 = vmul.f32 %v2127, 1.442695
  %v2129 = vpow.pop %v2128
  %v2130 = vadd.f32 %v2129, 1.0
  %v2131 = vrcp.pop %v2130
  %v2132 = vmul.f32 1.0, %v2131
  %v2133 = vtanh.pop %v2124
  %v2134 = vmul.f32 %v2132, %v2066
  %2136 = vrot.lane.b32.xlu0 %v2133, 64
  %v2137 = vpop.permute.xlu0 %2136
  %v2139 = vmul.f32 %v2132, %v2137
  %2141 = vrot.lane.b32.xlu0 %v2139, 32
  %v2142 = vpop.permute.xlu0 %2141
  %v2144 = vadd.f32 %v2134, %v2142
  %v2145 = vtanh.pop %v2144
  %2147 = vrot.lane.b32.xlu0 %v2145, 64
  %v2148 = vpop.permute.xlu0 %2147
  %v2150 = vmul.f32 %v2132, %v2148
  %v2151 = vxor.u32 %v2126, 2147483648
  %v2152 = vmul.f32 %v2151, 1.442695
  %v2153 = vpow.pop %v2152
  %v2154 = vadd.f32 %v2153, 1.0
  %v2155 = vrcp.pop %v2154
  %v2156 = vmul.f32 1.0, %v2155
  %v2157 = vtanh.pop %v2126
  %v2158 = vmul.f32 %v2156, %v2068
  %2160 = vrot.lane.b32.xlu0 %v2157, 64
  %v2161 = vpop.permute.xlu0 %2160
  %v2163 = vmul.f32 %v2156, %v2161
  %2165 = vrot.lane.b32.xlu0 %v2163, 32
  %v2166 = vpop.permute.xlu0 %2165
  %v2168 = vadd.f32 %v2158, %v2166
  %v2169 = vtanh.pop %v2168
  %2171 = vrot.lane.b32.xlu0 %v2169, 64
  %v2172 = vpop.permute.xlu0 %2171
  %v2174 = vmul.f32 %v2156, %v2172
  %v2175 = vsel %vm341, %v2150, %v2065
  %v2176 = vsel %vm341, %v2144, %v2066
  %v2177 = vsel %vm340, %v2174, %v2067
  %v2178 = vsel %vm340, %v2168, %v2068
  %2180 = vrot.lane.b32.xlu0 %v2175, 32
  %v2181 = vpop.permute.xlu0 %2180
  %2184 = vrot.lane.b32.xlu0 %v2177, 64
  %v2185 = vpop.permute.xlu0 %2184
  %v2187 = vsel %vm56, %v2181, %v2185
  %v2188 = vpack.c.bf16 %v2187, %v2187
  %v2190 = vsel %vm394, %v2188, 0
  %2192 = vmatprep.subr.bf16.mxu0 0
  %2193 = vmatpush1.bf16.msra.mxu0 0
  %2194 = vmatprep.subr.bf16.mxu0 0
  %2195 = vmatpush1.bf16.msra.mxu0 0
  %2196 = vmatprep.subr.bf16.mxu0 0
  %2197 = vmatpush1.bf16.msra.mxu0 0
  %2198 = vmatprep.subr.bf16.mxu0 0
  %2199 = vmatpush1.bf16.msra.mxu0 0
  %2200 = vmatprep.subr.bf16.mxu0 %v1633
  %2201 = vmatpush1.bf16.msra.mxu0 %v1632
  %2202 = vmatprep.subr.bf16.mxu0 %v1631
  %2203 = vmatpush1.bf16.msra.mxu0 %v1630
  %2204 = vmatprep.subr.bf16.mxu0 %v1629
  %2205 = vmatpush1.bf16.msra.mxu0 %v1628
  %2206 = vmatprep.subr.bf16.mxu0 %v1627
  %2207 = vmatpush1.bf16.msra.mxu0 %v1626
  %2208 = vmatprep.subr.bf16.mxu0 0
  %2209 = vmatpush2.bf16.msra.mxu0 0
  %2210 = vmatprep.subr.bf16.mxu0 0
  %2211 = vmatpush2.bf16.msra.mxu0 0
  %2212 = vmatprep.subr.bf16.mxu0 0
  %2213 = vmatpush2.bf16.msra.mxu0 0
  %2214 = vmatprep.subr.bf16.mxu0 0
  %2215 = vmatpush2.bf16.msra.mxu0 0
  %2216 = vmatprep.subr.bf16.mxu0 0
  %2217 = vmatpush2.bf16.msra.mxu0 0
  %2218 = vmatprep.subr.bf16.mxu0 0
  %2219 = vmatpush2.bf16.msra.mxu0 0
  %2220 = vmatprep.subr.bf16.mxu0 0
  %2221 = vmatpush2.bf16.msra.mxu0 0
  %2222 = vmatprep.subr.bf16.mxu0 0
  %2223 = vmatpush2.bf16.msra.mxu0 0
  %2224 = vmatprep.mubr.bf16.mxu0 0
  %2225 = vmatmul.mubr.bf16.gmra.mxu0 %v2190
  %v2226 = vpop.f32.mrf.mxu0
  %v2227 = vadd.f32 0.0, %v2226
  %v2228 = vpop.f32.mrf.mxu0
  %v2229 = vadd.f32 0.0, %v2228
  %v2230 = vpop.f32.mrf.mxu0
  %v2231 = vpop.f32.mrf.mxu0
  %2232 = vdwg.mxu0
  %v2233 = vld [vmem:[#allocation2 + $0x50] sm:$0xff]
  %v2234 = vadd.f32 %v2233, %v2227
  %v2235 = vld [vmem:[#allocation2 + $0x28] sm:$0xff]
  %v2236 = vadd.f32 %v2235, %v2229
  %v2237 = vxor.u32 %v2234, 2147483648
  %v2238 = vmul.f32 %v2237, 1.442695
  %v2239 = vpow.pop %v2238
  %v2240 = vadd.f32 %v2239, 1.0
  %v2241 = vrcp.pop %v2240
  %v2242 = vmul.f32 1.0, %v2241
  %v2243 = vtanh.pop %v2234
  %v2244 = vmul.f32 %v2242, %v2176
  %2246 = vrot.lane.b32.xlu0 %v2243, 64
  %v2247 = vpop.permute.xlu0 %2246
  %v2249 = vmul.f32 %v2242, %v2247
  %2251 = vrot.lane.b32.xlu0 %v2249, 32
  %v2252 = vpop.permute.xlu0 %2251
  %v2254 = vadd.f32 %v2244, %v2252
  %v2255 = vtanh.pop %v2254
  %2257 = vrot.lane.b32.xlu0 %v2255, 64
  %v2258 = vpop.permute.xlu0 %2257
  %v2260 = vmul.f32 %v2242, %v2258
  %v2261 = vxor.u32 %v2236, 2147483648
  %v2262 = vmul.f32 %v2261, 1.442695
  %v2263 = vpow.pop %v2262
  %v2264 = vadd.f32 %v2263, 1.0
  %v2265 = vrcp.pop %v2264
  %v2266 = vmul.f32 1.0, %v2265
  %v2267 = vtanh.pop %v2236
  %v2268 = vmul.f32 %v2266, %v2178
  %2270 = vrot.lane.b32.xlu0 %v2267, 64
  %v2271 = vpop.permute.xlu0 %2270
  %v2273 = vmul.f32 %v2266, %v2271
  %2275 = vrot.lane.b32.xlu0 %v2273, 32
  %v2276 = vpop.permute.xlu0 %2275
  %v2278 = vadd.f32 %v2268, %v2276
  %v2279 = vtanh.pop %v2278
  %2281 = vrot.lane.b32.xlu0 %v2279, 64
  %v2282 = vpop.permute.xlu0 %2281
  %v2284 = vmul.f32 %v2266, %v2282
  %v2285 = vsel %vm342, %v2260, %v2175
  %v2286 = vsel %vm342, %v2254, %v2176
  %v2287 = vsel %vm339, %v2284, %v2177
  %v2288 = vsel %vm339, %v2278, %v2178
  %2290 = vrot.lane.b32.xlu0 %v2285, 32
  %v2291 = vpop.permute.xlu0 %2290
  %2294 = vrot.lane.b32.xlu0 %v2287, 64
  %v2295 = vpop.permute.xlu0 %2294
  %v2297 = vsel %vm56, %v2291, %v2295
  %v2298 = vpack.c.bf16 %v2297, %v2297
  %v2300 = vsel %vm394, %v2298, 0
  %2302 = vmatprep.subr.bf16.mxu0 0
  %2303 = vmatpush1.bf16.msra.mxu0 0
  %2304 = vmatprep.subr.bf16.mxu0 0
  %2305 = vmatpush1.bf16.msra.mxu0 0
  %2306 = vmatprep.subr.bf16.mxu0 0
  %2307 = vmatpush1.bf16.msra.mxu0 0
  %2308 = vmatprep.subr.bf16.mxu0 0
  %2309 = vmatpush1.bf16.msra.mxu0 0
  %2310 = vmatprep.subr.bf16.mxu0 %v1633
  %2311 = vmatpush1.bf16.msra.mxu0 %v1632
  %2312 = vmatprep.subr.bf16.mxu0 %v1631
  %2313 = vmatpush1.bf16.msra.mxu0 %v1630
  %2314 = vmatprep.subr.bf16.mxu0 %v1629
  %2315 = vmatpush1.bf16.msra.mxu0 %v1628
  %2316 = vmatprep.subr.bf16.mxu0 %v1627
  %2317 = vmatpush1.bf16.msra.mxu0 %v1626
  %2318 = vmatprep.subr.bf16.mxu0 0
  %2319 = vmatpush2.bf16.msra.mxu0 0
  %2320 = vmatprep.subr.bf16.mxu0 0
  %2321 = vmatpush2.bf16.msra.mxu0 0
  %2322 = vmatprep.subr.bf16.mxu0 0
  %2323 = vmatpush2.bf16.msra.mxu0 0
  %2324 = vmatprep.subr.bf16.mxu0 0
  %2325 = vmatpush2.bf16.msra.mxu0 0
  %2326 = vmatprep.subr.bf16.mxu0 0
  %2327 = vmatpush2.bf16.msra.mxu0 0
  %2328 = vmatprep.subr.bf16.mxu0 0
  %2329 = vmatpush2.bf16.msra.mxu0 0
  %2330 = vmatprep.subr.bf16.mxu0 0
  %2331 = vmatpush2.bf16.msra.mxu0 0
  %2332 = vmatprep.subr.bf16.mxu0 0
  %2333 = vmatpush2.bf16.msra.mxu0 0
  %2334 = vmatprep.mubr.bf16.mxu0 0
  %2335 = vmatmul.mubr.bf16.gmra.mxu0 %v2300
  %v2336 = vpop.f32.mrf.mxu0
  %v2337 = vadd.f32 0.0, %v2336
  %v2338 = vpop.f32.mrf.mxu0
  %v2339 = vadd.f32 0.0, %v2338
  %v2340 = vpop.f32.mrf.mxu0
  %v2341 = vpop.f32.mrf.mxu0
  %2342 = vdwg.mxu0
  %v2343 = vld [vmem:[#allocation2 + $0x60] sm:$0xff]
  %v2344 = vadd.f32 %v2343, %v2337
  %v2345 = vld [vmem:[#allocation2 + $0x18] sm:$0xff]
  %v2346 = vadd.f32 %v2345, %v2339
  %v2347 = vxor.u32 %v2344, 2147483648
  %v2348 = vmul.f32 %v2347, 1.442695
  %v2349 = vpow.pop %v2348
  %v2350 = vadd.f32 %v2349, 1.0
  %v2351 = vrcp.pop %v2350
  %v2352 = vmul.f32 1.0, %v2351
  %v2353 = vtanh.pop %v2344
  %v2354 = vmul.f32 %v2352, %v2286
  %2356 = vrot.lane.b32.xlu0 %v2353, 64
  %v2357 = vpop.permute.xlu0 %2356
  %v2359 = vmul.f32 %v2352, %v2357
  %2361 = vrot.lane.b32.xlu0 %v2359, 32
  %v2362 = vpop.permute.xlu0 %2361
  %v2364 = vadd.f32 %v2354, %v2362
  %v2365 = vtanh.pop %v2364
  %2367 = vrot.lane.b32.xlu0 %v2365, 64
  %v2368 = vpop.permute.xlu0 %2367
  %v2370 = vmul.f32 %v2352, %v2368
  %v2371 = vxor.u32 %v2346, 2147483648
  %v2372 = vmul.f32 %v2371, 1.442695
  %v2373 = vpow.pop %v2372
  %v2374 = vadd.f32 %v2373, 1.0
  %v2375 = vrcp.pop %v2374
  %v2376 = vmul.f32 1.0, %v2375
  %v2377 = vtanh.pop %v2346
  %v2378 = vmul.f32 %v2376, %v2288
  %2380 = vrot.lane.b32.xlu0 %v2377, 64
  %v2381 = vpop.permute.xlu0 %2380
  %v2383 = vmul.f32 %v2376, %v2381
  %2385 = vrot.lane.b32.xlu0 %v2383, 32
  %v2386 = vpop.permute.xlu0 %2385
  %v2388 = vadd.f32 %v2378, %v2386
  %v2389 = vtanh.pop %v2388
  %2391 = vrot.lane.b32.xlu0 %v2389, 64
  %v2392 = vpop.permute.xlu0 %2391
  %v2394 = vmul.f32 %v2376, %v2392
  %v2395 = vsel %vm343, %v2370, %v2285
  %v2396 = vsel %vm343, %v2364, %v2286
  %v2397 = vsel %vm338, %v2394, %v2287
  %v2398 = vsel %vm338, %v2388, %v2288
  %2400 = vrot.lane.b32.xlu0 %v2395, 32
  %v2401 = vpop.permute.xlu0 %2400
  %2404 = vrot.lane.b32.xlu0 %v2397, 64
  %v2405 = vpop.permute.xlu0 %2404
  %v2407 = vsel %vm56, %v2401, %v2405
  %v2408 = vpack.c.bf16 %v2407, %v2407
  %v2410 = vsel %vm394, %v2408, 0
  %2412 = vmatprep.subr.bf16.mxu0 0
  %2413 = vmatpush1.bf16.msra.mxu0 0
  %2414 = vmatprep.subr.bf16.mxu0 0
  %2415 = vmatpush1.bf16.msra.mxu0 0
  %2416 = vmatprep.subr.bf16.mxu0 0
  %2417 = vmatpush1.bf16.msra.mxu0 0
  %2418 = vmatprep.subr.bf16.mxu0 0
  %2419 = vmatpush1.bf16.msra.mxu0 0
  %2420 = vmatprep.subr.bf16.mxu0 %v1633
  %2421 = vmatpush1.bf16.msra.mxu0 %v1632
  %2422 = vmatprep.subr.bf16.mxu0 %v1631
  %2423 = vmatpush1.bf16.msra.mxu0 %v1630
  %2424 = vmatprep.subr.bf16.mxu0 %v1629
  %2425 = vmatpush1.bf16.msra.mxu0 %v1628
  %2426 = vmatprep.subr.bf16.mxu0 %v1627
  %2427 = vmatpush1.bf16.msra.mxu0 %v1626
  %2428 = vmatprep.subr.bf16.mxu0 0
  %2429 = vmatpush2.bf16.msra.mxu0 0
  %2430 = vmatprep.subr.bf16.mxu0 0
  %2431 = vmatpush2.bf16.msra.mxu0 0
  %2432 = vmatprep.subr.bf16.mxu0 0
  %2433 = vmatpush2.bf16.msra.mxu0 0
  %2434 = vmatprep.subr.bf16.mxu0 0
  %2435 = vmatpush2.bf16.msra.mxu0 0
  %2436 = vmatprep.subr.bf16.mxu0 0
  %2437 = vmatpush2.bf16.msra.mxu0 0
  %2438 = vmatprep.subr.bf16.mxu0 0
  %2439 = vmatpush2.bf16.msra.mxu0 0
  %2440 = vmatprep.subr.bf16.mxu0 0
  %2441 = vmatpush2.bf16.msra.mxu0 0
  %2442 = vmatprep.subr.bf16.mxu0 0
  %2443 = vmatpush2.bf16.msra.mxu0 0
  %2444 = vmatprep.mubr.bf16.mxu0 0
  %2445 = vmatmul.mubr.bf16.gmra.mxu0 %v2410
  %v2446 = vpop.f32.mrf.mxu0
  %v2447 = vadd.f32 0.0, %v2446
  %v2448 = vpop.f32.mrf.mxu0
  %v2449 = vadd.f32 0.0, %v2448
  %v2450 = vpop.f32.mrf.mxu0
  %v2451 = vpop.f32.mrf.mxu0
  %2452 = vdwg.mxu0
  %v2453 = vld [vmem:[#allocation2 + $0x70] sm:$0xff]
  %v2454 = vadd.f32 %v2453, %v2447
  %v2455 = vld [vmem:[#allocation2 + $0x8] sm:$0xff]
  %v2456 = vadd.f32 %v2455, %v2449
  %v2457 = vxor.u32 %v2454, 2147483648
  %v2458 = vmul.f32 %v2457, 1.442695
  %v2459 = vpow.pop %v2458
  %v2460 = vadd.f32 %v2459, 1.0
  %v2461 = vrcp.pop %v2460
  %v2462 = vmul.f32 1.0, %v2461
  %v2463 = vtanh.pop %v2454
  %v2464 = vmul.f32 %v2462, %v2396
  %2466 = vrot.lane.b32.xlu0 %v2463, 64
  %v2467 = vpop.permute.xlu0 %2466
  %v2469 = vmul.f32 %v2462, %v2467
  %2471 = vrot.lane.b32.xlu0 %v2469, 32
  %v2472 = vpop.permute.xlu0 %2471
  %v2474 = vadd.f32 %v2464, %v2472
  %v2475 = vtanh.pop %v2474
  %2477 = vrot.lane.b32.xlu0 %v2475, 64
  %v2478 = vpop.permute.xlu0 %2477
  %v2480 = vmul.f32 %v2462, %v2478
  %v2481 = vxor.u32 %v2456, 2147483648
  %v2482 = vmul.f32 %v2481, 1.442695
  %v2483 = vpow.pop %v2482
  %v2484 = vadd.f32 %v2483, 1.0
  %v2485 = vrcp.pop %v2484
  %v2486 = vmul.f32 1.0, %v2485
  %v2487 = vtanh.pop %v2456
  %v2488 = vmul.f32 %v2486, %v2398
  %2490 = vrot.lane.b32.xlu0 %v2487, 64
  %v2491 = vpop.permute.xlu0 %2490
  %v2493 = vmul.f32 %v2486, %v2491
  %2495 = vrot.lane.b32.xlu0 %v2493, 32
  %v2496 = vpop.permute.xlu0 %2495
  %v2498 = vadd.f32 %v2488, %v2496
  %v2499 = vtanh.pop %v2498
  %2501 = vrot.lane.b32.xlu0 %v2499, 64
  %v2502 = vpop.permute.xlu0 %2501
  %v2504 = vmul.f32 %v2486, %v2502
  %v2505 = vsel %vm344, %v2480, %v2395
  %v2506 = vsel %vm337, %v2504, %v2397
  %v2507 = vpack.c.bf16 %v2505, %v2505
  %v2508 = vld [vmem:[%s11] sm:$0xf]
  %v2509 = vld [vmem:[%s11 + $0x4] sm:$0xf]
  %v2510 = vld [vmem:[%s11 + $0x8] sm:$0xf]
  %v2511 = vld [vmem:[%s11 + $0xc] sm:$0xf]
  %v2512 = vpack.c.bf16 %v2506, %v2506
  %v2513 = vld [vmem:[%s12] sm:$0xf]
  %v2514 = vld [vmem:[%s12 + $0x4] sm:$0xf]
  %v2515 = vld [vmem:[%s12 + $0x8] sm:$0xf]
  %v2516 = vld [vmem:[%s12 + $0xc] sm:$0xf]
  %2518 = vrot.lane.b32.xlu0 %v2512, 32
  %v2519 = vpop.permute.xlu0 %2518
  %v2524 = vunpack.c.l.b16 %v2513
  %v2525 = vunpack.c.l.b16 %v2514
  %v2526 = vunpack.c.l.b16 %v2515
  %v2527 = vunpack.c.l.b16 %v2516
  %v2528 = vpack.c.b16 %v2525, %v2524
  %v2529 = vpack.c.b16 %v2527, %v2526
  %v2533 = vsel %vm56, %v2519, 0
  %2535 = vmatprep.subr.bf16.mxu0 0
  %2536 = vmatpush1.bf16.msra.mxu0 0
  %2537 = vmatprep.subr.bf16.mxu0 0
  %2538 = vmatpush1.bf16.msra.mxu0 0
  %2539 = vmatprep.subr.bf16.mxu0 0
  %2540 = vmatpush1.bf16.msra.mxu0 0
  %2541 = vmatprep.subr.bf16.mxu0 0
  %2542 = vmatpush1.bf16.msra.mxu0 0
  %2543 = vmatprep.subr.bf16.mxu0 0
  %2544 = vmatpush1.bf16.msra.mxu0 0
  %2545 = vmatprep.subr.bf16.mxu0 0
  %2546 = vmatpush1.bf16.msra.mxu0 0
  %2547 = vmatprep.subr.bf16.mxu0 0
  %2548 = vmatpush1.bf16.msra.mxu0 %v2529
  %2549 = vmatprep.subr.bf16.mxu0 0
  %2550 = vmatpush1.bf16.msra.mxu0 %v2528
  %2551 = vmatprep.subr.bf16.mxu0 0
  %2552 = vmatpush2.bf16.msra.mxu0 0
  %2553 = vmatprep.subr.bf16.mxu0 0
  %2554 = vmatpush2.bf16.msra.mxu0 0
  %2555 = vmatprep.subr.bf16.mxu0 0
  %2556 = vmatpush2.bf16.msra.mxu0 0
  %2557 = vmatprep.subr.bf16.mxu0 0
  %2558 = vmatpush2.bf16.msra.mxu0 0
  %2559 = vmatprep.subr.bf16.mxu0 0
  %2560 = vmatpush2.bf16.msra.mxu0 0
  %2561 = vmatprep.subr.bf16.mxu0 0
  %2562 = vmatpush2.bf16.msra.mxu0 0
  %2563 = vmatprep.subr.bf16.mxu0 0
  %2564 = vmatpush2.bf16.msra.mxu0 0
  %2565 = vmatprep.subr.bf16.mxu0 0
  %2566 = vmatpush2.bf16.msra.mxu0 0
  %2567 = vmatprep.mubr.bf16.mxu0 0
  %2568 = vmatmul.mubr.bf16.gmra.mxu0 %v2533
  %v2569 = vpop.f32.mrf.mxu0
  %v2570 = vadd.f32 0.0, %v2569
  %v2571 = vpop.f32.mrf.mxu0
  %v2572 = vpop.f32.mrf.mxu0
  %v2573 = vpop.f32.mrf.mxu0
  %2574 = vdwg.mxu0
  %2576 = vrot.lane.b32.xlu0 %v2507, 32
  %v2577 = vpop.permute.xlu0 %2576
  %v2582 = vunpack.c.l.b16 %v2508
  %v2583 = vunpack.c.l.b16 %v2509
  %v2584 = vunpack.c.l.b16 %v2510
  %v2585 = vunpack.c.l.b16 %v2511
  %v2586 = vpack.c.b16 %v2583, %v2582
  %v2587 = vpack.c.b16 %v2585, %v2584
  %v2591 = vsel %vm56, %v2577, 0
  %2593 = vmatprep.subr.bf16.mxu0 0
  %2594 = vmatpush1.bf16.msra.mxu0 0
  %2595 = vmatprep.subr.bf16.mxu0 0
  %2596 = vmatpush1.bf16.msra.mxu0 0
  %2597 = vmatprep.subr.bf16.mxu0 0
  %2598 = vmatpush1.bf16.msra.mxu0 0
  %2599 = vmatprep.subr.bf16.mxu0 0
  %2600 = vmatpush1.bf16.msra.mxu0 0
  %2601 = vmatprep.subr.bf16.mxu0 0
  %2602 = vmatpush1.bf16.msra.mxu0 0
  %2603 = vmatprep.subr.bf16.mxu0 0
  %2604 = vmatpush1.bf16.msra.mxu0 0
  %2605 = vmatprep.subr.bf16.mxu0 0
  %2606 = vmatpush1.bf16.msra.mxu0 %v2587
  %2607 = vmatprep.subr.bf16.mxu0 0
  %2608 = vmatpush1.bf16.msra.mxu0 %v2586
  %2609 = vmatprep.subr.bf16.mxu0 0
  %2610 = vmatpush2.bf16.msra.mxu0 0
  %2611 = vmatprep.subr.bf16.mxu0 0
  %2612 = vmatpush2.bf16.msra.mxu0 0
  %2613 = vmatprep.subr.bf16.mxu0 0
  %2614 = vmatpush2.bf16.msra.mxu0 0
  %2615 = vmatprep.subr.bf16.mxu0 0
  %2616 = vmatpush2.bf16.msra.mxu0 0
  %2617 = vmatprep.subr.bf16.mxu0 0
  %2618 = vmatpush2.bf16.msra.mxu0 0
  %2619 = vmatprep.subr.bf16.mxu0 0
  %2620 = vmatpush2.bf16.msra.mxu0 0
  %2621 = vmatprep.subr.bf16.mxu0 0
  %2622 = vmatpush2.bf16.msra.mxu0 0
  %2623 = vmatprep.subr.bf16.mxu0 0
  %2624 = vmatpush2.bf16.msra.mxu0 0
  %2625 = vmatprep.mubr.bf16.mxu0 0
  %2626 = vmatmul.mubr.bf16.gmra.mxu0 %v2591
  %v2627 = vpop.f32.mrf.mxu0
  %v2628 = vadd.f32 %v2570, %v2627
  %v2629 = vpop.f32.mrf.mxu0
  %v2630 = vpop.f32.mrf.mxu0
  %v2631 = vpop.f32.mrf.mxu0
  %2632 = vdwg.mxu0
  %v2633 = vld [vmem:[%s13] sm:$0x1]
  %v2635 = vlaneseq
  %v2636 = vshrl.u32 %v2635, 7
  %v2637 = vsub.s32 0, %v2636
  %v2638 = vrot.slane %v2633, %v2637
  %v2640 = vadd.f32 %v2628, %v2638
  %2641 = vst [vmem:[%s14] sm:$0xff] %v2640
  // Predicated region
  $region58: #{intent_forward.1} parent=0 // pred_check
    _
  $region59: #{intent_forward.1} parent=0 // pred_check_branch
    %2643 = sbr.rel (0) target = $region61
  $region60: #{intent_forward.1} parent=0 // pred_region
    _
  $region61: #{intent_forward.1} parent=0 // pred_fallthru
    _
  // Predicated region
  $region62: #{intent_forward.1} parent=0 // pred_check
    _
  $region63: #{intent_forward.1} parent=0 // pred_check_branch
    %2645 = sbr.rel (0) target = $region65
  $region64: #{intent_forward.1} parent=0 // pred_region
    _
  $region65: #{intent_forward.1} parent=0 // pred_fallthru
    _

</llo_original>
